<compile_context>
chip_gen: v5e
topology: v5e:2x2
jax: 0.10.0
libtpu: 0.0.40
codegen_flags: <defaults>
</compile_context>

<pallas_src>
import functools

import jax
import jax.numpy as jnp
from jax.experimental import pallas as pl
from jax.experimental.pallas import tpu as pltpu

SELECTED_JOINTS = [
    'right_hip_pitch', 'left_hip_pitch', 'right_hip_yaw', 'left_hip_yaw',
    'right_hip_roll', 'left_hip_roll', 'right_knee', 'left_knee',
    'right_ankle', 'left_ankle'
]
N_JOINT_FEATS = len(SELECTED_JOINTS) * 2  # 20
LN_EPS = 1e-5
LEAK = 0.1
H1, H2 = 512, 256


def _round_up(x, m):
    return (x + m - 1) // m * m


# ---------------------------------------------------------------------------
# Kernel
# ---------------------------------------------------------------------------
def _layer_norm(h, gamma, beta):
    # PyTorch LayerNorm: biased variance, eps inside sqrt. f32 throughout.
    m = jnp.mean(h, axis=-1, keepdims=True)
    v = jnp.mean((h - m) * (h - m), axis=-1, keepdims=True)
    return (h - m) * jax.lax.rsqrt(v + LN_EPS) * gamma + beta


def _leaky_relu(h):
    return jnp.where(h > 0, h, LEAK * h)


def _linear(x, w_ref, b_ref):
    # MXU operands follow the weight dtype (f32 or bf16); accumulate in f32.
    w = w_ref[...]
    return jnp.dot(x.astype(w.dtype), w,
                   preferred_element_type=jnp.float32) + b_ref[...]


def walking_vae_kernel(
    # per-tile inputs
    x_ref, eps_ref,
    # encoder (resident in VMEM)
    w1_ref, b1_ref, g1_ref, be1_ref,
    w2_ref, b2_ref, g2_ref, be2_ref,
    wh_ref, bh_ref,                       # fused mu|logvar head
    # decoder (resident in VMEM)
    wd1_ref, bd1_ref, gd1_ref, bed1_ref,
    wd2_ref, bd2_ref, gd2_ref, bed2_ref,
    wd3_ref, bd3_ref,
    # per-tile outputs
    recon_ref, mu_ref, logvar_ref,
    *, latent_pad,
):
    # ---- encoder ----
    # x is consumed immediately by the first matmul (no later live use).
    h = _linear(x_ref[...], w1_ref, b1_ref)                        # (TB, 512)
    h = _leaky_relu(_layer_norm(h, g1_ref[...], be1_ref[...]))
    # Dropout(0.2): identity in eval mode.
    h = _linear(h, w2_ref, b2_ref)                                 # (TB, 256)
    h = _leaky_relu(_layer_norm(h, g2_ref[...], be2_ref[...]))

    # ---- fused mu | logvar head (each half padded to latent_pad lanes) ----
    head = _linear(h, wh_ref, bh_ref)                              # (TB, 2*LP)
    mu = head[:, :latent_pad]
    logvar = jnp.clip(head[:, latent_pad:], -10.0, 10.0)

    # ---- reparameterize ----
    z = mu + eps_ref[...] * jnp.exp(0.5 * logvar)                  # (TB, LP)

    # ---- decoder ----
    d = _linear(z, wd1_ref, bd1_ref)                               # (TB, 256)
    d = _leaky_relu(_layer_norm(d, gd1_ref[...], bed1_ref[...]))
    d = _linear(d, wd2_ref, bd2_ref)                               # (TB, 512)
    d = _leaky_relu(_layer_norm(d, gd2_ref[...], bed2_ref[...]))

    recon_ref[...] = _linear(d, wd3_ref, bd3_ref)                  # (TB, FP)
    mu_ref[...] = mu
    logvar_ref[...] = logvar


# ---------------------------------------------------------------------------
# Parameter init (original, unpadded PyTorch shapes)
# ---------------------------------------------------------------------------
def init_params(key, input_dim, window_size, latent_dim):
    flat_dim = (2 * window_size + 1) * input_dim
    ks = jax.random.split(key, 8)

    def lin(k, fan_in, fan_out):
        bound = 1.0 / jnp.sqrt(fan_in)
        kw, kb = jax.random.split(k)
        w = jax.random.uniform(kw, (fan_in, fan_out), jnp.float32, -bound, bound)
        b = jax.random.uniform(kb, (1, fan_out), jnp.float32, -bound, bound)
        return w, b

    p = {}
    p['w1'], p['b1'] = lin(ks[0], flat_dim, H1)
    p['g1'] = jnp.ones((1, H1), jnp.float32)
    p['be1'] = jnp.zeros((1, H1), jnp.float32)
    p['w2'], p['b2'] = lin(ks[1], H1, H2)
    p['g2'] = jnp.ones((1, H2), jnp.float32)
    p['be2'] = jnp.zeros((1, H2), jnp.float32)
    p['wmu'], p['bmu'] = lin(ks[2], H2, latent_dim)
    p['wlv'], p['blv'] = lin(ks[3], H2, latent_dim)
    p['wd1'], p['bd1'] = lin(ks[4], latent_dim, H2)
    p['gd1'] = jnp.ones((1, H2), jnp.float32)
    p['bed1'] = jnp.zeros((1, H2), jnp.float32)
    p['wd2'], p['bd2'] = lin(ks[5], H2, H1)
    p['gd2'] = jnp.ones((1, H1), jnp.float32)
    p['bed2'] = jnp.zeros((1, H1), jnp.float32)
    p['wd3'], p['bd3'] = lin(ks[6], H1, flat_dim)
    return p


_PACKED_ORDER = [
    'w1', 'b1', 'g1', 'be1',
    'w2', 'b2', 'g2', 'be2',
    'wh', 'bh',
    'wd1', 'bd1', 'gd1', 'bed1',
    'wd2', 'bd2', 'gd2', 'bed2',
    'wd3', 'bd3',
]


def _pack_params(p, flat_dim, latent_dim, flat_pad, latent_pad, wdtype):
    """Pad lane/contraction dims to 128 multiples; fuse mu|logvar heads."""
    def pad2(a, rows, cols, dtype):
        out = jnp.zeros((rows, cols), dtype)
        return out.at[:a.shape[0], :a.shape[1]].set(a.astype(dtype))

    q = {}
    q['w1'] = pad2(p['w1'], flat_pad, H1, wdtype)          # zero rows for pad K
    q['b1'] = p['b1']
    q['g1'], q['be1'] = p['g1'], p['be1']
    q['w2'] = p['w2'].astype(wdtype)
    q['b2'] = p['b2']
    q['g2'], q['be2'] = p['g2'], p['be2']

    # fused head: [mu | pad | logvar | pad], each half latent_pad lanes wide
    wh = jnp.zeros((H2, 2 * latent_pad), wdtype)
    wh = wh.at[:, :latent_dim].set(p['wmu'].astype(wdtype))
    wh = wh.at[:, latent_pad:latent_pad + latent_dim].set(p['wlv'].astype(wdtype))
    bh = jnp.zeros((1, 2 * latent_pad), jnp.float32)
    bh = bh.at[:, :latent_dim].set(p['bmu'])
    bh = bh.at[:, latent_pad:latent_pad + latent_dim].set(p['blv'])
    q['wh'], q['bh'] = wh, bh

    q['wd1'] = pad2(p['wd1'], latent_pad, H2, wdtype)      # zero rows for pad K
    q['bd1'] = p['bd1']
    q['gd1'], q['bed1'] = p['gd1'], p['bed1']
    q['wd2'] = p['wd2'].astype(wdtype)
    q['bd2'] = p['bd2']
    q['gd2'], q['bed2'] = p['gd2'], p['bed2']
    q['wd3'] = pad2(p['wd3'], H1, flat_pad, wdtype)        # zero cols for pad N
    q['bd3'] = pad2(p['bd3'], 1, flat_pad, jnp.float32)
    return q


# ---------------------------------------------------------------------------
# Wrapper
# ---------------------------------------------------------------------------
@functools.partial(jax.jit, static_argnames=('window_size', 'latent_dim', 'use_bf16'))
def walking_vae_forward(x, eps, params, *, window_size, latent_dim, use_bf16=False):
    """x: (B, 2W+1, 20) f32; eps: (B, latent_dim) f32 reparameterization noise."""
    B = x.shape[0]
    flat_dim = (2 * window_size + 1) * N_JOINT_FEATS
    flat_pad = _round_up(flat_dim, 128)
    latent_pad = _round_up(latent_dim, 128)

    # Batch tile: multiple of 128, capped so per-tile working set stays small
    # (v7x scoped VMEM budget); B padded up to the tile.
    TB = min(512, _round_up(max(B, 1), 128))
    B_pad = _round_up(B, TB)
    grid = (B_pad // TB,)

    wdtype = jnp.bfloat16 if use_bf16 else jnp.float32

    # Flatten (mirrors x.view(-1, flat_dim)) and zero-pad rows/lanes.
    x_flat = x.reshape(B, flat_dim)
    x_p = jnp.zeros((B_pad, flat_pad), jnp.float32).at[:B, :flat_dim].set(x_flat)
    eps_p = jnp.zeros((B_pad, latent_pad), jnp.float32).at[:B, :latent_dim].set(eps)

    packed = _pack_params(params, flat_dim, latent_dim, flat_pad, latent_pad, wdtype)
    weight_args = [packed[name] for name in _PACKED_ORDER]

    def tile_spec(cols):
        return pl.BlockSpec((TB, cols), lambda i: (i, 0))

    def resident_spec(a):
        # Whole array, constant block index -> fetched once, resident in VMEM.
        return pl.BlockSpec(a.shape, lambda i: (0, 0))

    in_specs = ([tile_spec(flat_pad), tile_spec(latent_pad)]
                + [resident_spec(a) for a in weight_args])
    out_specs = (tile_spec(flat_pad), tile_spec(latent_pad), tile_spec(latent_pad))

    flops = 2 * B_pad * (flat_pad * H1 + H1 * H2 + H2 * 2 * latent_pad
                         + latent_pad * H2 + H2 * H1 + H1 * flat_pad)
    bytes_w = int(sum(a.size * a.dtype.itemsize for a in weight_args))
    bytes_io = 4 * B_pad * (2 * flat_pad + 3 * latent_pad)
    cost = pl.CostEstimate(flops=int(flops),
                           transcendentals=int(B_pad * (latent_pad + 4)),
                           bytes_accessed=bytes_w + bytes_io)

    kernel = functools.partial(walking_vae_kernel, latent_pad=latent_pad)

    recon_p, mu_p, logvar_p = pl.pallas_call(
        kernel,
        grid=grid,
        out_shape=(
            jax.ShapeDtypeStruct((B_pad, flat_pad), jnp.float32),
            jax.ShapeDtypeStruct((B_pad, latent_pad), jnp.float32),
            jax.ShapeDtypeStruct((B_pad, latent_pad), jnp.float32),
        ),
        in_specs=in_specs,
        out_specs=out_specs,
        compiler_params=pltpu.CompilerParams(
            dimension_semantics=("parallel",),      # shard tiles across v7x TCs
            vmem_limit_bytes=32 * 1024 * 1024,
        ),
        cost_estimate=cost,
    )(x_p, eps_p, *weight_args)

    # Slice off row padding (batch) and lane padding (flat/latent) so padded
    # garbage never leaks downstream.
    recon = recon_p[:B, :flat_dim].reshape(B, 2 * window_size + 1, N_JOINT_FEATS)
    mu = mu_p[:B, :latent_dim]
    logvar = logvar_p[:B, :latent_dim]
    return recon, mu, logvar


# ---------------------------------------------------------------------------
# Pure-JAX reference (for sanity check)
# ---------------------------------------------------------------------------
def reference_forward(x, eps, p, window_size, latent_dim):
    B = x.shape[0]
    flat_dim = (2 * window_size + 1) * N_JOINT_FEATS
    xf = x.reshape(B, flat_dim)

    def ln(h, g, b):
        m = h.mean(-1, keepdims=True)
        v = ((h - m) ** 2).mean(-1, keepdims=True)
        return (h - m) / jnp.sqrt(v + LN_EPS) * g + b

    def lr(h):
        return jnp.where(h > 0, h, LEAK * h)

    h = lr(ln(xf @ p['w1'] + p['b1'], p['g1'], p['be1']))
    h = lr(ln(h @ p['w2'] + p['b2'], p['g2'], p['be2']))
    mu = h @ p['wmu'] + p['bmu']
    logvar = jnp.clip(h @ p['wlv'] + p['blv'], -10.0, 10.0)
    z = mu + eps * jnp.exp(0.5 * logvar)
    d = lr(ln(z @ p['wd1'] + p['bd1'], p['gd1'], p['bed1']))
    d = lr(ln(d @ p['wd2'] + p['bd2'], p['gd2'], p['bed2']))
    recon = (d @ p['wd3'] + p['bd3']).reshape(B, 2 * window_size + 1, N_JOINT_FEATS)
    return recon, mu, logvar


if __name__ == "__main__":
    window_size = 2            # -> 2W+1 = 5 frames
    input_dim = N_JOINT_FEATS  # 20 (pos + vel for 10 joints)
    latent_dim = 32
    batch = 2

    key = jax.random.PRNGKey(0)
    kx, keps, kp = jax.random.split(key, 3)

    x = jax.random.normal(kx, (batch, 2 * window_size + 1, input_dim), jnp.float32)
    eps = jax.random.normal(keps, (batch, latent_dim), jnp.float32)
    params = init_params(kp, input_dim, window_size, latent_dim)

    recon, mu, logvar = walking_vae_forward(
        x, eps, params, window_size=window_size, latent_dim=latent_dim)
    jax.block_until_ready((recon, mu, logvar))

    r_ref, mu_ref, lv_ref = reference_forward(x, eps, params, window_size, latent_dim)
    assert recon.shape == (batch, 2 * window_size + 1, input_dim)
    assert mu.shape == (batch, latent_dim) and logvar.shape == (batch, latent_dim)
    assert jnp.allclose(recon, r_ref, atol=1e-4, rtol=1e-4)
    assert jnp.allclose(mu, mu_ref, atol=1e-4, rtol=1e-4)
    assert jnp.allclose(logvar, lv_ref, atol=1e-4, rtol=1e-4)

    print("KERNEL_OK")
</pallas_src>

<mosaic_0001>
module attributes {stable_mosaic.version = 11 : i64} {
  func.func @walking_vae_kernel(%arg0: i32, %arg1: memref<128x128xf32, #tpu.memory_space<vmem>>, %arg2: memref<128x128xf32, #tpu.memory_space<vmem>>, %arg3: memref<128x512xf32, #tpu.memory_space<vmem>>, %arg4: memref<1x512xf32, #tpu.memory_space<vmem>>, %arg5: memref<1x512xf32, #tpu.memory_space<vmem>>, %arg6: memref<1x512xf32, #tpu.memory_space<vmem>>, %arg7: memref<512x256xf32, #tpu.memory_space<vmem>>, %arg8: memref<1x256xf32, #tpu.memory_space<vmem>>, %arg9: memref<1x256xf32, #tpu.memory_space<vmem>>, %arg10: memref<1x256xf32, #tpu.memory_space<vmem>>, %arg11: memref<256x256xf32, #tpu.memory_space<vmem>>, %arg12: memref<1x256xf32, #tpu.memory_space<vmem>>, %arg13: memref<128x256xf32, #tpu.memory_space<vmem>>, %arg14: memref<1x256xf32, #tpu.memory_space<vmem>>, %arg15: memref<1x256xf32, #tpu.memory_space<vmem>>, %arg16: memref<1x256xf32, #tpu.memory_space<vmem>>, %arg17: memref<256x512xf32, #tpu.memory_space<vmem>>, %arg18: memref<1x512xf32, #tpu.memory_space<vmem>>, %arg19: memref<1x512xf32, #tpu.memory_space<vmem>>, %arg20: memref<1x512xf32, #tpu.memory_space<vmem>>, %arg21: memref<512x128xf32, #tpu.memory_space<vmem>>, %arg22: memref<1x128xf32, #tpu.memory_space<vmem>>, %arg23: memref<128x128xf32, #tpu.memory_space<vmem>>, %arg24: memref<128x128xf32, #tpu.memory_space<vmem>>, %arg25: memref<128x128xf32, #tpu.memory_space<vmem>>) attributes {dimension_semantics = [#tpu.dimension_semantics<parallel>], iteration_bounds = array<i64: 1>, scalar_prefetch = 0 : i64, scratch_operands = 0 : i64, tpu.core_type = #tpu.core_type<tc>, window_params = [{transform_indices = @transform_0, window_bounds = array<i64: 128, 128>}, {transform_indices = @transform_1, window_bounds = array<i64: 128, 128>}, {pipeline_mode = #tpu.pipeline_mode<synchronous>, transform_indices = @transform_2, window_bounds = array<i64: 128, 512>}, {pipeline_mode = #tpu.pipeline_mode<synchronous>, transform_indices = @transform_3, window_bounds = array<i64: 1, 512>}, {pipeline_mode = #tpu.pipeline_mode<synchronous>, transform_indices = @transform_4, window_bounds = array<i64: 1, 512>}, {pipeline_mode = #tpu.pipeline_mode<synchronous>, transform_indices = @transform_5, window_bounds = array<i64: 1, 512>}, {pipeline_mode = #tpu.pipeline_mode<synchronous>, transform_indices = @transform_6, window_bounds = array<i64: 512, 256>}, {pipeline_mode = #tpu.pipeline_mode<synchronous>, transform_indices = @transform_7, window_bounds = array<i64: 1, 256>}, {pipeline_mode = #tpu.pipeline_mode<synchronous>, transform_indices = @transform_8, window_bounds = array<i64: 1, 256>}, {pipeline_mode = #tpu.pipeline_mode<synchronous>, transform_indices = @transform_9, window_bounds = array<i64: 1, 256>}, {pipeline_mode = #tpu.pipeline_mode<synchronous>, transform_indices = @transform_10, window_bounds = array<i64: 256, 256>}, {pipeline_mode = #tpu.pipeline_mode<synchronous>, transform_indices = @transform_11, window_bounds = array<i64: 1, 256>}, {pipeline_mode = #tpu.pipeline_mode<synchronous>, transform_indices = @transform_12, window_bounds = array<i64: 128, 256>}, {pipeline_mode = #tpu.pipeline_mode<synchronous>, transform_indices = @transform_13, window_bounds = array<i64: 1, 256>}, {pipeline_mode = #tpu.pipeline_mode<synchronous>, transform_indices = @transform_14, window_bounds = array<i64: 1, 256>}, {pipeline_mode = #tpu.pipeline_mode<synchronous>, transform_indices = @transform_15, window_bounds = array<i64: 1, 256>}, {pipeline_mode = #tpu.pipeline_mode<synchronous>, transform_indices = @transform_16, window_bounds = array<i64: 256, 512>}, {pipeline_mode = #tpu.pipeline_mode<synchronous>, transform_indices = @transform_17, window_bounds = array<i64: 1, 512>}, {pipeline_mode = #tpu.pipeline_mode<synchronous>, transform_indices = @transform_18, window_bounds = array<i64: 1, 512>}, {pipeline_mode = #tpu.pipeline_mode<synchronous>, transform_indices = @transform_19, window_bounds = array<i64: 1, 512>}, {pipeline_mode = #tpu.pipeline_mode<synchronous>, transform_indices = @transform_20, window_bounds = array<i64: 512, 128>}, {pipeline_mode = #tpu.pipeline_mode<synchronous>, transform_indices = @transform_21, window_bounds = array<i64: 1, 128>}, {transform_indices = @transform_22, window_bounds = array<i64: 128, 128>}, {transform_indices = @transform_23, window_bounds = array<i64: 128, 128>}, {transform_indices = @transform_24, window_bounds = array<i64: 128, 128>}]} {
    %c0 = arith.constant 0 : index
    %c0_0 = arith.constant 0 : index
    %0 = vector.load %arg1[%c0, %c0_0] : memref<128x128xf32, #tpu.memory_space<vmem>>, vector<128x128xf32>
    %c0_1 = arith.constant 0 : index
    %c0_2 = arith.constant 0 : index
    %1 = vector.load %arg3[%c0_1, %c0_2] : memref<128x512xf32, #tpu.memory_space<vmem>>, vector<128x512xf32>
    %cst = arith.constant dense<0.000000e+00> : vector<128x512xf32>
    %2 = tpu.matmul %0, %1, %cst {dimension_numbers = #tpu.dot_dimension_numbers<[1], [0], [0], [1], [0, 0, 1, 1], [], []>} : vector<128x128xf32>, vector<128x512xf32>, vector<128x512xf32> -> vector<128x512xf32>
    %c0_3 = arith.constant 0 : index
    %c0_4 = arith.constant 0 : index
    %3 = vector.load %arg4[%c0_3, %c0_4] : memref<1x512xf32, #tpu.memory_space<vmem>>, vector<1x512xf32>
    %4 = vector.broadcast %3 : vector<1x512xf32> to vector<128x512xf32>
    %5 = arith.addf %2, %4 : vector<128x512xf32>
    %c0_5 = arith.constant 0 : index
    %c0_6 = arith.constant 0 : index
    %6 = vector.load %arg5[%c0_5, %c0_6] : memref<1x512xf32, #tpu.memory_space<vmem>>, vector<1x512xf32>
    %c0_7 = arith.constant 0 : index
    %c0_8 = arith.constant 0 : index
    %7 = vector.load %arg6[%c0_7, %c0_8] : memref<1x512xf32, #tpu.memory_space<vmem>>, vector<1x512xf32>
    %cst_9 = arith.constant dense<0.000000e+00> : vector<128xf32>
    %8 = vector.multi_reduction <add>, %5, %cst_9 [1] : vector<128x512xf32> to vector<128xf32>
    %9 = vector.shape_cast %8 : vector<128xf32> to vector<128x1xf32>
    %cst_10 = arith.constant 5.120000e+02 : f32
    %10 = vector.broadcast %cst_10 : f32 to vector<128x1xf32>
    %11 = arith.divf %9, %10 : vector<128x1xf32>
    %12 = vector.broadcast %11 : vector<128x1xf32> to vector<128x512xf32>
    %13 = arith.subf %5, %12 : vector<128x512xf32>
    %14 = vector.broadcast %11 : vector<128x1xf32> to vector<128x512xf32>
    %15 = arith.subf %5, %14 : vector<128x512xf32>
    %16 = arith.mulf %13, %15 : vector<128x512xf32>
    %cst_11 = arith.constant dense<0.000000e+00> : vector<128xf32>
    %17 = vector.multi_reduction <add>, %16, %cst_11 [1] : vector<128x512xf32> to vector<128xf32>
    %18 = vector.shape_cast %17 : vector<128xf32> to vector<128x1xf32>
    %cst_12 = arith.constant 5.120000e+02 : f32
    %19 = vector.broadcast %cst_12 : f32 to vector<128x1xf32>
    %20 = arith.divf %18, %19 : vector<128x1xf32>
    %21 = vector.broadcast %11 : vector<128x1xf32> to vector<128x512xf32>
    %22 = arith.subf %5, %21 : vector<128x512xf32>
    %cst_13 = arith.constant 9.99999974E-6 : f32
    %23 = vector.broadcast %cst_13 : f32 to vector<128x1xf32>
    %24 = arith.addf %20, %23 : vector<128x1xf32>
    %25 = math.rsqrt %24 : vector<128x1xf32>
    %26 = vector.broadcast %25 : vector<128x1xf32> to vector<128x512xf32>
    %27 = arith.mulf %22, %26 : vector<128x512xf32>
    %28 = vector.broadcast %6 : vector<1x512xf32> to vector<128x512xf32>
    %29 = arith.mulf %27, %28 : vector<128x512xf32>
    %30 = vector.broadcast %7 : vector<1x512xf32> to vector<128x512xf32>
    %31 = arith.addf %29, %30 : vector<128x512xf32>
    %cst_14 = arith.constant 0.000000e+00 : f32
    %32 = vector.broadcast %cst_14 : f32 to vector<128x512xf32>
    %33 = arith.cmpf ogt, %31, %32 : vector<128x512xf32>
    %cst_15 = arith.constant 1.000000e-01 : f32
    %34 = vector.broadcast %cst_15 : f32 to vector<128x512xf32>
    %35 = arith.mulf %34, %31 : vector<128x512xf32>
    %36 = arith.select %33, %31, %35 : vector<128x512xi1>, vector<128x512xf32>
    %c0_16 = arith.constant 0 : index
    %c0_17 = arith.constant 0 : index
    %37 = vector.load %arg7[%c0_16, %c0_17] : memref<512x256xf32, #tpu.memory_space<vmem>>, vector<512x256xf32>
    %cst_18 = arith.constant dense<0.000000e+00> : vector<128x256xf32>
    %38 = tpu.matmul %36, %37, %cst_18 {dimension_numbers = #tpu.dot_dimension_numbers<[1], [0], [0], [1], [0, 0, 1, 1], [], []>} : vector<128x512xf32>, vector<512x256xf32>, vector<128x256xf32> -> vector<128x256xf32>
    %c0_19 = arith.constant 0 : index
    %c0_20 = arith.constant 0 : index
    %39 = vector.load %arg8[%c0_19, %c0_20] : memref<1x256xf32, #tpu.memory_space<vmem>>, vector<1x256xf32>
    %40 = vector.broadcast %39 : vector<1x256xf32> to vector<128x256xf32>
    %41 = arith.addf %38, %40 : vector<128x256xf32>
    %c0_21 = arith.constant 0 : index
    %c0_22 = arith.constant 0 : index
    %42 = vector.load %arg9[%c0_21, %c0_22] : memref<1x256xf32, #tpu.memory_space<vmem>>, vector<1x256xf32>
    %c0_23 = arith.constant 0 : index
    %c0_24 = arith.constant 0 : index
    %43 = vector.load %arg10[%c0_23, %c0_24] : memref<1x256xf32, #tpu.memory_space<vmem>>, vector<1x256xf32>
    %cst_25 = arith.constant dense<0.000000e+00> : vector<128xf32>
    %44 = vector.multi_reduction <add>, %41, %cst_25 [1] : vector<128x256xf32> to vector<128xf32>
    %45 = vector.shape_cast %44 : vector<128xf32> to vector<128x1xf32>
    %cst_26 = arith.constant 2.560000e+02 : f32
    %46 = vector.broadcast %cst_26 : f32 to vector<128x1xf32>
    %47 = arith.divf %45, %46 : vector<128x1xf32>
    %48 = vector.broadcast %47 : vector<128x1xf32> to vector<128x256xf32>
    %49 = arith.subf %41, %48 : vector<128x256xf32>
    %50 = vector.broadcast %47 : vector<128x1xf32> to vector<128x256xf32>
    %51 = arith.subf %41, %50 : vector<128x256xf32>
    %52 = arith.mulf %49, %51 : vector<128x256xf32>
    %cst_27 = arith.constant dense<0.000000e+00> : vector<128xf32>
    %53 = vector.multi_reduction <add>, %52, %cst_27 [1] : vector<128x256xf32> to vector<128xf32>
    %54 = vector.shape_cast %53 : vector<128xf32> to vector<128x1xf32>
    %cst_28 = arith.constant 2.560000e+02 : f32
    %55 = vector.broadcast %cst_28 : f32 to vector<128x1xf32>
    %56 = arith.divf %54, %55 : vector<128x1xf32>
    %57 = vector.broadcast %47 : vector<128x1xf32> to vector<128x256xf32>
    %58 = arith.subf %41, %57 : vector<128x256xf32>
    %cst_29 = arith.constant 9.99999974E-6 : f32
    %59 = vector.broadcast %cst_29 : f32 to vector<128x1xf32>
    %60 = arith.addf %56, %59 : vector<128x1xf32>
    %61 = math.rsqrt %60 : vector<128x1xf32>
    %62 = vector.broadcast %61 : vector<128x1xf32> to vector<128x256xf32>
    %63 = arith.mulf %58, %62 : vector<128x256xf32>
    %64 = vector.broadcast %42 : vector<1x256xf32> to vector<128x256xf32>
    %65 = arith.mulf %63, %64 : vector<128x256xf32>
    %66 = vector.broadcast %43 : vector<1x256xf32> to vector<128x256xf32>
    %67 = arith.addf %65, %66 : vector<128x256xf32>
    %cst_30 = arith.constant 0.000000e+00 : f32
    %68 = vector.broadcast %cst_30 : f32 to vector<128x256xf32>
    %69 = arith.cmpf ogt, %67, %68 : vector<128x256xf32>
    %cst_31 = arith.constant 1.000000e-01 : f32
    %70 = vector.broadcast %cst_31 : f32 to vector<128x256xf32>
    %71 = arith.mulf %70, %67 : vector<128x256xf32>
    %72 = arith.select %69, %67, %71 : vector<128x256xi1>, vector<128x256xf32>
    %c0_32 = arith.constant 0 : index
    %c0_33 = arith.constant 0 : index
    %73 = vector.load %arg11[%c0_32, %c0_33] : memref<256x256xf32, #tpu.memory_space<vmem>>, vector<256x256xf32>
    %cst_34 = arith.constant dense<0.000000e+00> : vector<128x256xf32>
    %74 = tpu.matmul %72, %73, %cst_34 {dimension_numbers = #tpu.dot_dimension_numbers<[1], [0], [0], [1], [0, 0, 1, 1], [], []>} : vector<128x256xf32>, vector<256x256xf32>, vector<128x256xf32> -> vector<128x256xf32>
    %c0_35 = arith.constant 0 : index
    %c0_36 = arith.constant 0 : index
    %75 = vector.load %arg12[%c0_35, %c0_36] : memref<1x256xf32, #tpu.memory_space<vmem>>, vector<1x256xf32>
    %76 = vector.broadcast %75 : vector<1x256xf32> to vector<128x256xf32>
    %77 = arith.addf %74, %76 : vector<128x256xf32>
    %78 = vector.extract_strided_slice %77 {offsets = [0, 0], sizes = [128, 128], strides = [1, 1]} : vector<128x256xf32> to vector<128x128xf32>
    %79 = vector.extract_strided_slice %77 {offsets = [0, 128], sizes = [128, 128], strides = [1, 1]} : vector<128x256xf32> to vector<128x128xf32>
    %cst_37 = arith.constant -1.000000e+01 : f32
    %cst_38 = arith.constant 1.000000e+01 : f32
    %80 = vector.broadcast %cst_37 : f32 to vector<128x128xf32>
    %81 = arith.maximumf %80, %79 : vector<128x128xf32>
    %82 = vector.broadcast %cst_38 : f32 to vector<128x128xf32>
    %83 = arith.minimumf %82, %81 : vector<128x128xf32>
    %c0_39 = arith.constant 0 : index
    %c0_40 = arith.constant 0 : index
    %84 = vector.load %arg2[%c0_39, %c0_40] : memref<128x128xf32, #tpu.memory_space<vmem>>, vector<128x128xf32>
    %cst_41 = arith.constant 5.000000e-01 : f32
    %85 = vector.broadcast %cst_41 : f32 to vector<128x128xf32>
    %86 = arith.mulf %85, %83 : vector<128x128xf32>
    %87 = math.exp %86 : vector<128x128xf32>
    %88 = arith.mulf %84, %87 : vector<128x128xf32>
    %89 = arith.addf %78, %88 : vector<128x128xf32>
    %c0_42 = arith.constant 0 : index
    %c0_43 = arith.constant 0 : index
    %90 = vector.load %arg13[%c0_42, %c0_43] : memref<128x256xf32, #tpu.memory_space<vmem>>, vector<128x256xf32>
    %cst_44 = arith.constant dense<0.000000e+00> : vector<128x256xf32>
    %91 = tpu.matmul %89, %90, %cst_44 {dimension_numbers = #tpu.dot_dimension_numbers<[1], [0], [0], [1], [0, 0, 1, 1], [], []>} : vector<128x128xf32>, vector<128x256xf32>, vector<128x256xf32> -> vector<128x256xf32>
    %c0_45 = arith.constant 0 : index
    %c0_46 = arith.constant 0 : index
    %92 = vector.load %arg14[%c0_45, %c0_46] : memref<1x256xf32, #tpu.memory_space<vmem>>, vector<1x256xf32>
    %93 = vector.broadcast %92 : vector<1x256xf32> to vector<128x256xf32>
    %94 = arith.addf %91, %93 : vector<128x256xf32>
    %c0_47 = arith.constant 0 : index
    %c0_48 = arith.constant 0 : index
    %95 = vector.load %arg15[%c0_47, %c0_48] : memref<1x256xf32, #tpu.memory_space<vmem>>, vector<1x256xf32>
    %c0_49 = arith.constant 0 : index
    %c0_50 = arith.constant 0 : index
    %96 = vector.load %arg16[%c0_49, %c0_50] : memref<1x256xf32, #tpu.memory_space<vmem>>, vector<1x256xf32>
    %cst_51 = arith.constant dense<0.000000e+00> : vector<128xf32>
    %97 = vector.multi_reduction <add>, %94, %cst_51 [1] : vector<128x256xf32> to vector<128xf32>
    %98 = vector.shape_cast %97 : vector<128xf32> to vector<128x1xf32>
    %cst_52 = arith.constant 2.560000e+02 : f32
    %99 = vector.broadcast %cst_52 : f32 to vector<128x1xf32>
    %100 = arith.divf %98, %99 : vector<128x1xf32>
    %101 = vector.broadcast %100 : vector<128x1xf32> to vector<128x256xf32>
    %102 = arith.subf %94, %101 : vector<128x256xf32>
    %103 = vector.broadcast %100 : vector<128x1xf32> to vector<128x256xf32>
    %104 = arith.subf %94, %103 : vector<128x256xf32>
    %105 = arith.mulf %102, %104 : vector<128x256xf32>
    %cst_53 = arith.constant dense<0.000000e+00> : vector<128xf32>
    %106 = vector.multi_reduction <add>, %105, %cst_53 [1] : vector<128x256xf32> to vector<128xf32>
    %107 = vector.shape_cast %106 : vector<128xf32> to vector<128x1xf32>
    %cst_54 = arith.constant 2.560000e+02 : f32
    %108 = vector.broadcast %cst_54 : f32 to vector<128x1xf32>
    %109 = arith.divf %107, %108 : vector<128x1xf32>
    %110 = vector.broadcast %100 : vector<128x1xf32> to vector<128x256xf32>
    %111 = arith.subf %94, %110 : vector<128x256xf32>
    %cst_55 = arith.constant 9.99999974E-6 : f32
    %112 = vector.broadcast %cst_55 : f32 to vector<128x1xf32>
    %113 = arith.addf %109, %112 : vector<128x1xf32>
    %114 = math.rsqrt %113 : vector<128x1xf32>
    %115 = vector.broadcast %114 : vector<128x1xf32> to vector<128x256xf32>
    %116 = arith.mulf %111, %115 : vector<128x256xf32>
    %117 = vector.broadcast %95 : vector<1x256xf32> to vector<128x256xf32>
    %118 = arith.mulf %116, %117 : vector<128x256xf32>
    %119 = vector.broadcast %96 : vector<1x256xf32> to vector<128x256xf32>
    %120 = arith.addf %118, %119 : vector<128x256xf32>
    %cst_56 = arith.constant 0.000000e+00 : f32
    %121 = vector.broadcast %cst_56 : f32 to vector<128x256xf32>
    %122 = arith.cmpf ogt, %120, %121 : vector<128x256xf32>
    %cst_57 = arith.constant 1.000000e-01 : f32
    %123 = vector.broadcast %cst_57 : f32 to vector<128x256xf32>
    %124 = arith.mulf %123, %120 : vector<128x256xf32>
    %125 = arith.select %122, %120, %124 : vector<128x256xi1>, vector<128x256xf32>
    %c0_58 = arith.constant 0 : index
    %c0_59 = arith.constant 0 : index
    %126 = vector.load %arg17[%c0_58, %c0_59] : memref<256x512xf32, #tpu.memory_space<vmem>>, vector<256x512xf32>
    %cst_60 = arith.constant dense<0.000000e+00> : vector<128x512xf32>
    %127 = tpu.matmul %125, %126, %cst_60 {dimension_numbers = #tpu.dot_dimension_numbers<[1], [0], [0], [1], [0, 0, 1, 1], [], []>} : vector<128x256xf32>, vector<256x512xf32>, vector<128x512xf32> -> vector<128x512xf32>
    %c0_61 = arith.constant 0 : index
    %c0_62 = arith.constant 0 : index
    %128 = vector.load %arg18[%c0_61, %c0_62] : memref<1x512xf32, #tpu.memory_space<vmem>>, vector<1x512xf32>
    %129 = vector.broadcast %128 : vector<1x512xf32> to vector<128x512xf32>
    %130 = arith.addf %127, %129 : vector<128x512xf32>
    %c0_63 = arith.constant 0 : index
    %c0_64 = arith.constant 0 : index
    %131 = vector.load %arg19[%c0_63, %c0_64] : memref<1x512xf32, #tpu.memory_space<vmem>>, vector<1x512xf32>
    %c0_65 = arith.constant 0 : index
    %c0_66 = arith.constant 0 : index
    %132 = vector.load %arg20[%c0_65, %c0_66] : memref<1x512xf32, #tpu.memory_space<vmem>>, vector<1x512xf32>
    %cst_67 = arith.constant dense<0.000000e+00> : vector<128xf32>
    %133 = vector.multi_reduction <add>, %130, %cst_67 [1] : vector<128x512xf32> to vector<128xf32>
    %134 = vector.shape_cast %133 : vector<128xf32> to vector<128x1xf32>
    %cst_68 = arith.constant 5.120000e+02 : f32
    %135 = vector.broadcast %cst_68 : f32 to vector<128x1xf32>
    %136 = arith.divf %134, %135 : vector<128x1xf32>
    %137 = vector.broadcast %136 : vector<128x1xf32> to vector<128x512xf32>
    %138 = arith.subf %130, %137 : vector<128x512xf32>
    %139 = vector.broadcast %136 : vector<128x1xf32> to vector<128x512xf32>
    %140 = arith.subf %130, %139 : vector<128x512xf32>
    %141 = arith.mulf %138, %140 : vector<128x512xf32>
    %cst_69 = arith.constant dense<0.000000e+00> : vector<128xf32>
    %142 = vector.multi_reduction <add>, %141, %cst_69 [1] : vector<128x512xf32> to vector<128xf32>
    %143 = vector.shape_cast %142 : vector<128xf32> to vector<128x1xf32>
    %cst_70 = arith.constant 5.120000e+02 : f32
    %144 = vector.broadcast %cst_70 : f32 to vector<128x1xf32>
    %145 = arith.divf %143, %144 : vector<128x1xf32>
    %146 = vector.broadcast %136 : vector<128x1xf32> to vector<128x512xf32>
    %147 = arith.subf %130, %146 : vector<128x512xf32>
    %cst_71 = arith.constant 9.99999974E-6 : f32
    %148 = vector.broadcast %cst_71 : f32 to vector<128x1xf32>
    %149 = arith.addf %145, %148 : vector<128x1xf32>
    %150 = math.rsqrt %149 : vector<128x1xf32>
    %151 = vector.broadcast %150 : vector<128x1xf32> to vector<128x512xf32>
    %152 = arith.mulf %147, %151 : vector<128x512xf32>
    %153 = vector.broadcast %131 : vector<1x512xf32> to vector<128x512xf32>
    %154 = arith.mulf %152, %153 : vector<128x512xf32>
    %155 = vector.broadcast %132 : vector<1x512xf32> to vector<128x512xf32>
    %156 = arith.addf %154, %155 : vector<128x512xf32>
    %cst_72 = arith.constant 0.000000e+00 : f32
    %157 = vector.broadcast %cst_72 : f32 to vector<128x512xf32>
    %158 = arith.cmpf ogt, %156, %157 : vector<128x512xf32>
    %cst_73 = arith.constant 1.000000e-01 : f32
    %159 = vector.broadcast %cst_73 : f32 to vector<128x512xf32>
    %160 = arith.mulf %159, %156 : vector<128x512xf32>
    %161 = arith.select %158, %156, %160 : vector<128x512xi1>, vector<128x512xf32>
    %c0_74 = arith.constant 0 : index
    %c0_75 = arith.constant 0 : index
    %162 = vector.load %arg21[%c0_74, %c0_75] : memref<512x128xf32, #tpu.memory_space<vmem>>, vector<512x128xf32>
    %cst_76 = arith.constant dense<0.000000e+00> : vector<128x128xf32>
    %163 = tpu.matmul %161, %162, %cst_76 {dimension_numbers = #tpu.dot_dimension_numbers<[1], [0], [0], [1], [0, 0, 1, 1], [], []>} : vector<128x512xf32>, vector<512x128xf32>, vector<128x128xf32> -> vector<128x128xf32>
    %c0_77 = arith.constant 0 : index
    %c0_78 = arith.constant 0 : index
    %164 = vector.load %arg22[%c0_77, %c0_78] : memref<1x128xf32, #tpu.memory_space<vmem>>, vector<1x128xf32>
    %165 = vector.broadcast %164 : vector<1x128xf32> to vector<128x128xf32>
    %166 = arith.addf %163, %165 : vector<128x128xf32>
    %c0_79 = arith.constant 0 : index
    %c0_80 = arith.constant 0 : index
    %167 = vector.load %arg23[%c0_79, %c0_80] : memref<128x128xf32, #tpu.memory_space<vmem>>, vector<128x128xf32>
    tpu.vector_store %arg23[%c0_79, %c0_80], %166 {strides = array<i32>} : memref<128x128xf32, #tpu.memory_space<vmem>>, vector<128x128xf32>,
    %c0_81 = arith.constant 0 : index
    %c0_82 = arith.constant 0 : index
    %168 = vector.load %arg24[%c0_81, %c0_82] : memref<128x128xf32, #tpu.memory_space<vmem>>, vector<128x128xf32>
    tpu.vector_store %arg24[%c0_81, %c0_82], %78 {strides = array<i32>} : memref<128x128xf32, #tpu.memory_space<vmem>>, vector<128x128xf32>,
    %c0_83 = arith.constant 0 : index
    %c0_84 = arith.constant 0 : index
    %169 = vector.load %arg25[%c0_83, %c0_84] : memref<128x128xf32, #tpu.memory_space<vmem>>, vector<128x128xf32>
    tpu.vector_store %arg25[%c0_83, %c0_84], %83 {strides = array<i32>} : memref<128x128xf32, #tpu.memory_space<vmem>>, vector<128x128xf32>,
    return
  }
  func.func @transform_0(%arg0: i32) -> (i32, i32) {
    %c0_i32 = arith.constant 0 : i32
    %c0_i32_0 = arith.constant 0 : i32
    return %arg0, %c0_i32 : i32, i32
  }
  func.func @transform_1(%arg0: i32) -> (i32, i32) {
    %c0_i32 = arith.constant 0 : i32
    %c0_i32_0 = arith.constant 0 : i32
    return %arg0, %c0_i32 : i32, i32
  }
  func.func @transform_2(%arg0: i32) -> (i32, i32) {
    %c0_i32 = arith.constant 0 : i32
    %c0_i32_0 = arith.constant 0 : i32
    %c0_i32_1 = arith.constant 0 : i32
    return %c0_i32, %c0_i32_0 : i32, i32
  }
  func.func @transform_3(%arg0: i32) -> (i32, i32) {
    %c0_i32 = arith.constant 0 : i32
    %c0_i32_0 = arith.constant 0 : i32
    %c0_i32_1 = arith.constant 0 : i32
    return %c0_i32, %c0_i32_0 : i32, i32
  }
  func.func @transform_4(%arg0: i32) -> (i32, i32) {
    %c0_i32 = arith.constant 0 : i32
    %c0_i32_0 = arith.constant 0 : i32
    %c0_i32_1 = arith.constant 0 : i32
    return %c0_i32, %c0_i32_0 : i32, i32
  }
  func.func @transform_5(%arg0: i32) -> (i32, i32) {
    %c0_i32 = arith.constant 0 : i32
    %c0_i32_0 = arith.constant 0 : i32
    %c0_i32_1 = arith.constant 0 : i32
    return %c0_i32, %c0_i32_0 : i32, i32
  }
  func.func @transform_6(%arg0: i32) -> (i32, i32) {
    %c0_i32 = arith.constant 0 : i32
    %c0_i32_0 = arith.constant 0 : i32
    %c0_i32_1 = arith.constant 0 : i32
    return %c0_i32, %c0_i32_0 : i32, i32
  }
  func.func @transform_7(%arg0: i32) -> (i32, i32) {
    %c0_i32 = arith.constant 0 : i32
    %c0_i32_0 = arith.constant 0 : i32
    %c0_i32_1 = arith.constant 0 : i32
    return %c0_i32, %c0_i32_0 : i32, i32
  }
  func.func @transform_8(%arg0: i32) -> (i32, i32) {
    %c0_i32 = arith.constant 0 : i32
    %c0_i32_0 = arith.constant 0 : i32
    %c0_i32_1 = arith.constant 0 : i32
    return %c0_i32, %c0_i32_0 : i32, i32
  }
  func.func @transform_9(%arg0: i32) -> (i32, i32) {
    %c0_i32 = arith.constant 0 : i32
    %c0_i32_0 = arith.constant 0 : i32
    %c0_i32_1 = arith.constant 0 : i32
    return %c0_i32, %c0_i32_0 : i32, i32
  }
  func.func @transform_10(%arg0: i32) -> (i32, i32) {
    %c0_i32 = arith.constant 0 : i32
    %c0_i32_0 = arith.constant 0 : i32
    %c0_i32_1 = arith.constant 0 : i32
    return %c0_i32, %c0_i32_0 : i32, i32
  }
  func.func @transform_11(%arg0: i32) -> (i32, i32) {
    %c0_i32 = arith.constant 0 : i32
    %c0_i32_0 = arith.constant 0 : i32
    %c0_i32_1 = arith.constant 0 : i32
    return %c0_i32, %c0_i32_0 : i32, i32
  }
  func.func @transform_12(%arg0: i32) -> (i32, i32) {
    %c0_i32 = arith.constant 0 : i32
    %c0_i32_0 = arith.constant 0 : i32
    %c0_i32_1 = arith.constant 0 : i32
    return %c0_i32, %c0_i32_0 : i32, i32
  }
  func.func @transform_13(%arg0: i32) -> (i32, i32) {
    %c0_i32 = arith.constant 0 : i32
    %c0_i32_0 = arith.constant 0 : i32
    %c0_i32_1 = arith.constant 0 : i32
    return %c0_i32, %c0_i32_0 : i32, i32
  }
  func.func @transform_14(%arg0: i32) -> (i32, i32) {
    %c0_i32 = arith.constant 0 : i32
    %c0_i32_0 = arith.constant 0 : i32
    %c0_i32_1 = arith.constant 0 : i32
    return %c0_i32, %c0_i32_0 : i32, i32
  }
  func.func @transform_15(%arg0: i32) -> (i32, i32) {
    %c0_i32 = arith.constant 0 : i32
    %c0_i32_0 = arith.constant 0 : i32
    %c0_i32_1 = arith.constant 0 : i32
    return %c0_i32, %c0_i32_0 : i32, i32
  }
  func.func @transform_16(%arg0: i32) -> (i32, i32) {
    %c0_i32 = arith.constant 0 : i32
    %c0_i32_0 = arith.constant 0 : i32
    %c0_i32_1 = arith.constant 0 : i32
    return %c0_i32, %c0_i32_0 : i32, i32
  }
  func.func @transform_17(%arg0: i32) -> (i32, i32) {
    %c0_i32 = arith.constant 0 : i32
    %c0_i32_0 = arith.constant 0 : i32
    %c0_i32_1 = arith.constant 0 : i32
    return %c0_i32, %c0_i32_0 : i32, i32
  }
  func.func @transform_18(%arg0: i32) -> (i32, i32) {
    %c0_i32 = arith.constant 0 : i32
    %c0_i32_0 = arith.constant 0 : i32
    %c0_i32_1 = arith.constant 0 : i32
    return %c0_i32, %c0_i32_0 : i32, i32
  }
  func.func @transform_19(%arg0: i32) -> (i32, i32) {
    %c0_i32 = arith.constant 0 : i32
    %c0_i32_0 = arith.constant 0 : i32
    %c0_i32_1 = arith.constant 0 : i32
    return %c0_i32, %c0_i32_0 : i32, i32
  }
  func.func @transform_20(%arg0: i32) -> (i32, i32) {
    %c0_i32 = arith.constant 0 : i32
    %c0_i32_0 = arith.constant 0 : i32
    %c0_i32_1 = arith.constant 0 : i32
    return %c0_i32, %c0_i32_0 : i32, i32
  }
  func.func @transform_21(%arg0: i32) -> (i32, i32) {
    %c0_i32 = arith.constant 0 : i32
    %c0_i32_0 = arith.constant 0 : i32
    %c0_i32_1 = arith.constant 0 : i32
    return %c0_i32, %c0_i32_0 : i32, i32
  }
  func.func @transform_22(%arg0: i32) -> (i32, i32) {
    %c0_i32 = arith.constant 0 : i32
    %c0_i32_0 = arith.constant 0 : i32
    return %arg0, %c0_i32 : i32, i32
  }
  func.func @transform_23(%arg0: i32) -> (i32, i32) {
    %c0_i32 = arith.constant 0 : i32
    %c0_i32_0 = arith.constant 0 : i32
    return %arg0, %c0_i32 : i32, i32
  }
  func.func @transform_24(%arg0: i32) -> (i32, i32) {
    %c0_i32 = arith.constant 0 : i32
    %c0_i32_0 = arith.constant 0 : i32
    return %arg0, %c0_i32 : i32, i32
  }
}

</mosaic_0001>

<llo_original>
// kernel: walking_vae_forward.1
$region0: #{walking_vae_forward.1}
  #allocation0 [shape = 'u32[]', space=smem, size = 0x4, offset = 0x4, fixed_abs, tag = 'smem constant byte address 0x4 - core index']
  #allocation1 [shape = 'u32[72,128]{1,0:T(1,128)}', space=vmem, size = 0x9000, scoped, tag = 'internal scratch']
  %s0 = inlined_call_operand.vmem [shape: f32[128,128], index: 0, kind: input, shape index: {}]
  %s1 = inlined_call_operand.vmem [shape: f32[128,128], index: 1, kind: input, shape index: {}]
  %s2 = inlined_call_operand.vmem [shape: f32[128,512], index: 2, kind: input, shape index: {}]
  %s3 = inlined_call_operand.vmem [shape: f32[1,512], index: 3, kind: input, shape index: {}]
  %s4 = inlined_call_operand.vmem [shape: f32[1,512], index: 4, kind: input, shape index: {}]
  %s5 = inlined_call_operand.vmem [shape: f32[1,512], index: 5, kind: input, shape index: {}]
  %s6 = inlined_call_operand.vmem [shape: f32[512,256], index: 6, kind: input, shape index: {}]
  %s7 = inlined_call_operand.vmem [shape: f32[1,256], index: 7, kind: input, shape index: {}]
  %s8 = inlined_call_operand.vmem [shape: f32[1,256], index: 8, kind: input, shape index: {}]
  %s9 = inlined_call_operand.vmem [shape: f32[1,256], index: 9, kind: input, shape index: {}]
  %s10 = inlined_call_operand.vmem [shape: f32[256,256], index: 10, kind: input, shape index: {}]
  %s11 = inlined_call_operand.vmem [shape: f32[1,256], index: 11, kind: input, shape index: {}]
  %s12 = inlined_call_operand.vmem [shape: f32[128,256], index: 12, kind: input, shape index: {}]
  %s13 = inlined_call_operand.vmem [shape: f32[1,256], index: 13, kind: input, shape index: {}]
  %s14 = inlined_call_operand.vmem [shape: f32[1,256], index: 14, kind: input, shape index: {}]
  %s15 = inlined_call_operand.vmem [shape: f32[1,256], index: 15, kind: input, shape index: {}]
  %s16 = inlined_call_operand.vmem [shape: f32[256,512], index: 16, kind: input, shape index: {}]
  %s17 = inlined_call_operand.vmem [shape: f32[1,512], index: 17, kind: input, shape index: {}]
  %s18 = inlined_call_operand.vmem [shape: f32[1,512], index: 18, kind: input, shape index: {}]
  %s19 = inlined_call_operand.vmem [shape: f32[1,512], index: 19, kind: input, shape index: {}]
  %s20 = inlined_call_operand.vmem [shape: f32[512,128], index: 20, kind: input, shape index: {}]
  %s21 = inlined_call_operand.vmem [shape: f32[1,128], index: 21, kind: input, shape index: {}]
  %s22 = inlined_call_operand.vmem [shape: f32[128,128], index: 22, kind: output, shape index: {0}]
  %s23 = inlined_call_operand.vmem [shape: f32[128,128], index: 23, kind: output, shape index: {1}]
  %s24 = inlined_call_operand.vmem [shape: f32[128,128], index: 24, kind: output, shape index: {2}]
  %25 = xla_tuple %s22, %s23, %s24
  %s26 = sld [smem:[#allocation0]]
  $region114: #{walking_vae_forward.1} parent=0
    _
  %s28 = ssub.s32 1, %s26
  %s29 = scalar_select 0, %s28, %s26
  // Predicated region
  $region2: #{walking_vae_forward.1} parent=0 // pred_check
    _
  $region3: #{walking_vae_forward.1} parent=0 // pred_check_branch
    %31 = sbr.rel (0) target = $region5
  $region4: #{walking_vae_forward.1} parent=0 // pred_region
    _
  $region5: #{walking_vae_forward.1} parent=0 // pred_fallthru
    _
  // Predicated region
  $region6: #{walking_vae_forward.1} parent=0 // pred_check
    _
  $region7: #{walking_vae_forward.1} parent=0 // pred_check_branch
    %33 = sbr.rel (0) target = $region9
  $region8: #{walking_vae_forward.1} parent=0 // pred_region
    _
  $region9: #{walking_vae_forward.1} parent=0 // pred_fallthru
    _
  // Predicated region
  $region10: #{walking_vae_forward.1} parent=0 // pred_check
    _
  $region11: #{walking_vae_forward.1} parent=0 // pred_check_branch
    %35 = sbr.rel (0) target = $region13
  $region12: #{walking_vae_forward.1} parent=0 // pred_region
    _
  $region13: #{walking_vae_forward.1} parent=0 // pred_fallthru
    _
  // Predicated region
  $region14: #{walking_vae_forward.1} parent=0 // pred_check
    _
  $region15: #{walking_vae_forward.1} parent=0 // pred_check_branch
    %37 = sbr.rel (0) target = $region17
  $region16: #{walking_vae_forward.1} parent=0 // pred_region
    _
  $region17: #{walking_vae_forward.1} parent=0 // pred_fallthru
    _
  // Predicated region
  $region18: #{walking_vae_forward.1} parent=0 // pred_check
    _
  $region19: #{walking_vae_forward.1} parent=0 // pred_check_branch
    %39 = sbr.rel (0) target = $region21
  $region20: #{walking_vae_forward.1} parent=0 // pred_region
    _
  $region21: #{walking_vae_forward.1} parent=0 // pred_fallthru
    _
  // Predicated region
  $region22: #{walking_vae_forward.1} parent=0 // pred_check
    _
  $region23: #{walking_vae_forward.1} parent=0 // pred_check_branch
    %41 = sbr.rel (0) target = $region25
  $region24: #{walking_vae_forward.1} parent=0 // pred_region
    _
  $region25: #{walking_vae_forward.1} parent=0 // pred_fallthru
    _
  // Predicated region
  $region26: #{walking_vae_forward.1} parent=0 // pred_check
    _
  $region27: #{walking_vae_forward.1} parent=0 // pred_check_branch
    %43 = sbr.rel (0) target = $region29
  $region28: #{walking_vae_forward.1} parent=0 // pred_region
    _
  $region29: #{walking_vae_forward.1} parent=0 // pred_fallthru
    _
  // Predicated region
  $region30: #{walking_vae_forward.1} parent=0 // pred_check
    _
  $region31: #{walking_vae_forward.1} parent=0 // pred_check_branch
    %45 = sbr.rel (0) target = $region33
  $region32: #{walking_vae_forward.1} parent=0 // pred_region
    _
  $region33: #{walking_vae_forward.1} parent=0 // pred_fallthru
    _
  // Predicated region
  $region34: #{walking_vae_forward.1} parent=0 // pred_check
    _
  $region35: #{walking_vae_forward.1} parent=0 // pred_check_branch
    %47 = sbr.rel (0) target = $region37
  $region36: #{walking_vae_forward.1} parent=0 // pred_region
    _
  $region37: #{walking_vae_forward.1} parent=0 // pred_fallthru
    _
  // Predicated region
  $region38: #{walking_vae_forward.1} parent=0 // pred_check
    _
  $region39: #{walking_vae_forward.1} parent=0 // pred_check_branch
    %49 = sbr.rel (0) target = $region41
  $region40: #{walking_vae_forward.1} parent=0 // pred_region
    _
  $region41: #{walking_vae_forward.1} parent=0 // pred_fallthru
    _
  // Predicated region
  $region42: #{walking_vae_forward.1} parent=0 // pred_check
    _
  $region43: #{walking_vae_forward.1} parent=0 // pred_check_branch
    %51 = sbr.rel (0) target = $region45
  $region44: #{walking_vae_forward.1} parent=0 // pred_region
    _
  $region45: #{walking_vae_forward.1} parent=0 // pred_fallthru
    _
  // Predicated region
  $region46: #{walking_vae_forward.1} parent=0 // pred_check
    _
  $region47: #{walking_vae_forward.1} parent=0 // pred_check_branch
    %53 = sbr.rel (0) target = $region49
  $region48: #{walking_vae_forward.1} parent=0 // pred_region
    _
  $region49: #{walking_vae_forward.1} parent=0 // pred_fallthru
    _
  // Predicated region
  $region50: #{walking_vae_forward.1} parent=0 // pred_check
    _
  $region51: #{walking_vae_forward.1} parent=0 // pred_check_branch
    %55 = sbr.rel (0) target = $region53
  $region52: #{walking_vae_forward.1} parent=0 // pred_region
    _
  $region53: #{walking_vae_forward.1} parent=0 // pred_fallthru
    _
  // Predicated region
  $region54: #{walking_vae_forward.1} parent=0 // pred_check
    _
  $region55: #{walking_vae_forward.1} parent=0 // pred_check_branch
    %57 = sbr.rel (0) target = $region57
  $region56: #{walking_vae_forward.1} parent=0 // pred_region
    _
  $region57: #{walking_vae_forward.1} parent=0 // pred_fallthru
    _
  // Predicated region
  $region58: #{walking_vae_forward.1} parent=0 // pred_check
    _
  $region59: #{walking_vae_forward.1} parent=0 // pred_check_branch
    %59 = sbr.rel (0) target = $region61
  $region60: #{walking_vae_forward.1} parent=0 // pred_region
    _
  $region61: #{walking_vae_forward.1} parent=0 // pred_fallthru
    _
  // Predicated region
  $region62: #{walking_vae_forward.1} parent=0 // pred_check
    _
  $region63: #{walking_vae_forward.1} parent=0 // pred_check_branch
    %61 = sbr.rel (0) target = $region65
  $region64: #{walking_vae_forward.1} parent=0 // pred_region
    _
  $region65: #{walking_vae_forward.1} parent=0 // pred_fallthru
    _
  // Predicated region
  $region66: #{walking_vae_forward.1} parent=0 // pred_check
    _
  $region67: #{walking_vae_forward.1} parent=0 // pred_check_branch
    %63 = sbr.rel (0) target = $region69
  $region68: #{walking_vae_forward.1} parent=0 // pred_region
    _
  $region69: #{walking_vae_forward.1} parent=0 // pred_fallthru
    _
  // Predicated region
  $region70: #{walking_vae_forward.1} parent=0 // pred_check
    _
  $region71: #{walking_vae_forward.1} parent=0 // pred_check_branch
    %65 = sbr.rel (0) target = $region73
  $region72: #{walking_vae_forward.1} parent=0 // pred_region
    _
  $region73: #{walking_vae_forward.1} parent=0 // pred_fallthru
    _
  // Predicated region
  $region74: #{walking_vae_forward.1} parent=0 // pred_check
    _
  $region75: #{walking_vae_forward.1} parent=0 // pred_check_branch
    %67 = sbr.rel (0) target = $region77
  $region76: #{walking_vae_forward.1} parent=0 // pred_region
    _
  $region77: #{walking_vae_forward.1} parent=0 // pred_fallthru
    _
  // Predicated region
  $region78: #{walking_vae_forward.1} parent=0 // pred_check
    _
  $region79: #{walking_vae_forward.1} parent=0 // pred_check_branch
    %69 = sbr.rel (0) target = $region81
  $region80: #{walking_vae_forward.1} parent=0 // pred_region
    _
  $region81: #{walking_vae_forward.1} parent=0 // pred_fallthru
    _
  // Predicated region
  $region82: #{walking_vae_forward.1} parent=0 // pred_check
    _
  $region83: #{walking_vae_forward.1} parent=0 // pred_check_branch
    %71 = sbr.rel (0) target = $region85
  $region84: #{walking_vae_forward.1} parent=0 // pred_region
    _
  $region85: #{walking_vae_forward.1} parent=0 // pred_fallthru
    _
  // Predicated region
  $region86: #{walking_vae_forward.1} parent=0 // pred_check
    _
  $region87: #{walking_vae_forward.1} parent=0 // pred_check_branch
    %73 = sbr.rel (0) target = $region89
  $region88: #{walking_vae_forward.1} parent=0 // pred_region
    _
  $region89: #{walking_vae_forward.1} parent=0 // pred_fallthru
    _
  %v74 = vld [vmem:[%s0] sm:$0xff]
  %v75 = vld [vmem:[%s0 + $0x8] sm:$0xff]
  %v76 = vld [vmem:[%s0 + $0x10] sm:$0xff]
  %v77 = vld [vmem:[%s0 + $0x18] sm:$0xff]
  %v78 = vld [vmem:[%s0 + $0x20] sm:$0xff]
  %v79 = vld [vmem:[%s0 + $0x28] sm:$0xff]
  %v80 = vld [vmem:[%s0 + $0x30] sm:$0xff]
  %v81 = vld [vmem:[%s0 + $0x38] sm:$0xff]
  %v82 = vld [vmem:[%s0 + $0x40] sm:$0xff]
  %v83 = vld [vmem:[%s0 + $0x48] sm:$0xff]
  %v84 = vld [vmem:[%s0 + $0x50] sm:$0xff]
  %v85 = vld [vmem:[%s0 + $0x58] sm:$0xff]
  %v86 = vld [vmem:[%s0 + $0x60] sm:$0xff]
  %v87 = vld [vmem:[%s0 + $0x68] sm:$0xff]
  %v88 = vld [vmem:[%s0 + $0x70] sm:$0xff]
  %v89 = vld [vmem:[%s0 + $0x78] sm:$0xff]
  %v90 = vld [vmem:[%s2] sm:$0xff]
  %v91 = vld [vmem:[%s2 + $0x8] sm:$0xff]
  %v92 = vld [vmem:[%s2 + $0x10] sm:$0xff]
  %v93 = vld [vmem:[%s2 + $0x18] sm:$0xff]
  %v94 = vld [vmem:[%s2 + $0x20] sm:$0xff]
  %v95 = vld [vmem:[%s2 + $0x28] sm:$0xff]
  %v96 = vld [vmem:[%s2 + $0x30] sm:$0xff]
  %v97 = vld [vmem:[%s2 + $0x38] sm:$0xff]
  %v98 = vld [vmem:[%s2 + $0x40] sm:$0xff]
  %v99 = vld [vmem:[%s2 + $0x48] sm:$0xff]
  %v100 = vld [vmem:[%s2 + $0x50] sm:$0xff]
  %v101 = vld [vmem:[%s2 + $0x58] sm:$0xff]
  %v102 = vld [vmem:[%s2 + $0x60] sm:$0xff]
  %v103 = vld [vmem:[%s2 + $0x68] sm:$0xff]
  %v104 = vld [vmem:[%s2 + $0x70] sm:$0xff]
  %v105 = vld [vmem:[%s2 + $0x78] sm:$0xff]
  %v106 = vld [vmem:[%s2 + $0x80] sm:$0xff]
  %v107 = vld [vmem:[%s2 + $0x88] sm:$0xff]
  %v108 = vld [vmem:[%s2 + $0x90] sm:$0xff]
  %v109 = vld [vmem:[%s2 + $0x98] sm:$0xff]
  %v110 = vld [vmem:[%s2 + $0xa0] sm:$0xff]
  %v111 = vld [vmem:[%s2 + $0xa8] sm:$0xff]
  %v112 = vld [vmem:[%s2 + $0xb0] sm:$0xff]
  %v113 = vld [vmem:[%s2 + $0xb8] sm:$0xff]
  %v114 = vld [vmem:[%s2 + $0xc0] sm:$0xff]
  %v115 = vld [vmem:[%s2 + $0xc8] sm:$0xff]
  %v116 = vld [vmem:[%s2 + $0xd0] sm:$0xff]
  %v117 = vld [vmem:[%s2 + $0xd8] sm:$0xff]
  %v118 = vld [vmem:[%s2 + $0xe0] sm:$0xff]
  %v119 = vld [vmem:[%s2 + $0xe8] sm:$0xff]
  %v120 = vld [vmem:[%s2 + $0xf0] sm:$0xff]
  %v121 = vld [vmem:[%s2 + $0xf8] sm:$0xff]
  %v122 = vld [vmem:[%s2 + $0x100] sm:$0xff]
  %v123 = vld [vmem:[%s2 + $0x108] sm:$0xff]
  %v124 = vld [vmem:[%s2 + $0x110] sm:$0xff]
  %v125 = vld [vmem:[%s2 + $0x118] sm:$0xff]
  %v126 = vld [vmem:[%s2 + $0x120] sm:$0xff]
  %v127 = vld [vmem:[%s2 + $0x128] sm:$0xff]
  %v128 = vld [vmem:[%s2 + $0x130] sm:$0xff]
  %v129 = vld [vmem:[%s2 + $0x138] sm:$0xff]
  %v130 = vld [vmem:[%s2 + $0x140] sm:$0xff]
  %v131 = vld [vmem:[%s2 + $0x148] sm:$0xff]
  %v132 = vld [vmem:[%s2 + $0x150] sm:$0xff]
  %v133 = vld [vmem:[%s2 + $0x158] sm:$0xff]
  %v134 = vld [vmem:[%s2 + $0x160] sm:$0xff]
  %v135 = vld [vmem:[%s2 + $0x168] sm:$0xff]
  %v136 = vld [vmem:[%s2 + $0x170] sm:$0xff]
  %v137 = vld [vmem:[%s2 + $0x178] sm:$0xff]
  %v138 = vld [vmem:[%s2 + $0x180] sm:$0xff]
  %v139 = vld [vmem:[%s2 + $0x188] sm:$0xff]
  %v140 = vld [vmem:[%s2 + $0x190] sm:$0xff]
  %v141 = vld [vmem:[%s2 + $0x198] sm:$0xff]
  %v142 = vld [vmem:[%s2 + $0x1a0] sm:$0xff]
  %v143 = vld [vmem:[%s2 + $0x1a8] sm:$0xff]
  %v144 = vld [vmem:[%s2 + $0x1b0] sm:$0xff]
  %v145 = vld [vmem:[%s2 + $0x1b8] sm:$0xff]
  %v146 = vld [vmem:[%s2 + $0x1c0] sm:$0xff]
  %v147 = vld [vmem:[%s2 + $0x1c8] sm:$0xff]
  %v148 = vld [vmem:[%s2 + $0x1d0] sm:$0xff]
  %v149 = vld [vmem:[%s2 + $0x1d8] sm:$0xff]
  %v150 = vld [vmem:[%s2 + $0x1e0] sm:$0xff]
  %v151 = vld [vmem:[%s2 + $0x1e8] sm:$0xff]
  %v152 = vld [vmem:[%s2 + $0x1f0] sm:$0xff]
  %v153 = vld [vmem:[%s2 + $0x1f8] sm:$0xff]
  %v154 = vld [vmem:[%s3] sm:$0xf]
  %v156 = vperm.slane %v154, 0
  %v157 = vperm.slane %v154, 1
  %v158 = vperm.slane %v154, 2
  %v159 = vperm.slane %v154, 3
  %164 = vmatpush.msra.mxu0 %v150
  %165 = vmatpush.msra.mxu0 %v146
  %166 = vmatpush.msra.mxu0 %v142
  %167 = vmatpush.msra.mxu0 %v138
  %168 = vmatpush.msra.mxu0 %v134
  %169 = vmatpush.msra.mxu0 %v130
  %170 = vmatpush.msra.mxu0 %v126
  %171 = vmatpush.msra.mxu0 %v122
  %172 = vmatpush.msra.mxu0 %v118
  %173 = vmatpush.msra.mxu0 %v114
  %174 = vmatpush.msra.mxu0 %v110
  %175 = vmatpush.msra.mxu0 %v106
  %176 = vmatpush.msra.mxu0 %v102
  %177 = vmatpush.msra.mxu0 %v98
  %178 = vmatpush.msra.mxu0 %v94
  %179 = vmatpush.msra.mxu0 %v90
  %180 = vmatmul.f32.gmra.mxu0 %v74
  %v181 = vpop.f32.mrf.mxu0
  %v182 = vadd.f32 %v156, %v181
  %183 = vmatmul.f32.gmra.mxu0 %v75
  %v184 = vpop.f32.mrf.mxu0
  %v185 = vadd.f32 %v156, %v184
  %186 = vmatmul.f32.gmra.mxu0 %v76
  %v187 = vpop.f32.mrf.mxu0
  %v188 = vadd.f32 %v156, %v187
  %189 = vmatmul.f32.gmra.mxu0 %v77
  %v190 = vpop.f32.mrf.mxu0
  %v191 = vadd.f32 %v156, %v190
  %192 = vmatmul.f32.gmra.mxu0 %v78
  %v193 = vpop.f32.mrf.mxu0
  %v194 = vadd.f32 %v156, %v193
  %195 = vmatmul.f32.gmra.mxu0 %v79
  %v196 = vpop.f32.mrf.mxu0
  %v197 = vadd.f32 %v156, %v196
  %198 = vmatmul.f32.gmra.mxu0 %v80
  %v199 = vpop.f32.mrf.mxu0
  %v200 = vadd.f32 %v156, %v199
  %201 = vmatmul.f32.gmra.mxu0 %v81
  %v202 = vpop.f32.mrf.mxu0
  %v203 = vadd.f32 %v156, %v202
  %204 = vmatmul.f32.gmra.mxu0 %v82
  %v205 = vpop.f32.mrf.mxu0
  %v206 = vadd.f32 %v156, %v205
  %207 = vmatmul.f32.gmra.mxu0 %v83
  %v208 = vpop.f32.mrf.mxu0
  %v209 = vadd.f32 %v156, %v208
  %210 = vmatmul.f32.gmra.mxu0 %v84
  %v211 = vpop.f32.mrf.mxu0
  %v212 = vadd.f32 %v156, %v211
  %213 = vmatmul.f32.gmra.mxu0 %v85
  %v214 = vpop.f32.mrf.mxu0
  %v215 = vadd.f32 %v156, %v214
  %216 = vmatmul.f32.gmra.mxu0 %v86
  %v217 = vpop.f32.mrf.mxu0
  %v218 = vadd.f32 %v156, %v217
  %219 = vmatmul.f32.gmra.mxu0 %v87
  %v220 = vpop.f32.mrf.mxu0
  %v221 = vadd.f32 %v156, %v220
  %222 = vmatmul.f32.gmra.mxu0 %v88
  %v223 = vpop.f32.mrf.mxu0
  %v224 = vadd.f32 %v156, %v223
  %225 = vmatmul.f32.gmra.mxu0 %v89
  %v226 = vpop.f32.mrf.mxu0
  %v227 = vadd.f32 %v156, %v226
  %228 = vdwg.mxu0
  %229 = vmatpush.msra.mxu0 %v151
  %230 = vmatpush.msra.mxu0 %v147
  %231 = vmatpush.msra.mxu0 %v143
  %232 = vmatpush.msra.mxu0 %v139
  %233 = vmatpush.msra.mxu0 %v135
  %234 = vmatpush.msra.mxu0 %v131
  %235 = vmatpush.msra.mxu0 %v127
  %236 = vmatpush.msra.mxu0 %v123
  %237 = vmatpush.msra.mxu0 %v119
  %238 = vmatpush.msra.mxu0 %v115
  %239 = vmatpush.msra.mxu0 %v111
  %240 = vmatpush.msra.mxu0 %v107
  %241 = vmatpush.msra.mxu0 %v103
  %242 = vmatpush.msra.mxu0 %v99
  %243 = vmatpush.msra.mxu0 %v95
  %244 = vmatpush.msra.mxu0 %v91
  %245 = vmatmul.f32.gmra.mxu0 %v74
  %v246 = vpop.f32.mrf.mxu0
  %v247 = vadd.f32 %v157, %v246
  %248 = vmatmul.f32.gmra.mxu0 %v75
  %v249 = vpop.f32.mrf.mxu0
  %v250 = vadd.f32 %v157, %v249
  %251 = vmatmul.f32.gmra.mxu0 %v76
  %v252 = vpop.f32.mrf.mxu0
  %v253 = vadd.f32 %v157, %v252
  %254 = vmatmul.f32.gmra.mxu0 %v77
  %v255 = vpop.f32.mrf.mxu0
  %v256 = vadd.f32 %v157, %v255
  %257 = vmatmul.f32.gmra.mxu0 %v78
  %v258 = vpop.f32.mrf.mxu0
  %v259 = vadd.f32 %v157, %v258
  %260 = vmatmul.f32.gmra.mxu0 %v79
  %v261 = vpop.f32.mrf.mxu0
  %v262 = vadd.f32 %v157, %v261
  %263 = vmatmul.f32.gmra.mxu0 %v80
  %v264 = vpop.f32.mrf.mxu0
  %v265 = vadd.f32 %v157, %v264
  %266 = vmatmul.f32.gmra.mxu0 %v81
  %v267 = vpop.f32.mrf.mxu0
  %v268 = vadd.f32 %v157, %v267
  %269 = vmatmul.f32.gmra.mxu0 %v82
  %v270 = vpop.f32.mrf.mxu0
  %v271 = vadd.f32 %v157, %v270
  %272 = vmatmul.f32.gmra.mxu0 %v83
  %v273 = vpop.f32.mrf.mxu0
  %v274 = vadd.f32 %v157, %v273
  %275 = vmatmul.f32.gmra.mxu0 %v84
  %v276 = vpop.f32.mrf.mxu0
  %v277 = vadd.f32 %v157, %v276
  %278 = vmatmul.f32.gmra.mxu0 %v85
  %v279 = vpop.f32.mrf.mxu0
  %v280 = vadd.f32 %v157, %v279
  %281 = vmatmul.f32.gmra.mxu0 %v86
  %v282 = vpop.f32.mrf.mxu0
  %v283 = vadd.f32 %v157, %v282
  %284 = vmatmul.f32.gmra.mxu0 %v87
  %v285 = vpop.f32.mrf.mxu0
  %v286 = vadd.f32 %v157, %v285
  %287 = vmatmul.f32.gmra.mxu0 %v88
  %v288 = vpop.f32.mrf.mxu0
  %v289 = vadd.f32 %v157, %v288
  %290 = vmatmul.f32.gmra.mxu0 %v89
  %v291 = vpop.f32.mrf.mxu0
  %v292 = vadd.f32 %v157, %v291
  %293 = vdwg.mxu0
  %294 = vmatpush.msra.mxu0 %v152
  %295 = vmatpush.msra.mxu0 %v148
  %296 = vmatpush.msra.mxu0 %v144
  %297 = vmatpush.msra.mxu0 %v140
  %298 = vmatpush.msra.mxu0 %v136
  %299 = vmatpush.msra.mxu0 %v132
  %300 = vmatpush.msra.mxu0 %v128
  %301 = vmatpush.msra.mxu0 %v124
  %302 = vmatpush.msra.mxu0 %v120
  %303 = vmatpush.msra.mxu0 %v116
  %304 = vmatpush.msra.mxu0 %v112
  %305 = vmatpush.msra.mxu0 %v108
  %306 = vmatpush.msra.mxu0 %v104
  %307 = vmatpush.msra.mxu0 %v100
  %308 = vmatpush.msra.mxu0 %v96
  %309 = vmatpush.msra.mxu0 %v92
  %310 = vmatmul.f32.gmra.mxu0 %v74
  %v311 = vpop.f32.mrf.mxu0
  %v312 = vadd.f32 %v158, %v311
  %313 = vmatmul.f32.gmra.mxu0 %v75
  %v314 = vpop.f32.mrf.mxu0
  %v315 = vadd.f32 %v158, %v314
  %316 = vmatmul.f32.gmra.mxu0 %v76
  %v317 = vpop.f32.mrf.mxu0
  %v318 = vadd.f32 %v158, %v317
  %319 = vmatmul.f32.gmra.mxu0 %v77
  %v320 = vpop.f32.mrf.mxu0
  %v321 = vadd.f32 %v158, %v320
  %322 = vmatmul.f32.gmra.mxu0 %v78
  %v323 = vpop.f32.mrf.mxu0
  %v324 = vadd.f32 %v158, %v323
  %325 = vmatmul.f32.gmra.mxu0 %v79
  %v326 = vpop.f32.mrf.mxu0
  %v327 = vadd.f32 %v158, %v326
  %328 = vmatmul.f32.gmra.mxu0 %v80
  %v329 = vpop.f32.mrf.mxu0
  %v330 = vadd.f32 %v158, %v329
  %331 = vmatmul.f32.gmra.mxu0 %v81
  %v332 = vpop.f32.mrf.mxu0
  %v333 = vadd.f32 %v158, %v332
  %334 = vmatmul.f32.gmra.mxu0 %v82
  %v335 = vpop.f32.mrf.mxu0
  %v336 = vadd.f32 %v158, %v335
  %337 = vmatmul.f32.gmra.mxu0 %v83
  %v338 = vpop.f32.mrf.mxu0
  %v339 = vadd.f32 %v158, %v338
  %340 = vmatmul.f32.gmra.mxu0 %v84
  %v341 = vpop.f32.mrf.mxu0
  %v342 = vadd.f32 %v158, %v341
  %343 = vmatmul.f32.gmra.mxu0 %v85
  %v344 = vpop.f32.mrf.mxu0
  %v345 = vadd.f32 %v158, %v344
  %346 = vmatmul.f32.gmra.mxu0 %v86
  %v347 = vpop.f32.mrf.mxu0
  %v348 = vadd.f32 %v158, %v347
  %349 = vmatmul.f32.gmra.mxu0 %v87
  %v350 = vpop.f32.mrf.mxu0
  %v351 = vadd.f32 %v158, %v350
  %352 = vmatmul.f32.gmra.mxu0 %v88
  %v353 = vpop.f32.mrf.mxu0
  %v354 = vadd.f32 %v158, %v353
  %355 = vmatmul.f32.gmra.mxu0 %v89
  %v356 = vpop.f32.mrf.mxu0
  %v357 = vadd.f32 %v158, %v356
  %358 = vdwg.mxu0
  %359 = vmatpush.msra.mxu0 %v153
  %360 = vmatpush.msra.mxu0 %v149
  %361 = vmatpush.msra.mxu0 %v145
  %362 = vmatpush.msra.mxu0 %v141
  %363 = vmatpush.msra.mxu0 %v137
  %364 = vmatpush.msra.mxu0 %v133
  %365 = vmatpush.msra.mxu0 %v129
  %366 = vmatpush.msra.mxu0 %v125
  %367 = vmatpush.msra.mxu0 %v121
  %368 = vmatpush.msra.mxu0 %v117
  %369 = vmatpush.msra.mxu0 %v113
  %370 = vmatpush.msra.mxu0 %v109
  %371 = vmatpush.msra.mxu0 %v105
  %372 = vmatpush.msra.mxu0 %v101
  %373 = vmatpush.msra.mxu0 %v97
  %374 = vmatpush.msra.mxu0 %v93
  %375 = vmatmul.f32.gmra.mxu0 %v74
  %v376 = vpop.f32.mrf.mxu0
  %v377 = vadd.f32 %v159, %v376
  %378 = vmatmul.f32.gmra.mxu0 %v75
  %v379 = vpop.f32.mrf.mxu0
  %v380 = vadd.f32 %v159, %v379
  %381 = vmatmul.f32.gmra.mxu0 %v76
  %v382 = vpop.f32.mrf.mxu0
  %v383 = vadd.f32 %v159, %v382
  %384 = vmatmul.f32.gmra.mxu0 %v77
  %v385 = vpop.f32.mrf.mxu0
  %v386 = vadd.f32 %v159, %v385
  %387 = vmatmul.f32.gmra.mxu0 %v78
  %v388 = vpop.f32.mrf.mxu0
  %v389 = vadd.f32 %v159, %v388
  %390 = vmatmul.f32.gmra.mxu0 %v79
  %v391 = vpop.f32.mrf.mxu0
  %v392 = vadd.f32 %v159, %v391
  %393 = vmatmul.f32.gmra.mxu0 %v80
  %v394 = vpop.f32.mrf.mxu0
  %v395 = vadd.f32 %v159, %v394
  %396 = vmatmul.f32.gmra.mxu0 %v81
  %v397 = vpop.f32.mrf.mxu0
  %v398 = vadd.f32 %v159, %v397
  %399 = vmatmul.f32.gmra.mxu0 %v82
  %v400 = vpop.f32.mrf.mxu0
  %v401 = vadd.f32 %v159, %v400
  %402 = vmatmul.f32.gmra.mxu0 %v83
  %v403 = vpop.f32.mrf.mxu0
  %v404 = vadd.f32 %v159, %v403
  %405 = vmatmul.f32.gmra.mxu0 %v84
  %v406 = vpop.f32.mrf.mxu0
  %v407 = vadd.f32 %v159, %v406
  %408 = vmatmul.f32.gmra.mxu0 %v85
  %v409 = vpop.f32.mrf.mxu0
  %v410 = vadd.f32 %v159, %v409
  %411 = vmatmul.f32.gmra.mxu0 %v86
  %v412 = vpop.f32.mrf.mxu0
  %v413 = vadd.f32 %v159, %v412
  %414 = vmatmul.f32.gmra.mxu0 %v87
  %v415 = vpop.f32.mrf.mxu0
  %v416 = vadd.f32 %v159, %v415
  %417 = vmatmul.f32.gmra.mxu0 %v88
  %v418 = vpop.f32.mrf.mxu0
  %v419 = vadd.f32 %v159, %v418
  %420 = vmatmul.f32.gmra.mxu0 %v89
  %v421 = vpop.f32.mrf.mxu0
  %v422 = vadd.f32 %v159, %v421
  %423 = vdwg.mxu0
  %v424 = vld [vmem:[%s4] sm:$0xf]
  %v425 = vld [vmem:[%s5] sm:$0xf]
  %v426 = vadd.f32 %v182, %v247
  %v427 = vadd.f32 %v426, %v312
  %v428 = vadd.f32 %v427, %v377
  %429 = vadd.xlane.f32.xlu0 %v428
  %v430 = vpop.xlane.xlu0 %429
  %v431 = vadd.f32 %v185, %v250
  %v432 = vadd.f32 %v431, %v315
  %v433 = vadd.f32 %v432, %v380
  %434 = vadd.xlane.f32.xlu0 %v433
  %v435 = vpop.xlane.xlu0 %434
  %v436 = vadd.f32 %v188, %v253
  %v437 = vadd.f32 %v436, %v318
  %v438 = vadd.f32 %v437, %v383
  %439 = vadd.xlane.f32.xlu0 %v438
  %v440 = vpop.xlane.xlu0 %439
  %v441 = vadd.f32 %v191, %v256
  %v442 = vadd.f32 %v441, %v321
  %v443 = vadd.f32 %v442, %v386
  %444 = vadd.xlane.f32.xlu0 %v443
  %v445 = vpop.xlane.xlu0 %444
  %v446 = vadd.f32 %v194, %v259
  %v447 = vadd.f32 %v446, %v324
  %v448 = vadd.f32 %v447, %v389
  %449 = vadd.xlane.f32.xlu0 %v448
  %v450 = vpop.xlane.xlu0 %449
  %v451 = vadd.f32 %v197, %v262
  %v452 = vadd.f32 %v451, %v327
  %v453 = vadd.f32 %v452, %v392
  %454 = vadd.xlane.f32.xlu0 %v453
  %v455 = vpop.xlane.xlu0 %454
  %v456 = vadd.f32 %v200, %v265
  %v457 = vadd.f32 %v456, %v330
  %v458 = vadd.f32 %v457, %v395
  %459 = vadd.xlane.f32.xlu0 %v458
  %v460 = vpop.xlane.xlu0 %459
  %v461 = vadd.f32 %v203, %v268
  %v462 = vadd.f32 %v461, %v333
  %v463 = vadd.f32 %v462, %v398
  %464 = vadd.xlane.f32.xlu0 %v463
  %v465 = vpop.xlane.xlu0 %464
  %v466 = vadd.f32 %v206, %v271
  %v467 = vadd.f32 %v466, %v336
  %v468 = vadd.f32 %v467, %v401
  %469 = vadd.xlane.f32.xlu0 %v468
  %v470 = vpop.xlane.xlu0 %469
  %v471 = vadd.f32 %v209, %v274
  %v472 = vadd.f32 %v471, %v339
  %v473 = vadd.f32 %v472, %v404
  %474 = vadd.xlane.f32.xlu0 %v473
  %v475 = vpop.xlane.xlu0 %474
  %v476 = vadd.f32 %v212, %v277
  %v477 = vadd.f32 %v476, %v342
  %v478 = vadd.f32 %v477, %v407
  %479 = vadd.xlane.f32.xlu0 %v478
  %v480 = vpop.xlane.xlu0 %479
  %v481 = vadd.f32 %v215, %v280
  %v482 = vadd.f32 %v481, %v345
  %v483 = vadd.f32 %v482, %v410
  %484 = vadd.xlane.f32.xlu0 %v483
  %v485 = vpop.xlane.xlu0 %484
  %v486 = vadd.f32 %v218, %v283
  %v487 = vadd.f32 %v486, %v348
  %v488 = vadd.f32 %v487, %v413
  %489 = vadd.xlane.f32.xlu0 %v488
  %v490 = vpop.xlane.xlu0 %489
  %v491 = vadd.f32 %v221, %v286
  %v492 = vadd.f32 %v491, %v351
  %v493 = vadd.f32 %v492, %v416
  %494 = vadd.xlane.f32.xlu0 %v493
  %v495 = vpop.xlane.xlu0 %494
  %v496 = vadd.f32 %v224, %v289
  %v497 = vadd.f32 %v496, %v354
  %v498 = vadd.f32 %v497, %v419
  %499 = vadd.xlane.f32.xlu0 %v498
  %v500 = vpop.xlane.xlu0 %499
  %v501 = vadd.f32 %v227, %v292
  %v502 = vadd.f32 %v501, %v357
  %v503 = vadd.f32 %v502, %v422
  %504 = vadd.xlane.f32.xlu0 %v503
  %v505 = vpop.xlane.xlu0 %504
  %v506 = vrcp.pop 512.0
  %v507 = vmul.f32 512.0, %v506
  %v508 = vsub.f32 1.0, %v507
  %v509 = vmul.f32 %v506, %v508
  %v510 = vadd.f32 %v506, %v509
  %vm511 = vweird.f32 %v506
  %v512 = vsel %vm511, %v506, %v510
  %v513 = vmul.f32 %v430, %v512
  %v514 = vmul.f32 %v435, %v512
  %v515 = vmul.f32 %v440, %v512
  %v516 = vmul.f32 %v445, %v512
  %v517 = vmul.f32 %v450, %v512
  %v518 = vmul.f32 %v455, %v512
  %v519 = vmul.f32 %v460, %v512
  %v520 = vmul.f32 %v465, %v512
  %v521 = vmul.f32 %v470, %v512
  %v522 = vmul.f32 %v475, %v512
  %v523 = vmul.f32 %v480, %v512
  %v524 = vmul.f32 %v485, %v512
  %v525 = vmul.f32 %v490, %v512
  %v526 = vmul.f32 %v495, %v512
  %v527 = vmul.f32 %v500, %v512
  %v528 = vmul.f32 %v505, %v512
  %v529 = vsub.f32 %v182, %v513
  %v530 = vsub.f32 %v247, %v513
  %v531 = vsub.f32 %v312, %v513
  %v532 = vsub.f32 %v377, %v513
  %v533 = vsub.f32 %v185, %v514
  %v534 = vsub.f32 %v250, %v514
  %v535 = vsub.f32 %v315, %v514
  %v536 = vsub.f32 %v380, %v514
  %v537 = vsub.f32 %v188, %v515
  %v538 = vsub.f32 %v253, %v515
  %v539 = vsub.f32 %v318, %v515
  %v540 = vsub.f32 %v383, %v515
  %v541 = vsub.f32 %v191, %v516
  %v542 = vsub.f32 %v256, %v516
  %v543 = vsub.f32 %v321, %v516
  %v544 = vsub.f32 %v386, %v516
  %v545 = vsub.f32 %v194, %v517
  %v546 = vsub.f32 %v259, %v517
  %v547 = vsub.f32 %v324, %v517
  %v548 = vsub.f32 %v389, %v517
  %v549 = vsub.f32 %v197, %v518
  %v550 = vsub.f32 %v262, %v518
  %v551 = vsub.f32 %v327, %v518
  %v552 = vsub.f32 %v392, %v518
  %v553 = vsub.f32 %v200, %v519
  %v554 = vsub.f32 %v265, %v519
  %v555 = vsub.f32 %v330, %v519
  %v556 = vsub.f32 %v395, %v519
  %v557 = vsub.f32 %v203, %v520
  %v558 = vsub.f32 %v268, %v520
  %v559 = vsub.f32 %v333, %v520
  %v560 = vsub.f32 %v398, %v520
  %v561 = vsub.f32 %v206, %v521
  %v562 = vsub.f32 %v271, %v521
  %v563 = vsub.f32 %v336, %v521
  %v564 = vsub.f32 %v401, %v521
  %v565 = vsub.f32 %v209, %v522
  %v566 = vsub.f32 %v274, %v522
  %v567 = vsub.f32 %v339, %v522
  %v568 = vsub.f32 %v404, %v522
  %v569 = vsub.f32 %v212, %v523
  %v570 = vsub.f32 %v277, %v523
  %v571 = vsub.f32 %v342, %v523
  %v572 = vsub.f32 %v407, %v523
  %v573 = vsub.f32 %v215, %v524
  %v574 = vsub.f32 %v280, %v524
  %v575 = vsub.f32 %v345, %v524
  %v576 = vsub.f32 %v410, %v524
  %v577 = vsub.f32 %v218, %v525
  %v578 = vsub.f32 %v283, %v525
  %v579 = vsub.f32 %v348, %v525
  %v580 = vsub.f32 %v413, %v525
  %v581 = vsub.f32 %v221, %v526
  %v582 = vsub.f32 %v286, %v526
  %v583 = vsub.f32 %v351, %v526
  %v584 = vsub.f32 %v416, %v526
  %v585 = vsub.f32 %v224, %v527
  %v586 = vsub.f32 %v289, %v527
  %v587 = vsub.f32 %v354, %v527
  %v588 = vsub.f32 %v419, %v527
  %v589 = vsub.f32 %v227, %v528
  %v590 = vsub.f32 %v292, %v528
  %v591 = vsub.f32 %v357, %v528
  %v592 = vsub.f32 %v422, %v528
  %v593 = vmul.f32 %v529, %v529
  %v594 = vmul.f32 %v530, %v530
  %v595 = vmul.f32 %v531, %v531
  %v596 = vmul.f32 %v532, %v532
  %v597 = vmul.f32 %v533, %v533
  %v598 = vmul.f32 %v534, %v534
  %v599 = vmul.f32 %v535, %v535
  %v600 = vmul.f32 %v536, %v536
  %v601 = vmul.f32 %v537, %v537
  %v602 = vmul.f32 %v538, %v538
  %v603 = vmul.f32 %v539, %v539
  %v604 = vmul.f32 %v540, %v540
  %v605 = vmul.f32 %v541, %v541
  %v606 = vmul.f32 %v542, %v542
  %v607 = vmul.f32 %v543, %v543
  %v608 = vmul.f32 %v544, %v544
  %v609 = vmul.f32 %v545, %v545
  %v610 = vmul.f32 %v546, %v546
  %v611 = vmul.f32 %v547, %v547
  %v612 = vmul.f32 %v548, %v548
  %v613 = vmul.f32 %v549, %v549
  %v614 = vmul.f32 %v550, %v550
  %v615 = vmul.f32 %v551, %v551
  %v616 = vmul.f32 %v552, %v552
  %v617 = vmul.f32 %v553, %v553
  %v618 = vmul.f32 %v554, %v554
  %v619 = vmul.f32 %v555, %v555
  %v620 = vmul.f32 %v556, %v556
  %v621 = vmul.f32 %v557, %v557
  %v622 = vmul.f32 %v558, %v558
  %v623 = vmul.f32 %v559, %v559
  %v624 = vmul.f32 %v560, %v560
  %v625 = vmul.f32 %v561, %v561
  %v626 = vmul.f32 %v562, %v562
  %v627 = vmul.f32 %v563, %v563
  %v628 = vmul.f32 %v564, %v564
  %v629 = vmul.f32 %v565, %v565
  %v630 = vmul.f32 %v566, %v566
  %v631 = vmul.f32 %v567, %v567
  %v632 = vmul.f32 %v568, %v568
  %v633 = vmul.f32 %v569, %v569
  %v634 = vmul.f32 %v570, %v570
  %v635 = vmul.f32 %v571, %v571
  %v636 = vmul.f32 %v572, %v572
  %v637 = vmul.f32 %v573, %v573
  %v638 = vmul.f32 %v574, %v574
  %v639 = vmul.f32 %v575, %v575
  %v640 = vmul.f32 %v576, %v576
  %v641 = vmul.f32 %v577, %v577
  %v642 = vmul.f32 %v578, %v578
  %v643 = vmul.f32 %v579, %v579
  %v644 = vmul.f32 %v580, %v580
  %v645 = vmul.f32 %v581, %v581
  %v646 = vmul.f32 %v582, %v582
  %v647 = vmul.f32 %v583, %v583
  %v648 = vmul.f32 %v584, %v584
  %v649 = vmul.f32 %v585, %v585
  %v650 = vmul.f32 %v586, %v586
  %v651 = vmul.f32 %v587, %v587
  %v652 = vmul.f32 %v588, %v588
  %v653 = vmul.f32 %v589, %v589
  %v654 = vmul.f32 %v590, %v590
  %v655 = vmul.f32 %v591, %v591
  %v656 = vmul.f32 %v592, %v592
  %v657 = vadd.f32 %v593, %v594
  %v658 = vadd.f32 %v657, %v595
  %v659 = vadd.f32 %v658, %v596
  %660 = vadd.xlane.f32.xlu0 %v659
  %v661 = vpop.xlane.xlu0 %660
  %v662 = vadd.f32 %v597, %v598
  %v663 = vadd.f32 %v662, %v599
  %v664 = vadd.f32 %v663, %v600
  %665 = vadd.xlane.f32.xlu0 %v664
  %v666 = vpop.xlane.xlu0 %665
  %v667 = vadd.f32 %v601, %v602
  %v668 = vadd.f32 %v667, %v603
  %v669 = vadd.f32 %v668, %v604
  %670 = vadd.xlane.f32.xlu0 %v669
  %v671 = vpop.xlane.xlu0 %670
  %v672 = vadd.f32 %v605, %v606
  %v673 = vadd.f32 %v672, %v607
  %v674 = vadd.f32 %v673, %v608
  %675 = vadd.xlane.f32.xlu0 %v674
  %v676 = vpop.xlane.xlu0 %675
  %v677 = vadd.f32 %v609, %v610
  %v678 = vadd.f32 %v677, %v611
  %v679 = vadd.f32 %v678, %v612
  %680 = vadd.xlane.f32.xlu0 %v679
  %v681 = vpop.xlane.xlu0 %680
  %v682 = vadd.f32 %v613, %v614
  %v683 = vadd.f32 %v682, %v615
  %v684 = vadd.f32 %v683, %v616
  %685 = vadd.xlane.f32.xlu0 %v684
  %v686 = vpop.xlane.xlu0 %685
  %v687 = vadd.f32 %v617, %v618
  %v688 = vadd.f32 %v687, %v619
  %v689 = vadd.f32 %v688, %v620
  %690 = vadd.xlane.f32.xlu0 %v689
  %v691 = vpop.xlane.xlu0 %690
  %v692 = vadd.f32 %v621, %v622
  %v693 = vadd.f32 %v692, %v623
  %v694 = vadd.f32 %v693, %v624
  %695 = vadd.xlane.f32.xlu0 %v694
  %v696 = vpop.xlane.xlu0 %695
  %v697 = vadd.f32 %v625, %v626
  %v698 = vadd.f32 %v697, %v627
  %v699 = vadd.f32 %v698, %v628
  %700 = vadd.xlane.f32.xlu0 %v699
  %v701 = vpop.xlane.xlu0 %700
  %v702 = vadd.f32 %v629, %v630
  %v703 = vadd.f32 %v702, %v631
  %v704 = vadd.f32 %v703, %v632
  %705 = vadd.xlane.f32.xlu0 %v704
  %v706 = vpop.xlane.xlu0 %705
  %v707 = vadd.f32 %v633, %v634
  %v708 = vadd.f32 %v707, %v635
  %v709 = vadd.f32 %v708, %v636
  %710 = vadd.xlane.f32.xlu0 %v709
  %v711 = vpop.xlane.xlu0 %710
  %v712 = vadd.f32 %v637, %v638
  %v713 = vadd.f32 %v712, %v639
  %v714 = vadd.f32 %v713, %v640
  %715 = vadd.xlane.f32.xlu0 %v714
  %v716 = vpop.xlane.xlu0 %715
  %v717 = vadd.f32 %v641, %v642
  %v718 = vadd.f32 %v717, %v643
  %v719 = vadd.f32 %v718, %v644
  %720 = vadd.xlane.f32.xlu0 %v719
  %v721 = vpop.xlane.xlu0 %720
  %v722 = vadd.f32 %v645, %v646
  %v723 = vadd.f32 %v722, %v647
  %v724 = vadd.f32 %v723, %v648
  %725 = vadd.xlane.f32.xlu0 %v724
  %v726 = vpop.xlane.xlu0 %725
  %v727 = vadd.f32 %v649, %v650
  %v728 = vadd.f32 %v727, %v651
  %v729 = vadd.f32 %v728, %v652
  %730 = vadd.xlane.f32.xlu0 %v729
  %v731 = vpop.xlane.xlu0 %730
  %v732 = vadd.f32 %v653, %v654
  %v733 = vadd.f32 %v732, %v655
  %v734 = vadd.f32 %v733, %v656
  %735 = vadd.xlane.f32.xlu0 %v734
  %v736 = vpop.xlane.xlu0 %735
  %v737 = vmul.f32 %v661, %v512
  %v738 = vmul.f32 %v666, %v512
  %v739 = vmul.f32 %v671, %v512
  %v740 = vmul.f32 %v676, %v512
  %v741 = vmul.f32 %v681, %v512
  %v742 = vmul.f32 %v686, %v512
  %v743 = vmul.f32 %v691, %v512
  %v744 = vmul.f32 %v696, %v512
  %v745 = vmul.f32 %v701, %v512
  %v746 = vmul.f32 %v706, %v512
  %v747 = vmul.f32 %v711, %v512
  %v748 = vmul.f32 %v716, %v512
  %v749 = vmul.f32 %v721, %v512
  %v750 = vmul.f32 %v726, %v512
  %v751 = vmul.f32 %v731, %v512
  %v752 = vmul.f32 %v736, %v512
  %v753 = vadd.f32 %v737, 1e-05
  %v754 = vadd.f32 %v738, 1e-05
  %v755 = vadd.f32 %v739, 1e-05
  %v756 = vadd.f32 %v740, 1e-05
  %v757 = vadd.f32 %v741, 1e-05
  %v758 = vadd.f32 %v742, 1e-05
  %v759 = vadd.f32 %v743, 1e-05
  %v760 = vadd.f32 %v744, 1e-05
  %v761 = vadd.f32 %v745, 1e-05
  %v762 = vadd.f32 %v746, 1e-05
  %v763 = vadd.f32 %v747, 1e-05
  %v764 = vadd.f32 %v748, 1e-05
  %v765 = vadd.f32 %v749, 1e-05
  %v766 = vadd.f32 %v750, 1e-05
  %v767 = vadd.f32 %v751, 1e-05
  %v768 = vadd.f32 %v752, 1e-05
  %v769 = vrsqrt.pop %v753
  %v770 = vmul.f32 %v769, %v753
  %v771 = vmul.f32 %v770, %v769
  %v772 = vmul.f32 0.5, %v771
  %v773 = vsub.f32 1.5, %v772
  %v774 = vmul.f32 %v769, %v773
  %vm775 = vweird.f32 %v753
  %vm776 = vweird.f32 %v769
  %vm777 = vmor %vm775, %vm776
  %v778 = vsel %vm777, %v769, %v774
  %v779 = vrsqrt.pop %v754
  %v780 = vmul.f32 %v779, %v754
  %v781 = vmul.f32 %v780, %v779
  %v782 = vmul.f32 0.5, %v781
  %v783 = vsub.f32 1.5, %v782
  %v784 = vmul.f32 %v779, %v783
  %vm785 = vweird.f32 %v754
  %vm786 = vweird.f32 %v779
  %vm787 = vmor %vm785, %vm786
  %v788 = vsel %vm787, %v779, %v784
  %v789 = vrsqrt.pop %v755
  %v790 = vmul.f32 %v789, %v755
  %v791 = vmul.f32 %v790, %v789
  %v792 = vmul.f32 0.5, %v791
  %v793 = vsub.f32 1.5, %v792
  %v794 = vmul.f32 %v789, %v793
  %vm795 = vweird.f32 %v755
  %vm796 = vweird.f32 %v789
  %vm797 = vmor %vm795, %vm796
  %v798 = vsel %vm797, %v789, %v794
  %v799 = vrsqrt.pop %v756
  %v800 = vmul.f32 %v799, %v756
  %v801 = vmul.f32 %v800, %v799
  %v802 = vmul.f32 0.5, %v801
  %v803 = vsub.f32 1.5, %v802
  %v804 = vmul.f32 %v799, %v803
  %vm805 = vweird.f32 %v756
  %vm806 = vweird.f32 %v799
  %vm807 = vmor %vm805, %vm806
  %v808 = vsel %vm807, %v799, %v804
  %v809 = vrsqrt.pop %v757
  %v810 = vmul.f32 %v809, %v757
  %v811 = vmul.f32 %v810, %v809
  %v812 = vmul.f32 0.5, %v811
  %v813 = vsub.f32 1.5, %v812
  %v814 = vmul.f32 %v809, %v813
  %vm815 = vweird.f32 %v757
  %vm816 = vweird.f32 %v809
  %vm817 = vmor %vm815, %vm816
  %v818 = vsel %vm817, %v809, %v814
  %v819 = vrsqrt.pop %v758
  %v820 = vmul.f32 %v819, %v758
  %v821 = vmul.f32 %v820, %v819
  %v822 = vmul.f32 0.5, %v821
  %v823 = vsub.f32 1.5, %v822
  %v824 = vmul.f32 %v819, %v823
  %vm825 = vweird.f32 %v758
  %vm826 = vweird.f32 %v819
  %vm827 = vmor %vm825, %vm826
  %v828 = vsel %vm827, %v819, %v824
  %v829 = vrsqrt.pop %v759
  %v830 = vmul.f32 %v829, %v759
  %v831 = vmul.f32 %v830, %v829
  %v832 = vmul.f32 0.5, %v831
  %v833 = vsub.f32 1.5, %v832
  %v834 = vmul.f32 %v829, %v833
  %vm835 = vweird.f32 %v759
  %vm836 = vweird.f32 %v829
  %vm837 = vmor %vm835, %vm836
  %v838 = vsel %vm837, %v829, %v834
  %v839 = vrsqrt.pop %v760
  %v840 = vmul.f32 %v839, %v760
  %v841 = vmul.f32 %v840, %v839
  %v842 = vmul.f32 0.5, %v841
  %v843 = vsub.f32 1.5, %v842
  %v844 = vmul.f32 %v839, %v843
  %vm845 = vweird.f32 %v760
  %vm846 = vweird.f32 %v839
  %vm847 = vmor %vm845, %vm846
  %v848 = vsel %vm847, %v839, %v844
  %v849 = vrsqrt.pop %v761
  %v850 = vmul.f32 %v849, %v761
  %v851 = vmul.f32 %v850, %v849
  %v852 = vmul.f32 0.5, %v851
  %v853 = vsub.f32 1.5, %v852
  %v854 = vmul.f32 %v849, %v853
  %vm855 = vweird.f32 %v761
  %vm856 = vweird.f32 %v849
  %vm857 = vmor %vm855, %vm856
  %v858 = vsel %vm857, %v849, %v854
  %v859 = vrsqrt.pop %v762
  %v860 = vmul.f32 %v859, %v762
  %v861 = vmul.f32 %v860, %v859
  %v862 = vmul.f32 0.5, %v861
  %v863 = vsub.f32 1.5, %v862
  %v864 = vmul.f32 %v859, %v863
  %vm865 = vweird.f32 %v762
  %vm866 = vweird.f32 %v859
  %vm867 = vmor %vm865, %vm866
  %v868 = vsel %vm867, %v859, %v864
  %v869 = vrsqrt.pop %v763
  %v870 = vmul.f32 %v869, %v763
  %v871 = vmul.f32 %v870, %v869
  %v872 = vmul.f32 0.5, %v871
  %v873 = vsub.f32 1.5, %v872
  %v874 = vmul.f32 %v869, %v873
  %vm875 = vweird.f32 %v763
  %vm876 = vweird.f32 %v869
  %vm877 = vmor %vm875, %vm876
  %v878 = vsel %vm877, %v869, %v874
  %v879 = vrsqrt.pop %v764
  %v880 = vmul.f32 %v879, %v764
  %v881 = vmul.f32 %v880, %v879
  %v882 = vmul.f32 0.5, %v881
  %v883 = vsub.f32 1.5, %v882
  %v884 = vmul.f32 %v879, %v883
  %vm885 = vweird.f32 %v764
  %vm886 = vweird.f32 %v879
  %vm887 = vmor %vm885, %vm886
  %v888 = vsel %vm887, %v879, %v884
  %v889 = vrsqrt.pop %v765
  %v890 = vmul.f32 %v889, %v765
  %v891 = vmul.f32 %v890, %v889
  %v892 = vmul.f32 0.5, %v891
  %v893 = vsub.f32 1.5, %v892
  %v894 = vmul.f32 %v889, %v893
  %vm895 = vweird.f32 %v765
  %vm896 = vweird.f32 %v889
  %vm897 = vmor %vm895, %vm896
  %v898 = vsel %vm897, %v889, %v894
  %v899 = vrsqrt.pop %v766
  %v900 = vmul.f32 %v899, %v766
  %v901 = vmul.f32 %v900, %v899
  %v902 = vmul.f32 0.5, %v901
  %v903 = vsub.f32 1.5, %v902
  %v904 = vmul.f32 %v899, %v903
  %vm905 = vweird.f32 %v766
  %vm906 = vweird.f32 %v899
  %vm907 = vmor %vm905, %vm906
  %v908 = vsel %vm907, %v899, %v904
  %v909 = vrsqrt.pop %v767
  %v910 = vmul.f32 %v909, %v767
  %v911 = vmul.f32 %v910, %v909
  %v912 = vmul.f32 0.5, %v911
  %v913 = vsub.f32 1.5, %v912
  %v914 = vmul.f32 %v909, %v913
  %vm915 = vweird.f32 %v767
  %vm916 = vweird.f32 %v909
  %vm917 = vmor %vm915, %vm916
  %v918 = vsel %vm917, %v909, %v914
  %v919 = vrsqrt.pop %v768
  %v920 = vmul.f32 %v919, %v768
  %v921 = vmul.f32 %v920, %v919
  %v922 = vmul.f32 0.5, %v921
  %v923 = vsub.f32 1.5, %v922
  %v924 = vmul.f32 %v919, %v923
  %vm925 = vweird.f32 %v768
  %vm926 = vweird.f32 %v919
  %vm927 = vmor %vm925, %vm926
  %v928 = vsel %vm927, %v919, %v924
  %v929 = vmul.f32 %v529, %v778
  %v930 = vmul.f32 %v530, %v778
  %v931 = vmul.f32 %v531, %v778
  %v932 = vmul.f32 %v532, %v778
  %v933 = vmul.f32 %v533, %v788
  %v934 = vmul.f32 %v534, %v788
  %v935 = vmul.f32 %v535, %v788
  %v936 = vmul.f32 %v536, %v788
  %v937 = vmul.f32 %v537, %v798
  %v938 = vmul.f32 %v538, %v798
  %v939 = vmul.f32 %v539, %v798
  %v940 = vmul.f32 %v540, %v798
  %v941 = vmul.f32 %v541, %v808
  %v942 = vmul.f32 %v542, %v808
  %v943 = vmul.f32 %v543, %v808
  %v944 = vmul.f32 %v544, %v808
  %v945 = vmul.f32 %v545, %v818
  %v946 = vmul.f32 %v546, %v818
  %v947 = vmul.f32 %v547, %v818
  %v948 = vmul.f32 %v548, %v818
  %v949 = vmul.f32 %v549, %v828
  %v950 = vmul.f32 %v550, %v828
  %v951 = vmul.f32 %v551, %v828
  %v952 = vmul.f32 %v552, %v828
  %v953 = vmul.f32 %v553, %v838
  %v954 = vmul.f32 %v554, %v838
  %v955 = vmul.f32 %v555, %v838
  %v956 = vmul.f32 %v556, %v838
  %v957 = vmul.f32 %v557, %v848
  %v958 = vmul.f32 %v558, %v848
  %v959 = vmul.f32 %v559, %v848
  %v960 = vmul.f32 %v560, %v848
  %v961 = vmul.f32 %v561, %v858
  %v962 = vmul.f32 %v562, %v858
  %v963 = vmul.f32 %v563, %v858
  %v964 = vmul.f32 %v564, %v858
  %v965 = vmul.f32 %v565, %v868
  %v966 = vmul.f32 %v566, %v868
  %v967 = vmul.f32 %v567, %v868
  %v968 = vmul.f32 %v568, %v868
  %v969 = vmul.f32 %v569, %v878
  %v970 = vmul.f32 %v570, %v878
  %v971 = vmul.f32 %v571, %v878
  %v972 = vmul.f32 %v572, %v878
  %v973 = vmul.f32 %v573, %v888
  %v974 = vmul.f32 %v574, %v888
  %v975 = vmul.f32 %v575, %v888
  %v976 = vmul.f32 %v576, %v888
  %v977 = vmul.f32 %v577, %v898
  %v978 = vmul.f32 %v578, %v898
  %v979 = vmul.f32 %v579, %v898
  %v980 = vmul.f32 %v580, %v898
  %v981 = vmul.f32 %v581, %v908
  %v982 = vmul.f32 %v582, %v908
  %v983 = vmul.f32 %v583, %v908
  %v984 = vmul.f32 %v584, %v908
  %v985 = vmul.f32 %v585, %v918
  %v986 = vmul.f32 %v586, %v918
  %v987 = vmul.f32 %v587, %v918
  %v988 = vmul.f32 %v588, %v918
  %v989 = vmul.f32 %v589, %v928
  %v990 = vmul.f32 %v590, %v928
  %v991 = vmul.f32 %v591, %v928
  %v992 = vmul.f32 %v592, %v928
  %v994 = vperm.slane %v424, 0
  %v995 = vperm.slane %v424, 1
  %v996 = vperm.slane %v424, 2
  %v997 = vperm.slane %v424, 3
  %v1002 = vmul.f32 %v929, %v994
  %v1003 = vmul.f32 %v930, %v995
  %v1004 = vmul.f32 %v931, %v996
  %v1005 = vmul.f32 %v932, %v997
  %v1006 = vmul.f32 %v933, %v994
  %v1007 = vmul.f32 %v934, %v995
  %v1008 = vmul.f32 %v935, %v996
  %v1009 = vmul.f32 %v936, %v997
  %v1010 = vmul.f32 %v937, %v994
  %v1011 = vmul.f32 %v938, %v995
  %v1012 = vmul.f32 %v939, %v996
  %v1013 = vmul.f32 %v940, %v997
  %v1014 = vmul.f32 %v941, %v994
  %v1015 = vmul.f32 %v942, %v995
  %v1016 = vmul.f32 %v943, %v996
  %v1017 = vmul.f32 %v944, %v997
  %v1018 = vmul.f32 %v945, %v994
  %v1019 = vmul.f32 %v946, %v995
  %v1020 = vmul.f32 %v947, %v996
  %v1021 = vmul.f32 %v948, %v997
  %v1022 = vmul.f32 %v949, %v994
  %v1023 = vmul.f32 %v950, %v995
  %v1024 = vmul.f32 %v951, %v996
  %v1025 = vmul.f32 %v952, %v997
  %v1026 = vmul.f32 %v953, %v994
  %v1027 = vmul.f32 %v954, %v995
  %v1028 = vmul.f32 %v955, %v996
  %v1029 = vmul.f32 %v956, %v997
  %v1030 = vmul.f32 %v957, %v994
  %v1031 = vmul.f32 %v958, %v995
  %v1032 = vmul.f32 %v959, %v996
  %v1033 = vmul.f32 %v960, %v997
  %v1034 = vmul.f32 %v961, %v994
  %v1035 = vmul.f32 %v962, %v995
  %v1036 = vmul.f32 %v963, %v996
  %v1037 = vmul.f32 %v964, %v997
  %v1038 = vmul.f32 %v965, %v994
  %v1039 = vmul.f32 %v966, %v995
  %v1040 = vmul.f32 %v967, %v996
  %v1041 = vmul.f32 %v968, %v997
  %v1042 = vmul.f32 %v969, %v994
  %v1043 = vmul.f32 %v970, %v995
  %v1044 = vmul.f32 %v971, %v996
  %v1045 = vmul.f32 %v972, %v997
  %v1046 = vmul.f32 %v973, %v994
  %v1047 = vmul.f32 %v974, %v995
  %v1048 = vmul.f32 %v975, %v996
  %v1049 = vmul.f32 %v976, %v997
  %v1050 = vmul.f32 %v977, %v994
  %v1051 = vmul.f32 %v978, %v995
  %v1052 = vmul.f32 %v979, %v996
  %v1053 = vmul.f32 %v980, %v997
  %v1054 = vmul.f32 %v981, %v994
  %v1055 = vmul.f32 %v982, %v995
  %v1056 = vmul.f32 %v983, %v996
  %v1057 = vmul.f32 %v984, %v997
  %v1058 = vmul.f32 %v985, %v994
  %v1059 = vmul.f32 %v986, %v995
  %v1060 = vmul.f32 %v987, %v996
  %v1061 = vmul.f32 %v988, %v997
  %v1062 = vmul.f32 %v989, %v994
  %v1063 = vmul.f32 %v990, %v995
  %v1064 = vmul.f32 %v991, %v996
  %v1065 = vmul.f32 %v992, %v997
  %v1067 = vperm.slane %v425, 0
  %v1068 = vperm.slane %v425, 1
  %v1069 = vperm.slane %v425, 2
  %v1070 = vperm.slane %v425, 3
  %v1075 = vadd.f32 %v1002, %v1067
  %v1076 = vadd.f32 %v1003, %v1068
  %v1077 = vadd.f32 %v1004, %v1069
  %v1078 = vadd.f32 %v1005, %v1070
  %v1079 = vadd.f32 %v1006, %v1067
  %v1080 = vadd.f32 %v1007, %v1068
  %v1081 = vadd.f32 %v1008, %v1069
  %v1082 = vadd.f32 %v1009, %v1070
  %v1083 = vadd.f32 %v1010, %v1067
  %v1084 = vadd.f32 %v1011, %v1068
  %v1085 = vadd.f32 %v1012, %v1069
  %v1086 = vadd.f32 %v1013, %v1070
  %v1087 = vadd.f32 %v1014, %v1067
  %v1088 = vadd.f32 %v1015, %v1068
  %v1089 = vadd.f32 %v1016, %v1069
  %v1090 = vadd.f32 %v1017, %v1070
  %v1091 = vadd.f32 %v1018, %v1067
  %v1092 = vadd.f32 %v1019, %v1068
  %v1093 = vadd.f32 %v1020, %v1069
  %v1094 = vadd.f32 %v1021, %v1070
  %v1095 = vadd.f32 %v1022, %v1067
  %v1096 = vadd.f32 %v1023, %v1068
  %v1097 = vadd.f32 %v1024, %v1069
  %v1098 = vadd.f32 %v1025, %v1070
  %v1099 = vadd.f32 %v1026, %v1067
  %v1100 = vadd.f32 %v1027, %v1068
  %v1101 = vadd.f32 %v1028, %v1069
  %v1102 = vadd.f32 %v1029, %v1070
  %v1103 = vadd.f32 %v1030, %v1067
  %v1104 = vadd.f32 %v1031, %v1068
  %v1105 = vadd.f32 %v1032, %v1069
  %v1106 = vadd.f32 %v1033, %v1070
  %v1107 = vadd.f32 %v1034, %v1067
  %v1108 = vadd.f32 %v1035, %v1068
  %v1109 = vadd.f32 %v1036, %v1069
  %v1110 = vadd.f32 %v1037, %v1070
  %v1111 = vadd.f32 %v1038, %v1067
  %v1112 = vadd.f32 %v1039, %v1068
  %v1113 = vadd.f32 %v1040, %v1069
  %v1114 = vadd.f32 %v1041, %v1070
  %v1115 = vadd.f32 %v1042, %v1067
  %v1116 = vadd.f32 %v1043, %v1068
  %v1117 = vadd.f32 %v1044, %v1069
  %v1118 = vadd.f32 %v1045, %v1070
  %v1119 = vadd.f32 %v1046, %v1067
  %v1120 = vadd.f32 %v1047, %v1068
  %v1121 = vadd.f32 %v1048, %v1069
  %v1122 = vadd.f32 %v1049, %v1070
  %v1123 = vadd.f32 %v1050, %v1067
  %v1124 = vadd.f32 %v1051, %v1068
  %v1125 = vadd.f32 %v1052, %v1069
  %v1126 = vadd.f32 %v1053, %v1070
  %v1127 = vadd.f32 %v1054, %v1067
  %v1128 = vadd.f32 %v1055, %v1068
  %v1129 = vadd.f32 %v1056, %v1069
  %v1130 = vadd.f32 %v1057, %v1070
  %v1131 = vadd.f32 %v1058, %v1067
  %v1132 = vadd.f32 %v1059, %v1068
  %v1133 = vadd.f32 %v1060, %v1069
  %v1134 = vadd.f32 %v1061, %v1070
  %v1135 = vadd.f32 %v1062, %v1067
  %v1136 = vadd.f32 %v1063, %v1068
  %v1137 = vadd.f32 %v1064, %v1069
  %v1138 = vadd.f32 %v1065, %v1070
  %vm1139 = vcmp.gt.f32.partialorder %v1075, 0.0
  %vm1140 = vcmp.gt.f32.partialorder %v1076, 0.0
  %vm1141 = vcmp.gt.f32.partialorder %v1077, 0.0
  %vm1142 = vcmp.gt.f32.partialorder %v1078, 0.0
  %vm1143 = vcmp.gt.f32.partialorder %v1079, 0.0
  %vm1144 = vcmp.gt.f32.partialorder %v1080, 0.0
  %vm1145 = vcmp.gt.f32.partialorder %v1081, 0.0
  %vm1146 = vcmp.gt.f32.partialorder %v1082, 0.0
  %vm1147 = vcmp.gt.f32.partialorder %v1083, 0.0
  %vm1148 = vcmp.gt.f32.partialorder %v1084, 0.0
  %vm1149 = vcmp.gt.f32.partialorder %v1085, 0.0
  %vm1150 = vcmp.gt.f32.partialorder %v1086, 0.0
  %vm1151 = vcmp.gt.f32.partialorder %v1087, 0.0
  %vm1152 = vcmp.gt.f32.partialorder %v1088, 0.0
  %vm1153 = vcmp.gt.f32.partialorder %v1089, 0.0
  %vm1154 = vcmp.gt.f32.partialorder %v1090, 0.0
  %vm1155 = vcmp.gt.f32.partialorder %v1091, 0.0
  %vm1156 = vcmp.gt.f32.partialorder %v1092, 0.0
  %vm1157 = vcmp.gt.f32.partialorder %v1093, 0.0
  %vm1158 = vcmp.gt.f32.partialorder %v1094, 0.0
  %vm1159 = vcmp.gt.f32.partialorder %v1095, 0.0
  %vm1160 = vcmp.gt.f32.partialorder %v1096, 0.0
  %vm1161 = vcmp.gt.f32.partialorder %v1097, 0.0
  %vm1162 = vcmp.gt.f32.partialorder %v1098, 0.0
  %vm1163 = vcmp.gt.f32.partialorder %v1099, 0.0
  %vm1164 = vcmp.gt.f32.partialorder %v1100, 0.0
  %vm1165 = vcmp.gt.f32.partialorder %v1101, 0.0
  %vm1166 = vcmp.gt.f32.partialorder %v1102, 0.0
  %vm1167 = vcmp.gt.f32.partialorder %v1103, 0.0
  %vm1168 = vcmp.gt.f32.partialorder %v1104, 0.0
  %vm1169 = vcmp.gt.f32.partialorder %v1105, 0.0
  %vm1170 = vcmp.gt.f32.partialorder %v1106, 0.0
  %vm1171 = vcmp.gt.f32.partialorder %v1107, 0.0
  %vm1172 = vcmp.gt.f32.partialorder %v1108, 0.0
  %vm1173 = vcmp.gt.f32.partialorder %v1109, 0.0
  %vm1174 = vcmp.gt.f32.partialorder %v1110, 0.0
  %vm1175 = vcmp.gt.f32.partialorder %v1111, 0.0
  %vm1176 = vcmp.gt.f32.partialorder %v1112, 0.0
  %vm1177 = vcmp.gt.f32.partialorder %v1113, 0.0
  %vm1178 = vcmp.gt.f32.partialorder %v1114, 0.0
  %vm1179 = vcmp.gt.f32.partialorder %v1115, 0.0
  %vm1180 = vcmp.gt.f32.partialorder %v1116, 0.0
  %vm1181 = vcmp.gt.f32.partialorder %v1117, 0.0
  %vm1182 = vcmp.gt.f32.partialorder %v1118, 0.0
  %vm1183 = vcmp.gt.f32.partialorder %v1119, 0.0
  %vm1184 = vcmp.gt.f32.partialorder %v1120, 0.0
  %vm1185 = vcmp.gt.f32.partialorder %v1121, 0.0
  %vm1186 = vcmp.gt.f32.partialorder %v1122, 0.0
  %vm1187 = vcmp.gt.f32.partialorder %v1123, 0.0
  %vm1188 = vcmp.gt.f32.partialorder %v1124, 0.0
  %vm1189 = vcmp.gt.f32.partialorder %v1125, 0.0
  %vm1190 = vcmp.gt.f32.partialorder %v1126, 0.0
  %vm1191 = vcmp.gt.f32.partialorder %v1127, 0.0
  %vm1192 = vcmp.gt.f32.partialorder %v1128, 0.0
  %vm1193 = vcmp.gt.f32.partialorder %v1129, 0.0
  %vm1194 = vcmp.gt.f32.partialorder %v1130, 0.0
  %vm1195 = vcmp.gt.f32.partialorder %v1131, 0.0
  %vm1196 = vcmp.gt.f32.partialorder %v1132, 0.0
  %vm1197 = vcmp.gt.f32.partialorder %v1133, 0.0
  %vm1198 = vcmp.gt.f32.partialorder %v1134, 0.0
  %vm1199 = vcmp.gt.f32.partialorder %v1135, 0.0
  %vm1200 = vcmp.gt.f32.partialorder %v1136, 0.0
  %vm1201 = vcmp.gt.f32.partialorder %v1137, 0.0
  %vm1202 = vcmp.gt.f32.partialorder %v1138, 0.0
  %v1203 = vmul.f32 %v1075, 0.1
  %v1204 = vmul.f32 %v1076, 0.1
  %v1205 = vmul.f32 %v1077, 0.1
  %v1206 = vmul.f32 %v1078, 0.1
  %v1207 = vmul.f32 %v1079, 0.1
  %v1208 = vmul.f32 %v1080, 0.1
  %v1209 = vmul.f32 %v1081, 0.1
  %v1210 = vmul.f32 %v1082, 0.1
  %v1211 = vmul.f32 %v1083, 0.1
  %v1212 = vmul.f32 %v1084, 0.1
  %v1213 = vmul.f32 %v1085, 0.1
  %v1214 = vmul.f32 %v1086, 0.1
  %v1215 = vmul.f32 %v1087, 0.1
  %v1216 = vmul.f32 %v1088, 0.1
  %v1217 = vmul.f32 %v1089, 0.1
  %v1218 = vmul.f32 %v1090, 0.1
  %v1219 = vmul.f32 %v1091, 0.1
  %v1220 = vmul.f32 %v1092, 0.1
  %v1221 = vmul.f32 %v1093, 0.1
  %v1222 = vmul.f32 %v1094, 0.1
  %v1223 = vmul.f32 %v1095, 0.1
  %v1224 = vmul.f32 %v1096, 0.1
  %v1225 = vmul.f32 %v1097, 0.1
  %v1226 = vmul.f32 %v1098, 0.1
  %v1227 = vmul.f32 %v1099, 0.1
  %v1228 = vmul.f32 %v1100, 0.1
  %v1229 = vmul.f32 %v1101, 0.1
  %v1230 = vmul.f32 %v1102, 0.1
  %v1231 = vmul.f32 %v1103, 0.1
  %v1232 = vmul.f32 %v1104, 0.1
  %v1233 = vmul.f32 %v1105, 0.1
  %v1234 = vmul.f32 %v1106, 0.1
  %v1235 = vmul.f32 %v1107, 0.1
  %v1236 = vmul.f32 %v1108, 0.1
  %v1237 = vmul.f32 %v1109, 0.1
  %v1238 = vmul.f32 %v1110, 0.1
  %v1239 = vmul.f32 %v1111, 0.1
  %v1240 = vmul.f32 %v1112, 0.1
  %v1241 = vmul.f32 %v1113, 0.1
  %v1242 = vmul.f32 %v1114, 0.1
  %v1243 = vmul.f32 %v1115, 0.1
  %v1244 = vmul.f32 %v1116, 0.1
  %v1245 = vmul.f32 %v1117, 0.1
  %v1246 = vmul.f32 %v1118, 0.1
  %v1247 = vmul.f32 %v1119, 0.1
  %v1248 = vmul.f32 %v1120, 0.1
  %v1249 = vmul.f32 %v1121, 0.1
  %v1250 = vmul.f32 %v1122, 0.1
  %v1251 = vmul.f32 %v1123, 0.1
  %v1252 = vmul.f32 %v1124, 0.1
  %v1253 = vmul.f32 %v1125, 0.1
  %v1254 = vmul.f32 %v1126, 0.1
  %v1255 = vmul.f32 %v1127, 0.1
  %v1256 = vmul.f32 %v1128, 0.1
  %v1257 = vmul.f32 %v1129, 0.1
  %v1258 = vmul.f32 %v1130, 0.1
  %v1259 = vmul.f32 %v1131, 0.1
  %v1260 = vmul.f32 %v1132, 0.1
  %v1261 = vmul.f32 %v1133, 0.1
  %v1262 = vmul.f32 %v1134, 0.1
  %v1263 = vmul.f32 %v1135, 0.1
  %v1264 = vmul.f32 %v1136, 0.1
  %v1265 = vmul.f32 %v1137, 0.1
  %v1266 = vmul.f32 %v1138, 0.1
  %v1267 = vsel %vm1139, %v1075, %v1203
  %v1268 = vsel %vm1140, %v1076, %v1204
  %v1269 = vsel %vm1141, %v1077, %v1205
  %v1270 = vsel %vm1142, %v1078, %v1206
  %v1271 = vsel %vm1143, %v1079, %v1207
  %v1272 = vsel %vm1144, %v1080, %v1208
  %v1273 = vsel %vm1145, %v1081, %v1209
  %v1274 = vsel %vm1146, %v1082, %v1210
  %v1275 = vsel %vm1147, %v1083, %v1211
  %v1276 = vsel %vm1148, %v1084, %v1212
  %v1277 = vsel %vm1149, %v1085, %v1213
  %v1278 = vsel %vm1150, %v1086, %v1214
  %v1279 = vsel %vm1151, %v1087, %v1215
  %v1280 = vsel %vm1152, %v1088, %v1216
  %v1281 = vsel %vm1153, %v1089, %v1217
  %v1282 = vsel %vm1154, %v1090, %v1218
  %v1283 = vsel %vm1155, %v1091, %v1219
  %v1284 = vsel %vm1156, %v1092, %v1220
  %v1285 = vsel %vm1157, %v1093, %v1221
  %v1286 = vsel %vm1158, %v1094, %v1222
  %v1287 = vsel %vm1159, %v1095, %v1223
  %v1288 = vsel %vm1160, %v1096, %v1224
  %v1289 = vsel %vm1161, %v1097, %v1225
  %v1290 = vsel %vm1162, %v1098, %v1226
  %v1291 = vsel %vm1163, %v1099, %v1227
  %v1292 = vsel %vm1164, %v1100, %v1228
  %v1293 = vsel %vm1165, %v1101, %v1229
  %v1294 = vsel %vm1166, %v1102, %v1230
  %v1295 = vsel %vm1167, %v1103, %v1231
  %v1296 = vsel %vm1168, %v1104, %v1232
  %v1297 = vsel %vm1169, %v1105, %v1233
  %v1298 = vsel %vm1170, %v1106, %v1234
  %v1299 = vsel %vm1171, %v1107, %v1235
  %v1300 = vsel %vm1172, %v1108, %v1236
  %v1301 = vsel %vm1173, %v1109, %v1237
  %v1302 = vsel %vm1174, %v1110, %v1238
  %v1303 = vsel %vm1175, %v1111, %v1239
  %v1304 = vsel %vm1176, %v1112, %v1240
  %v1305 = vsel %vm1177, %v1113, %v1241
  %v1306 = vsel %vm1178, %v1114, %v1242
  %v1307 = vsel %vm1179, %v1115, %v1243
  %v1308 = vsel %vm1180, %v1116, %v1244
  %v1309 = vsel %vm1181, %v1117, %v1245
  %v1310 = vsel %vm1182, %v1118, %v1246
  %v1311 = vsel %vm1183, %v1119, %v1247
  %v1312 = vsel %vm1184, %v1120, %v1248
  %v1313 = vsel %vm1185, %v1121, %v1249
  %v1314 = vsel %vm1186, %v1122, %v1250
  %v1315 = vsel %vm1187, %v1123, %v1251
  %v1316 = vsel %vm1188, %v1124, %v1252
  %v1317 = vsel %vm1189, %v1125, %v1253
  %v1318 = vsel %vm1190, %v1126, %v1254
  %v1319 = vsel %vm1191, %v1127, %v1255
  %v1320 = vsel %vm1192, %v1128, %v1256
  %v1321 = vsel %vm1193, %v1129, %v1257
  %v1322 = vsel %vm1194, %v1130, %v1258
  %v1323 = vsel %vm1195, %v1131, %v1259
  %v1324 = vsel %vm1196, %v1132, %v1260
  %v1325 = vsel %vm1197, %v1133, %v1261
  %v1326 = vsel %vm1198, %v1134, %v1262
  %v1327 = vsel %vm1199, %v1135, %v1263
  %v1328 = vsel %vm1200, %v1136, %v1264
  %v1329 = vsel %vm1201, %v1137, %v1265
  %v1330 = vsel %vm1202, %v1138, %v1266
  %v1331 = vld [vmem:[%s6] sm:$0xff]
  %v1332 = vld [vmem:[%s6 + $0x8] sm:$0xff]
  %v1333 = vld [vmem:[%s6 + $0x10] sm:$0xff]
  %v1334 = vld [vmem:[%s6 + $0x18] sm:$0xff]
  %v1335 = vld [vmem:[%s6 + $0x20] sm:$0xff]
  %v1336 = vld [vmem:[%s6 + $0x28] sm:$0xff]
  %v1337 = vld [vmem:[%s6 + $0x30] sm:$0xff]
  %v1338 = vld [vmem:[%s6 + $0x38] sm:$0xff]
  %v1339 = vld [vmem:[%s6 + $0x40] sm:$0xff]
  %v1340 = vld [vmem:[%s6 + $0x48] sm:$0xff]
  %v1341 = vld [vmem:[%s6 + $0x50] sm:$0xff]
  %v1342 = vld [vmem:[%s6 + $0x58] sm:$0xff]
  %v1343 = vld [vmem:[%s6 + $0x60] sm:$0xff]
  %v1344 = vld [vmem:[%s6 + $0x68] sm:$0xff]
  %v1345 = vld [vmem:[%s6 + $0x70] sm:$0xff]
  %v1346 = vld [vmem:[%s6 + $0x78] sm:$0xff]
  %v1347 = vld [vmem:[%s6 + $0x80] sm:$0xff]
  %v1348 = vld [vmem:[%s6 + $0x88] sm:$0xff]
  %v1349 = vld [vmem:[%s6 + $0x90] sm:$0xff]
  %v1350 = vld [vmem:[%s6 + $0x98] sm:$0xff]
  %v1351 = vld [vmem:[%s6 + $0xa0] sm:$0xff]
  %v1352 = vld [vmem:[%s6 + $0xa8] sm:$0xff]
  %v1353 = vld [vmem:[%s6 + $0xb0] sm:$0xff]
  %v1354 = vld [vmem:[%s6 + $0xb8] sm:$0xff]
  %v1355 = vld [vmem:[%s6 + $0xc0] sm:$0xff]
  %v1356 = vld [vmem:[%s6 + $0xc8] sm:$0xff]
  %v1357 = vld [vmem:[%s6 + $0xd0] sm:$0xff]
  %v1358 = vld [vmem:[%s6 + $0xd8] sm:$0xff]
  %v1359 = vld [vmem:[%s6 + $0xe0] sm:$0xff]
  %v1360 = vld [vmem:[%s6 + $0xe8] sm:$0xff]
  %v1361 = vld [vmem:[%s6 + $0xf0] sm:$0xff]
  %v1362 = vld [vmem:[%s6 + $0xf8] sm:$0xff]
  %v1363 = vld [vmem:[%s6 + $0x100] sm:$0xff]
  %v1364 = vld [vmem:[%s6 + $0x108] sm:$0xff]
  %v1365 = vld [vmem:[%s6 + $0x110] sm:$0xff]
  %v1366 = vld [vmem:[%s6 + $0x118] sm:$0xff]
  %v1367 = vld [vmem:[%s6 + $0x120] sm:$0xff]
  %v1368 = vld [vmem:[%s6 + $0x128] sm:$0xff]
  %v1369 = vld [vmem:[%s6 + $0x130] sm:$0xff]
  %v1370 = vld [vmem:[%s6 + $0x138] sm:$0xff]
  %v1371 = vld [vmem:[%s6 + $0x140] sm:$0xff]
  %v1372 = vld [vmem:[%s6 + $0x148] sm:$0xff]
  %v1373 = vld [vmem:[%s6 + $0x150] sm:$0xff]
  %v1374 = vld [vmem:[%s6 + $0x158] sm:$0xff]
  %v1375 = vld [vmem:[%s6 + $0x160] sm:$0xff]
  %v1376 = vld [vmem:[%s6 + $0x168] sm:$0xff]
  %v1377 = vld [vmem:[%s6 + $0x170] sm:$0xff]
  %v1378 = vld [vmem:[%s6 + $0x178] sm:$0xff]
  %v1379 = vld [vmem:[%s6 + $0x180] sm:$0xff]
  %v1380 = vld [vmem:[%s6 + $0x188] sm:$0xff]
  %v1381 = vld [vmem:[%s6 + $0x190] sm:$0xff]
  %v1382 = vld [vmem:[%s6 + $0x198] sm:$0xff]
  %v1383 = vld [vmem:[%s6 + $0x1a0] sm:$0xff]
  %v1384 = vld [vmem:[%s6 + $0x1a8] sm:$0xff]
  %v1385 = vld [vmem:[%s6 + $0x1b0] sm:$0xff]
  %v1386 = vld [vmem:[%s6 + $0x1b8] sm:$0xff]
  %v1387 = vld [vmem:[%s6 + $0x1c0] sm:$0xff]
  %v1388 = vld [vmem:[%s6 + $0x1c8] sm:$0xff]
  %v1389 = vld [vmem:[%s6 + $0x1d0] sm:$0xff]
  %v1390 = vld [vmem:[%s6 + $0x1d8] sm:$0xff]
  %v1391 = vld [vmem:[%s6 + $0x1e0] sm:$0xff]
  %v1392 = vld [vmem:[%s6 + $0x1e8] sm:$0xff]
  %v1393 = vld [vmem:[%s6 + $0x1f0] sm:$0xff]
  %v1394 = vld [vmem:[%s6 + $0x1f8] sm:$0xff]
  %v1395 = vld [vmem:[%s6 + $0x200] sm:$0xff]
  %v1396 = vld [vmem:[%s6 + $0x208] sm:$0xff]
  %v1397 = vld [vmem:[%s6 + $0x210] sm:$0xff]
  %v1398 = vld [vmem:[%s6 + $0x218] sm:$0xff]
  %v1399 = vld [vmem:[%s6 + $0x220] sm:$0xff]
  %v1400 = vld [vmem:[%s6 + $0x228] sm:$0xff]
  %v1401 = vld [vmem:[%s6 + $0x230] sm:$0xff]
  %v1402 = vld [vmem:[%s6 + $0x238] sm:$0xff]
  %v1403 = vld [vmem:[%s6 + $0x240] sm:$0xff]
  %v1404 = vld [vmem:[%s6 + $0x248] sm:$0xff]
  %v1405 = vld [vmem:[%s6 + $0x250] sm:$0xff]
  %v1406 = vld [vmem:[%s6 + $0x258] sm:$0xff]
  %v1407 = vld [vmem:[%s6 + $0x260] sm:$0xff]
  %v1408 = vld [vmem:[%s6 + $0x268] sm:$0xff]
  %v1409 = vld [vmem:[%s6 + $0x270] sm:$0xff]
  %v1410 = vld [vmem:[%s6 + $0x278] sm:$0xff]
  %v1411 = vld [vmem:[%s6 + $0x280] sm:$0xff]
  %v1412 = vld [vmem:[%s6 + $0x288] sm:$0xff]
  %v1413 = vld [vmem:[%s6 + $0x290] sm:$0xff]
  %v1414 = vld [vmem:[%s6 + $0x298] sm:$0xff]
  %v1415 = vld [vmem:[%s6 + $0x2a0] sm:$0xff]
  %v1416 = vld [vmem:[%s6 + $0x2a8] sm:$0xff]
  %v1417 = vld [vmem:[%s6 + $0x2b0] sm:$0xff]
  %v1418 = vld [vmem:[%s6 + $0x2b8] sm:$0xff]
  %v1419 = vld [vmem:[%s6 + $0x2c0] sm:$0xff]
  %v1420 = vld [vmem:[%s6 + $0x2c8] sm:$0xff]
  %v1421 = vld [vmem:[%s6 + $0x2d0] sm:$0xff]
  %v1422 = vld [vmem:[%s6 + $0x2d8] sm:$0xff]
  %v1423 = vld [vmem:[%s6 + $0x2e0] sm:$0xff]
  %v1424 = vld [vmem:[%s6 + $0x2e8] sm:$0xff]
  %v1425 = vld [vmem:[%s6 + $0x2f0] sm:$0xff]
  %v1426 = vld [vmem:[%s6 + $0x2f8] sm:$0xff]
  %v1427 = vld [vmem:[%s6 + $0x300] sm:$0xff]
  %v1428 = vld [vmem:[%s6 + $0x308] sm:$0xff]
  %v1429 = vld [vmem:[%s6 + $0x310] sm:$0xff]
  %v1430 = vld [vmem:[%s6 + $0x318] sm:$0xff]
  %v1431 = vld [vmem:[%s6 + $0x320] sm:$0xff]
  %v1432 = vld [vmem:[%s6 + $0x328] sm:$0xff]
  %v1433 = vld [vmem:[%s6 + $0x330] sm:$0xff]
  %v1434 = vld [vmem:[%s6 + $0x338] sm:$0xff]
  %v1435 = vld [vmem:[%s6 + $0x340] sm:$0xff]
  %v1436 = vld [vmem:[%s6 + $0x348] sm:$0xff]
  %v1437 = vld [vmem:[%s6 + $0x350] sm:$0xff]
  %v1438 = vld [vmem:[%s6 + $0x358] sm:$0xff]
  %v1439 = vld [vmem:[%s6 + $0x360] sm:$0xff]
  %v1440 = vld [vmem:[%s6 + $0x368] sm:$0xff]
  %v1441 = vld [vmem:[%s6 + $0x370] sm:$0xff]
  %v1442 = vld [vmem:[%s6 + $0x378] sm:$0xff]
  %v1443 = vld [vmem:[%s6 + $0x380] sm:$0xff]
  %v1444 = vld [vmem:[%s6 + $0x388] sm:$0xff]
  %v1445 = vld [vmem:[%s6 + $0x390] sm:$0xff]
  %v1446 = vld [vmem:[%s6 + $0x398] sm:$0xff]
  %v1447 = vld [vmem:[%s6 + $0x3a0] sm:$0xff]
  %v1448 = vld [vmem:[%s6 + $0x3a8] sm:$0xff]
  %v1449 = vld [vmem:[%s6 + $0x3b0] sm:$0xff]
  %v1450 = vld [vmem:[%s6 + $0x3b8] sm:$0xff]
  %v1451 = vld [vmem:[%s6 + $0x3c0] sm:$0xff]
  %v1452 = vld [vmem:[%s6 + $0x3c8] sm:$0xff]
  %v1453 = vld [vmem:[%s6 + $0x3d0] sm:$0xff]
  %v1454 = vld [vmem:[%s6 + $0x3d8] sm:$0xff]
  %v1455 = vld [vmem:[%s6 + $0x3e0] sm:$0xff]
  %v1456 = vld [vmem:[%s6 + $0x3e8] sm:$0xff]
  %v1457 = vld [vmem:[%s6 + $0x3f0] sm:$0xff]
  %v1458 = vld [vmem:[%s6 + $0x3f8] sm:$0xff]
  %v1459 = vld [vmem:[%s7] sm:$0x3]
  %v1461 = vperm.slane %v1459, 0
  %v1462 = vperm.slane %v1459, 1
  %1465 = vmatpush.msra.mxu0 %v1361
  %1466 = vmatpush.msra.mxu0 %v1359
  %1467 = vmatpush.msra.mxu0 %v1357
  %1468 = vmatpush.msra.mxu0 %v1355
  %1469 = vmatpush.msra.mxu0 %v1353
  %1470 = vmatpush.msra.mxu0 %v1351
  %1471 = vmatpush.msra.mxu0 %v1349
  %1472 = vmatpush.msra.mxu0 %v1347
  %1473 = vmatpush.msra.mxu0 %v1345
  %1474 = vmatpush.msra.mxu0 %v1343
  %1475 = vmatpush.msra.mxu0 %v1341
  %1476 = vmatpush.msra.mxu0 %v1339
  %1477 = vmatpush.msra.mxu0 %v1337
  %1478 = vmatpush.msra.mxu0 %v1335
  %1479 = vmatpush.msra.mxu0 %v1333
  %1480 = vmatpush.msra.mxu0 %v1331
  %1481 = vmatmul.f32.gmra.mxu0 %v1267
  %v1482 = vpop.f32.mrf.mxu0
  %v1483 = vadd.f32 %v1461, %v1482
  %1484 = vmatmul.f32.gmra.mxu0 %v1271
  %v1485 = vpop.f32.mrf.mxu0
  %v1486 = vadd.f32 %v1461, %v1485
  %1487 = vmatmul.f32.gmra.mxu0 %v1275
  %v1488 = vpop.f32.mrf.mxu0
  %v1489 = vadd.f32 %v1461, %v1488
  %1490 = vmatmul.f32.gmra.mxu0 %v1279
  %v1491 = vpop.f32.mrf.mxu0
  %v1492 = vadd.f32 %v1461, %v1491
  %1493 = vmatmul.f32.gmra.mxu0 %v1283
  %v1494 = vpop.f32.mrf.mxu0
  %v1495 = vadd.f32 %v1461, %v1494
  %1496 = vmatmul.f32.gmra.mxu0 %v1287
  %v1497 = vpop.f32.mrf.mxu0
  %v1498 = vadd.f32 %v1461, %v1497
  %1499 = vmatmul.f32.gmra.mxu0 %v1291
  %v1500 = vpop.f32.mrf.mxu0
  %v1501 = vadd.f32 %v1461, %v1500
  %1502 = vmatmul.f32.gmra.mxu0 %v1295
  %v1503 = vpop.f32.mrf.mxu0
  %v1504 = vadd.f32 %v1461, %v1503
  %1505 = vmatmul.f32.gmra.mxu0 %v1299
  %v1506 = vpop.f32.mrf.mxu0
  %v1507 = vadd.f32 %v1461, %v1506
  %1508 = vmatmul.f32.gmra.mxu0 %v1303
  %v1509 = vpop.f32.mrf.mxu0
  %v1510 = vadd.f32 %v1461, %v1509
  %1511 = vmatmul.f32.gmra.mxu0 %v1307
  %v1512 = vpop.f32.mrf.mxu0
  %v1513 = vadd.f32 %v1461, %v1512
  %1514 = vmatmul.f32.gmra.mxu0 %v1311
  %v1515 = vpop.f32.mrf.mxu0
  %v1516 = vadd.f32 %v1461, %v1515
  %1517 = vmatmul.f32.gmra.mxu0 %v1315
  %v1518 = vpop.f32.mrf.mxu0
  %v1519 = vadd.f32 %v1461, %v1518
  %1520 = vmatmul.f32.gmra.mxu0 %v1319
  %v1521 = vpop.f32.mrf.mxu0
  %v1522 = vadd.f32 %v1461, %v1521
  %1523 = vmatmul.f32.gmra.mxu0 %v1323
  %v1524 = vpop.f32.mrf.mxu0
  %v1525 = vadd.f32 %v1461, %v1524
  %1526 = vmatmul.f32.gmra.mxu0 %v1327
  %v1527 = vpop.f32.mrf.mxu0
  %v1528 = vadd.f32 %v1461, %v1527
  %1529 = vdwg.mxu0
  %1530 = vmatpush.msra.mxu0 %v1393
  %1531 = vmatpush.msra.mxu0 %v1391
  %1532 = vmatpush.msra.mxu0 %v1389
  %1533 = vmatpush.msra.mxu0 %v1387
  %1534 = vmatpush.msra.mxu0 %v1385
  %1535 = vmatpush.msra.mxu0 %v1383
  %1536 = vmatpush.msra.mxu0 %v1381
  %1537 = vmatpush.msra.mxu0 %v1379
  %1538 = vmatpush.msra.mxu0 %v1377
  %1539 = vmatpush.msra.mxu0 %v1375
  %1540 = vmatpush.msra.mxu0 %v1373
  %1541 = vmatpush.msra.mxu0 %v1371
  %1542 = vmatpush.msra.mxu0 %v1369
  %1543 = vmatpush.msra.mxu0 %v1367
  %1544 = vmatpush.msra.mxu0 %v1365
  %1545 = vmatpush.msra.mxu0 %v1363
  %1546 = vmatmul.f32.gmra.mxu0 %v1268
  %v1547 = vpop.f32.mrf.mxu0
  %v1548 = vadd.f32 %v1483, %v1547
  %1549 = vmatmul.f32.gmra.mxu0 %v1272
  %v1550 = vpop.f32.mrf.mxu0
  %v1551 = vadd.f32 %v1486, %v1550
  %1552 = vmatmul.f32.gmra.mxu0 %v1276
  %v1553 = vpop.f32.mrf.mxu0
  %v1554 = vadd.f32 %v1489, %v1553
  %1555 = vmatmul.f32.gmra.mxu0 %v1280
  %v1556 = vpop.f32.mrf.mxu0
  %v1557 = vadd.f32 %v1492, %v1556
  %1558 = vmatmul.f32.gmra.mxu0 %v1284
  %v1559 = vpop.f32.mrf.mxu0
  %v1560 = vadd.f32 %v1495, %v1559
  %1561 = vmatmul.f32.gmra.mxu0 %v1288
  %v1562 = vpop.f32.mrf.mxu0
  %v1563 = vadd.f32 %v1498, %v1562
  %1564 = vmatmul.f32.gmra.mxu0 %v1292
  %v1565 = vpop.f32.mrf.mxu0
  %v1566 = vadd.f32 %v1501, %v1565
  %1567 = vmatmul.f32.gmra.mxu0 %v1296
  %v1568 = vpop.f32.mrf.mxu0
  %v1569 = vadd.f32 %v1504, %v1568
  %1570 = vmatmul.f32.gmra.mxu0 %v1300
  %v1571 = vpop.f32.mrf.mxu0
  %v1572 = vadd.f32 %v1507, %v1571
  %1573 = vmatmul.f32.gmra.mxu0 %v1304
  %v1574 = vpop.f32.mrf.mxu0
  %v1575 = vadd.f32 %v1510, %v1574
  %1576 = vmatmul.f32.gmra.mxu0 %v1308
  %v1577 = vpop.f32.mrf.mxu0
  %v1578 = vadd.f32 %v1513, %v1577
  %1579 = vmatmul.f32.gmra.mxu0 %v1312
  %v1580 = vpop.f32.mrf.mxu0
  %v1581 = vadd.f32 %v1516, %v1580
  %1582 = vmatmul.f32.gmra.mxu0 %v1316
  %v1583 = vpop.f32.mrf.mxu0
  %v1584 = vadd.f32 %v1519, %v1583
  %1585 = vmatmul.f32.gmra.mxu0 %v1320
  %v1586 = vpop.f32.mrf.mxu0
  %v1587 = vadd.f32 %v1522, %v1586
  %1588 = vmatmul.f32.gmra.mxu0 %v1324
  %v1589 = vpop.f32.mrf.mxu0
  %v1590 = vadd.f32 %v1525, %v1589
  %1591 = vmatmul.f32.gmra.mxu0 %v1328
  %v1592 = vpop.f32.mrf.mxu0
  %v1593 = vadd.f32 %v1528, %v1592
  %1594 = vdwg.mxu0
  %1595 = vmatpush.msra.mxu0 %v1425
  %1596 = vmatpush.msra.mxu0 %v1423
  %1597 = vmatpush.msra.mxu0 %v1421
  %1598 = vmatpush.msra.mxu0 %v1419
  %1599 = vmatpush.msra.mxu0 %v1417
  %1600 = vmatpush.msra.mxu0 %v1415
  %1601 = vmatpush.msra.mxu0 %v1413
  %1602 = vmatpush.msra.mxu0 %v1411
  %1603 = vmatpush.msra.mxu0 %v1409
  %1604 = vmatpush.msra.mxu0 %v1407
  %1605 = vmatpush.msra.mxu0 %v1405
  %1606 = vmatpush.msra.mxu0 %v1403
  %1607 = vmatpush.msra.mxu0 %v1401
  %1608 = vmatpush.msra.mxu0 %v1399
  %1609 = vmatpush.msra.mxu0 %v1397
  %1610 = vmatpush.msra.mxu0 %v1395
  %1611 = vmatmul.f32.gmra.mxu0 %v1269
  %v1612 = vpop.f32.mrf.mxu0
  %v1613 = vadd.f32 %v1548, %v1612
  %1614 = vmatmul.f32.gmra.mxu0 %v1273
  %v1615 = vpop.f32.mrf.mxu0
  %v1616 = vadd.f32 %v1551, %v1615
  %1617 = vmatmul.f32.gmra.mxu0 %v1277
  %v1618 = vpop.f32.mrf.mxu0
  %v1619 = vadd.f32 %v1554, %v1618
  %1620 = vmatmul.f32.gmra.mxu0 %v1281
  %v1621 = vpop.f32.mrf.mxu0
  %v1622 = vadd.f32 %v1557, %v1621
  %1623 = vmatmul.f32.gmra.mxu0 %v1285
  %v1624 = vpop.f32.mrf.mxu0
  %v1625 = vadd.f32 %v1560, %v1624
  %1626 = vmatmul.f32.gmra.mxu0 %v1289
  %v1627 = vpop.f32.mrf.mxu0
  %v1628 = vadd.f32 %v1563, %v1627
  %1629 = vmatmul.f32.gmra.mxu0 %v1293
  %v1630 = vpop.f32.mrf.mxu0
  %v1631 = vadd.f32 %v1566, %v1630
  %1632 = vmatmul.f32.gmra.mxu0 %v1297
  %v1633 = vpop.f32.mrf.mxu0
  %v1634 = vadd.f32 %v1569, %v1633
  %1635 = vmatmul.f32.gmra.mxu0 %v1301
  %v1636 = vpop.f32.mrf.mxu0
  %v1637 = vadd.f32 %v1572, %v1636
  %1638 = vmatmul.f32.gmra.mxu0 %v1305
  %v1639 = vpop.f32.mrf.mxu0
  %v1640 = vadd.f32 %v1575, %v1639
  %1641 = vmatmul.f32.gmra.mxu0 %v1309
  %v1642 = vpop.f32.mrf.mxu0
  %v1643 = vadd.f32 %v1578, %v1642
  %1644 = vmatmul.f32.gmra.mxu0 %v1313
  %v1645 = vpop.f32.mrf.mxu0
  %v1646 = vadd.f32 %v1581, %v1645
  %1647 = vmatmul.f32.gmra.mxu0 %v1317
  %v1648 = vpop.f32.mrf.mxu0
  %v1649 = vadd.f32 %v1584, %v1648
  %1650 = vmatmul.f32.gmra.mxu0 %v1321
  %v1651 = vpop.f32.mrf.mxu0
  %v1652 = vadd.f32 %v1587, %v1651
  %1653 = vmatmul.f32.gmra.mxu0 %v1325
  %v1654 = vpop.f32.mrf.mxu0
  %v1655 = vadd.f32 %v1590, %v1654
  %1656 = vmatmul.f32.gmra.mxu0 %v1329
  %v1657 = vpop.f32.mrf.mxu0
  %v1658 = vadd.f32 %v1593, %v1657
  %1659 = vdwg.mxu0
  %1660 = vmatpush.msra.mxu0 %v1457
  %1661 = vmatpush.msra.mxu0 %v1455
  %1662 = vmatpush.msra.mxu0 %v1453
  %1663 = vmatpush.msra.mxu0 %v1451
  %1664 = vmatpush.msra.mxu0 %v1449
  %1665 = vmatpush.msra.mxu0 %v1447
  %1666 = vmatpush.msra.mxu0 %v1445
  %1667 = vmatpush.msra.mxu0 %v1443
  %1668 = vmatpush.msra.mxu0 %v1441
  %1669 = vmatpush.msra.mxu0 %v1439
  %1670 = vmatpush.msra.mxu0 %v1437
  %1671 = vmatpush.msra.mxu0 %v1435
  %1672 = vmatpush.msra.mxu0 %v1433
  %1673 = vmatpush.msra.mxu0 %v1431
  %1674 = vmatpush.msra.mxu0 %v1429
  %1675 = vmatpush.msra.mxu0 %v1427
  %1676 = vmatmul.f32.gmra.mxu0 %v1270
  %v1677 = vpop.f32.mrf.mxu0
  %v1678 = vadd.f32 %v1613, %v1677
  %1679 = vmatmul.f32.gmra.mxu0 %v1274
  %v1680 = vpop.f32.mrf.mxu0
  %v1681 = vadd.f32 %v1616, %v1680
  %1682 = vmatmul.f32.gmra.mxu0 %v1278
  %v1683 = vpop.f32.mrf.mxu0
  %v1684 = vadd.f32 %v1619, %v1683
  %1685 = vmatmul.f32.gmra.mxu0 %v1282
  %v1686 = vpop.f32.mrf.mxu0
  %v1687 = vadd.f32 %v1622, %v1686
  %1688 = vmatmul.f32.gmra.mxu0 %v1286
  %v1689 = vpop.f32.mrf.mxu0
  %v1690 = vadd.f32 %v1625, %v1689
  %1691 = vmatmul.f32.gmra.mxu0 %v1290
  %v1692 = vpop.f32.mrf.mxu0
  %v1693 = vadd.f32 %v1628, %v1692
  %1694 = vmatmul.f32.gmra.mxu0 %v1294
  %v1695 = vpop.f32.mrf.mxu0
  %v1696 = vadd.f32 %v1631, %v1695
  %1697 = vmatmul.f32.gmra.mxu0 %v1298
  %v1698 = vpop.f32.mrf.mxu0
  %v1699 = vadd.f32 %v1634, %v1698
  %1700 = vmatmul.f32.gmra.mxu0 %v1302
  %v1701 = vpop.f32.mrf.mxu0
  %v1702 = vadd.f32 %v1637, %v1701
  %1703 = vmatmul.f32.gmra.mxu0 %v1306
  %v1704 = vpop.f32.mrf.mxu0
  %v1705 = vadd.f32 %v1640, %v1704
  %1706 = vmatmul.f32.gmra.mxu0 %v1310
  %v1707 = vpop.f32.mrf.mxu0
  %v1708 = vadd.f32 %v1643, %v1707
  %1709 = vmatmul.f32.gmra.mxu0 %v1314
  %v1710 = vpop.f32.mrf.mxu0
  %v1711 = vadd.f32 %v1646, %v1710
  %1712 = vmatmul.f32.gmra.mxu0 %v1318
  %v1713 = vpop.f32.mrf.mxu0
  %v1714 = vadd.f32 %v1649, %v1713
  %1715 = vmatmul.f32.gmra.mxu0 %v1322
  %v1716 = vpop.f32.mrf.mxu0
  %v1717 = vadd.f32 %v1652, %v1716
  %1718 = vmatmul.f32.gmra.mxu0 %v1326
  %v1719 = vpop.f32.mrf.mxu0
  %v1720 = vadd.f32 %v1655, %v1719
  %1721 = vmatmul.f32.gmra.mxu0 %v1330
  %v1722 = vpop.f32.mrf.mxu0
  %v1723 = vadd.f32 %v1658, %v1722
  %1724 = vdwg.mxu0
  %1725 = vmatpush.msra.mxu0 %v1362
  %1726 = vmatpush.msra.mxu0 %v1360
  %1727 = vmatpush.msra.mxu0 %v1358
  %1728 = vmatpush.msra.mxu0 %v1356
  %1729 = vmatpush.msra.mxu0 %v1354
  %1730 = vmatpush.msra.mxu0 %v1352
  %1731 = vmatpush.msra.mxu0 %v1350
  %1732 = vmatpush.msra.mxu0 %v1348
  %1733 = vmatpush.msra.mxu0 %v1346
  %1734 = vmatpush.msra.mxu0 %v1344
  %1735 = vmatpush.msra.mxu0 %v1342
  %1736 = vmatpush.msra.mxu0 %v1340
  %1737 = vmatpush.msra.mxu0 %v1338
  %1738 = vmatpush.msra.mxu0 %v1336
  %1739 = vmatpush.msra.mxu0 %v1334
  %1740 = vmatpush.msra.mxu0 %v1332
  %1741 = vmatmul.f32.gmra.mxu0 %v1267
  %v1742 = vpop.f32.mrf.mxu0
  %v1743 = vadd.f32 %v1462, %v1742
  %1744 = vmatmul.f32.gmra.mxu0 %v1271
  %v1745 = vpop.f32.mrf.mxu0
  %v1746 = vadd.f32 %v1462, %v1745
  %1747 = vmatmul.f32.gmra.mxu0 %v1275
  %v1748 = vpop.f32.mrf.mxu0
  %v1749 = vadd.f32 %v1462, %v1748
  %1750 = vmatmul.f32.gmra.mxu0 %v1279
  %v1751 = vpop.f32.mrf.mxu0
  %v1752 = vadd.f32 %v1462, %v1751
  %1753 = vmatmul.f32.gmra.mxu0 %v1283
  %v1754 = vpop.f32.mrf.mxu0
  %v1755 = vadd.f32 %v1462, %v1754
  %1756 = vmatmul.f32.gmra.mxu0 %v1287
  %v1757 = vpop.f32.mrf.mxu0
  %v1758 = vadd.f32 %v1462, %v1757
  %1759 = vmatmul.f32.gmra.mxu0 %v1291
  %v1760 = vpop.f32.mrf.mxu0
  %v1761 = vadd.f32 %v1462, %v1760
  %1762 = vmatmul.f32.gmra.mxu0 %v1295
  %v1763 = vpop.f32.mrf.mxu0
  %v1764 = vadd.f32 %v1462, %v1763
  %1765 = vmatmul.f32.gmra.mxu0 %v1299
  %v1766 = vpop.f32.mrf.mxu0
  %v1767 = vadd.f32 %v1462, %v1766
  %1768 = vmatmul.f32.gmra.mxu0 %v1303
  %v1769 = vpop.f32.mrf.mxu0
  %v1770 = vadd.f32 %v1462, %v1769
  %1771 = vmatmul.f32.gmra.mxu0 %v1307
  %v1772 = vpop.f32.mrf.mxu0
  %v1773 = vadd.f32 %v1462, %v1772
  %1774 = vmatmul.f32.gmra.mxu0 %v1311
  %v1775 = vpop.f32.mrf.mxu0
  %v1776 = vadd.f32 %v1462, %v1775
  %1777 = vmatmul.f32.gmra.mxu0 %v1315
  %v1778 = vpop.f32.mrf.mxu0
  %v1779 = vadd.f32 %v1462, %v1778
  %1780 = vmatmul.f32.gmra.mxu0 %v1319
  %v1781 = vpop.f32.mrf.mxu0
  %v1782 = vadd.f32 %v1462, %v1781
  %1783 = vmatmul.f32.gmra.mxu0 %v1323
  %v1784 = vpop.f32.mrf.mxu0
  %v1785 = vadd.f32 %v1462, %v1784
  %1786 = vmatmul.f32.gmra.mxu0 %v1327
  %v1787 = vpop.f32.mrf.mxu0
  %v1788 = vadd.f32 %v1462, %v1787
  %1789 = vdwg.mxu0
  %1790 = vmatpush.msra.mxu0 %v1394
  %1791 = vmatpush.msra.mxu0 %v1392
  %1792 = vmatpush.msra.mxu0 %v1390
  %1793 = vmatpush.msra.mxu0 %v1388
  %1794 = vmatpush.msra.mxu0 %v1386
  %1795 = vmatpush.msra.mxu0 %v1384
  %1796 = vmatpush.msra.mxu0 %v1382
  %1797 = vmatpush.msra.mxu0 %v1380
  %1798 = vmatpush.msra.mxu0 %v1378
  %1799 = vmatpush.msra.mxu0 %v1376
  %1800 = vmatpush.msra.mxu0 %v1374
  %1801 = vmatpush.msra.mxu0 %v1372
  %1802 = vmatpush.msra.mxu0 %v1370
  %1803 = vmatpush.msra.mxu0 %v1368
  %1804 = vmatpush.msra.mxu0 %v1366
  %1805 = vmatpush.msra.mxu0 %v1364
  %1806 = vmatmul.f32.gmra.mxu0 %v1268
  %v1807 = vpop.f32.mrf.mxu0
  %v1808 = vadd.f32 %v1743, %v1807
  %1809 = vmatmul.f32.gmra.mxu0 %v1272
  %v1810 = vpop.f32.mrf.mxu0
  %v1811 = vadd.f32 %v1746, %v1810
  %1812 = vmatmul.f32.gmra.mxu0 %v1276
  %v1813 = vpop.f32.mrf.mxu0
  %v1814 = vadd.f32 %v1749, %v1813
  %1815 = vmatmul.f32.gmra.mxu0 %v1280
  %v1816 = vpop.f32.mrf.mxu0
  %v1817 = vadd.f32 %v1752, %v1816
  %1818 = vmatmul.f32.gmra.mxu0 %v1284
  %v1819 = vpop.f32.mrf.mxu0
  %v1820 = vadd.f32 %v1755, %v1819
  %1821 = vmatmul.f32.gmra.mxu0 %v1288
  %v1822 = vpop.f32.mrf.mxu0
  %v1823 = vadd.f32 %v1758, %v1822
  %1824 = vmatmul.f32.gmra.mxu0 %v1292
  %v1825 = vpop.f32.mrf.mxu0
  %v1826 = vadd.f32 %v1761, %v1825
  %1827 = vmatmul.f32.gmra.mxu0 %v1296
  %v1828 = vpop.f32.mrf.mxu0
  %v1829 = vadd.f32 %v1764, %v1828
  %1830 = vmatmul.f32.gmra.mxu0 %v1300
  %v1831 = vpop.f32.mrf.mxu0
  %v1832 = vadd.f32 %v1767, %v1831
  %1833 = vmatmul.f32.gmra.mxu0 %v1304
  %v1834 = vpop.f32.mrf.mxu0
  %v1835 = vadd.f32 %v1770, %v1834
  %1836 = vmatmul.f32.gmra.mxu0 %v1308
  %v1837 = vpop.f32.mrf.mxu0
  %v1838 = vadd.f32 %v1773, %v1837
  %1839 = vmatmul.f32.gmra.mxu0 %v1312
  %v1840 = vpop.f32.mrf.mxu0
  %v1841 = vadd.f32 %v1776, %v1840
  %1842 = vmatmul.f32.gmra.mxu0 %v1316
  %v1843 = vpop.f32.mrf.mxu0
  %v1844 = vadd.f32 %v1779, %v1843
  %1845 = vmatmul.f32.gmra.mxu0 %v1320
  %v1846 = vpop.f32.mrf.mxu0
  %v1847 = vadd.f32 %v1782, %v1846
  %1848 = vmatmul.f32.gmra.mxu0 %v1324
  %v1849 = vpop.f32.mrf.mxu0
  %v1850 = vadd.f32 %v1785, %v1849
  %1851 = vmatmul.f32.gmra.mxu0 %v1328
  %v1852 = vpop.f32.mrf.mxu0
  %v1853 = vadd.f32 %v1788, %v1852
  %1854 = vdwg.mxu0
  %1855 = vmatpush.msra.mxu0 %v1426
  %1856 = vmatpush.msra.mxu0 %v1424
  %1857 = vmatpush.msra.mxu0 %v1422
  %1858 = vmatpush.msra.mxu0 %v1420
  %1859 = vmatpush.msra.mxu0 %v1418
  %1860 = vmatpush.msra.mxu0 %v1416
  %1861 = vmatpush.msra.mxu0 %v1414
  %1862 = vmatpush.msra.mxu0 %v1412
  %1863 = vmatpush.msra.mxu0 %v1410
  %1864 = vmatpush.msra.mxu0 %v1408
  %1865 = vmatpush.msra.mxu0 %v1406
  %1866 = vmatpush.msra.mxu0 %v1404
  %1867 = vmatpush.msra.mxu0 %v1402
  %1868 = vmatpush.msra.mxu0 %v1400
  %1869 = vmatpush.msra.mxu0 %v1398
  %1870 = vmatpush.msra.mxu0 %v1396
  %1871 = vmatmul.f32.gmra.mxu0 %v1269
  %v1872 = vpop.f32.mrf.mxu0
  %v1873 = vadd.f32 %v1808, %v1872
  %1874 = vmatmul.f32.gmra.mxu0 %v1273
  %v1875 = vpop.f32.mrf.mxu0
  %v1876 = vadd.f32 %v1811, %v1875
  %1877 = vmatmul.f32.gmra.mxu0 %v1277
  %v1878 = vpop.f32.mrf.mxu0
  %v1879 = vadd.f32 %v1814, %v1878
  %1880 = vmatmul.f32.gmra.mxu0 %v1281
  %v1881 = vpop.f32.mrf.mxu0
  %v1882 = vadd.f32 %v1817, %v1881
  %1883 = vmatmul.f32.gmra.mxu0 %v1285
  %v1884 = vpop.f32.mrf.mxu0
  %v1885 = vadd.f32 %v1820, %v1884
  %1886 = vmatmul.f32.gmra.mxu0 %v1289
  %v1887 = vpop.f32.mrf.mxu0
  %v1888 = vadd.f32 %v1823, %v1887
  %1889 = vmatmul.f32.gmra.mxu0 %v1293
  %v1890 = vpop.f32.mrf.mxu0
  %v1891 = vadd.f32 %v1826, %v1890
  %1892 = vmatmul.f32.gmra.mxu0 %v1297
  %v1893 = vpop.f32.mrf.mxu0
  %v1894 = vadd.f32 %v1829, %v1893
  %1895 = vmatmul.f32.gmra.mxu0 %v1301
  %v1896 = vpop.f32.mrf.mxu0
  %v1897 = vadd.f32 %v1832, %v1896
  %1898 = vmatmul.f32.gmra.mxu0 %v1305
  %v1899 = vpop.f32.mrf.mxu0
  %v1900 = vadd.f32 %v1835, %v1899
  %1901 = vmatmul.f32.gmra.mxu0 %v1309
  %v1902 = vpop.f32.mrf.mxu0
  %v1903 = vadd.f32 %v1838, %v1902
  %1904 = vmatmul.f32.gmra.mxu0 %v1313
  %v1905 = vpop.f32.mrf.mxu0
  %v1906 = vadd.f32 %v1841, %v1905
  %1907 = vmatmul.f32.gmra.mxu0 %v1317
  %v1908 = vpop.f32.mrf.mxu0
  %v1909 = vadd.f32 %v1844, %v1908
  %1910 = vmatmul.f32.gmra.mxu0 %v1321
  %v1911 = vpop.f32.mrf.mxu0
  %v1912 = vadd.f32 %v1847, %v1911
  %1913 = vmatmul.f32.gmra.mxu0 %v1325
  %v1914 = vpop.f32.mrf.mxu0
  %v1915 = vadd.f32 %v1850, %v1914
  %1916 = vmatmul.f32.gmra.mxu0 %v1329
  %v1917 = vpop.f32.mrf.mxu0
  %v1918 = vadd.f32 %v1853, %v1917
  %1919 = vdwg.mxu0
  %1920 = vmatpush.msra.mxu0 %v1458
  %1921 = vmatpush.msra.mxu0 %v1456
  %1922 = vmatpush.msra.mxu0 %v1454
  %1923 = vmatpush.msra.mxu0 %v1452
  %1924 = vmatpush.msra.mxu0 %v1450
  %1925 = vmatpush.msra.mxu0 %v1448
  %1926 = vmatpush.msra.mxu0 %v1446
  %1927 = vmatpush.msra.mxu0 %v1444
  %1928 = vmatpush.msra.mxu0 %v1442
  %1929 = vmatpush.msra.mxu0 %v1440
  %1930 = vmatpush.msra.mxu0 %v1438
  %1931 = vmatpush.msra.mxu0 %v1436
  %1932 = vmatpush.msra.mxu0 %v1434
  %1933 = vmatpush.msra.mxu0 %v1432
  %1934 = vmatpush.msra.mxu0 %v1430
  %1935 = vmatpush.msra.mxu0 %v1428
  %1936 = vmatmul.f32.gmra.mxu0 %v1270
  %v1937 = vpop.f32.mrf.mxu0
  %v1938 = vadd.f32 %v1873, %v1937
  %1939 = vmatmul.f32.gmra.mxu0 %v1274
  %v1940 = vpop.f32.mrf.mxu0
  %v1941 = vadd.f32 %v1876, %v1940
  %1942 = vmatmul.f32.gmra.mxu0 %v1278
  %v1943 = vpop.f32.mrf.mxu0
  %v1944 = vadd.f32 %v1879, %v1943
  %1945 = vmatmul.f32.gmra.mxu0 %v1282
  %v1946 = vpop.f32.mrf.mxu0
  %v1947 = vadd.f32 %v1882, %v1946
  %1948 = vmatmul.f32.gmra.mxu0 %v1286
  %v1949 = vpop.f32.mrf.mxu0
  %v1950 = vadd.f32 %v1885, %v1949
  %1951 = vmatmul.f32.gmra.mxu0 %v1290
  %v1952 = vpop.f32.mrf.mxu0
  %v1953 = vadd.f32 %v1888, %v1952
  %1954 = vmatmul.f32.gmra.mxu0 %v1294
  %v1955 = vpop.f32.mrf.mxu0
  %v1956 = vadd.f32 %v1891, %v1955
  %1957 = vmatmul.f32.gmra.mxu0 %v1298
  %v1958 = vpop.f32.mrf.mxu0
  %v1959 = vadd.f32 %v1894, %v1958
  %1960 = vmatmul.f32.gmra.mxu0 %v1302
  %v1961 = vpop.f32.mrf.mxu0
  %v1962 = vadd.f32 %v1897, %v1961
  %1963 = vmatmul.f32.gmra.mxu0 %v1306
  %v1964 = vpop.f32.mrf.mxu0
  %v1965 = vadd.f32 %v1900, %v1964
  %1966 = vmatmul.f32.gmra.mxu0 %v1310
  %v1967 = vpop.f32.mrf.mxu0
  %v1968 = vadd.f32 %v1903, %v1967
  %1969 = vmatmul.f32.gmra.mxu0 %v1314
  %v1970 = vpop.f32.mrf.mxu0
  %v1971 = vadd.f32 %v1906, %v1970
  %1972 = vmatmul.f32.gmra.mxu0 %v1318
  %v1973 = vpop.f32.mrf.mxu0
  %v1974 = vadd.f32 %v1909, %v1973
  %1975 = vmatmul.f32.gmra.mxu0 %v1322
  %v1976 = vpop.f32.mrf.mxu0
  %v1977 = vadd.f32 %v1912, %v1976
  %1978 = vmatmul.f32.gmra.mxu0 %v1326
  %v1979 = vpop.f32.mrf.mxu0
  %v1980 = vadd.f32 %v1915, %v1979
  %1981 = vmatmul.f32.gmra.mxu0 %v1330
  %v1982 = vpop.f32.mrf.mxu0
  %v1983 = vadd.f32 %v1918, %v1982
  %1984 = vdwg.mxu0
  %v1985 = vld [vmem:[%s8] sm:$0x3]
  %v1986 = vld [vmem:[%s9] sm:$0x3]
  %v1987 = vadd.f32 %v1678, %v1938
  %1988 = vadd.xlane.f32.xlu0 %v1987
  %v1989 = vpop.xlane.xlu0 %1988
  %v1990 = vadd.f32 %v1681, %v1941
  %1991 = vadd.xlane.f32.xlu0 %v1990
  %v1992 = vpop.xlane.xlu0 %1991
  %v1993 = vadd.f32 %v1684, %v1944
  %1994 = vadd.xlane.f32.xlu0 %v1993
  %v1995 = vpop.xlane.xlu0 %1994
  %v1996 = vadd.f32 %v1687, %v1947
  %1997 = vadd.xlane.f32.xlu0 %v1996
  %v1998 = vpop.xlane.xlu0 %1997
  %v1999 = vadd.f32 %v1690, %v1950
  %2000 = vadd.xlane.f32.xlu0 %v1999
  %v2001 = vpop.xlane.xlu0 %2000
  %v2002 = vadd.f32 %v1693, %v1953
  %2003 = vadd.xlane.f32.xlu0 %v2002
  %v2004 = vpop.xlane.xlu0 %2003
  %v2005 = vadd.f32 %v1696, %v1956
  %2006 = vadd.xlane.f32.xlu0 %v2005
  %v2007 = vpop.xlane.xlu0 %2006
  %v2008 = vadd.f32 %v1699, %v1959
  %2009 = vadd.xlane.f32.xlu0 %v2008
  %v2010 = vpop.xlane.xlu0 %2009
  %v2011 = vadd.f32 %v1702, %v1962
  %2012 = vadd.xlane.f32.xlu0 %v2011
  %v2013 = vpop.xlane.xlu0 %2012
  %v2014 = vadd.f32 %v1705, %v1965
  %2015 = vadd.xlane.f32.xlu0 %v2014
  %v2016 = vpop.xlane.xlu0 %2015
  %v2017 = vadd.f32 %v1708, %v1968
  %2018 = vadd.xlane.f32.xlu0 %v2017
  %v2019 = vpop.xlane.xlu0 %2018
  %v2020 = vadd.f32 %v1711, %v1971
  %2021 = vadd.xlane.f32.xlu0 %v2020
  %v2022 = vpop.xlane.xlu0 %2021
  %v2023 = vadd.f32 %v1714, %v1974
  %2024 = vadd.xlane.f32.xlu0 %v2023
  %v2025 = vpop.xlane.xlu0 %2024
  %v2026 = vadd.f32 %v1717, %v1977
  %2027 = vadd.xlane.f32.xlu0 %v2026
  %v2028 = vpop.xlane.xlu0 %2027
  %v2029 = vadd.f32 %v1720, %v1980
  %2030 = vadd.xlane.f32.xlu0 %v2029
  %v2031 = vpop.xlane.xlu0 %2030
  %v2032 = vadd.f32 %v1723, %v1983
  %2033 = vadd.xlane.f32.xlu0 %v2032
  %v2034 = vpop.xlane.xlu0 %2033
  %v2035 = vrcp.pop 256.0
  %v2036 = vmul.f32 256.0, %v2035
  %v2037 = vsub.f32 1.0, %v2036
  %v2038 = vmul.f32 %v2035, %v2037
  %v2039 = vadd.f32 %v2035, %v2038
  %vm2040 = vweird.f32 %v2035
  %v2041 = vsel %vm2040, %v2035, %v2039
  %v2042 = vmul.f32 %v1989, %v2041
  %v2043 = vmul.f32 %v1992, %v2041
  %v2044 = vmul.f32 %v1995, %v2041
  %v2045 = vmul.f32 %v1998, %v2041
  %v2046 = vmul.f32 %v2001, %v2041
  %v2047 = vmul.f32 %v2004, %v2041
  %v2048 = vmul.f32 %v2007, %v2041
  %v2049 = vmul.f32 %v2010, %v2041
  %v2050 = vmul.f32 %v2013, %v2041
  %v2051 = vmul.f32 %v2016, %v2041
  %v2052 = vmul.f32 %v2019, %v2041
  %v2053 = vmul.f32 %v2022, %v2041
  %v2054 = vmul.f32 %v2025, %v2041
  %v2055 = vmul.f32 %v2028, %v2041
  %v2056 = vmul.f32 %v2031, %v2041
  %v2057 = vmul.f32 %v2034, %v2041
  %v2058 = vsub.f32 %v1678, %v2042
  %v2059 = vsub.f32 %v1938, %v2042
  %v2060 = vsub.f32 %v1681, %v2043
  %v2061 = vsub.f32 %v1941, %v2043
  %v2062 = vsub.f32 %v1684, %v2044
  %v2063 = vsub.f32 %v1944, %v2044
  %v2064 = vsub.f32 %v1687, %v2045
  %v2065 = vsub.f32 %v1947, %v2045
  %v2066 = vsub.f32 %v1690, %v2046
  %v2067 = vsub.f32 %v1950, %v2046
  %v2068 = vsub.f32 %v1693, %v2047
  %v2069 = vsub.f32 %v1953, %v2047
  %v2070 = vsub.f32 %v1696, %v2048
  %v2071 = vsub.f32 %v1956, %v2048
  %v2072 = vsub.f32 %v1699, %v2049
  %v2073 = vsub.f32 %v1959, %v2049
  %v2074 = vsub.f32 %v1702, %v2050
  %v2075 = vsub.f32 %v1962, %v2050
  %v2076 = vsub.f32 %v1705, %v2051
  %v2077 = vsub.f32 %v1965, %v2051
  %v2078 = vsub.f32 %v1708, %v2052
  %v2079 = vsub.f32 %v1968, %v2052
  %v2080 = vsub.f32 %v1711, %v2053
  %v2081 = vsub.f32 %v1971, %v2053
  %v2082 = vsub.f32 %v1714, %v2054
  %v2083 = vsub.f32 %v1974, %v2054
  %v2084 = vsub.f32 %v1717, %v2055
  %v2085 = vsub.f32 %v1977, %v2055
  %v2086 = vsub.f32 %v1720, %v2056
  %v2087 = vsub.f32 %v1980, %v2056
  %v2088 = vsub.f32 %v1723, %v2057
  %v2089 = vsub.f32 %v1983, %v2057
  %v2090 = vmul.f32 %v2058, %v2058
  %v2091 = vmul.f32 %v2059, %v2059
  %v2092 = vmul.f32 %v2060, %v2060
  %v2093 = vmul.f32 %v2061, %v2061
  %v2094 = vmul.f32 %v2062, %v2062
  %v2095 = vmul.f32 %v2063, %v2063
  %v2096 = vmul.f32 %v2064, %v2064
  %v2097 = vmul.f32 %v2065, %v2065
  %v2098 = vmul.f32 %v2066, %v2066
  %v2099 = vmul.f32 %v2067, %v2067
  %v2100 = vmul.f32 %v2068, %v2068
  %v2101 = vmul.f32 %v2069, %v2069
  %v2102 = vmul.f32 %v2070, %v2070
  %v2103 = vmul.f32 %v2071, %v2071
  %v2104 = vmul.f32 %v2072, %v2072
  %v2105 = vmul.f32 %v2073, %v2073
  %v2106 = vmul.f32 %v2074, %v2074
  %v2107 = vmul.f32 %v2075, %v2075
  %v2108 = vmul.f32 %v2076, %v2076
  %v2109 = vmul.f32 %v2077, %v2077
  %v2110 = vmul.f32 %v2078, %v2078
  %v2111 = vmul.f32 %v2079, %v2079
  %v2112 = vmul.f32 %v2080, %v2080
  %v2113 = vmul.f32 %v2081, %v2081
  %v2114 = vmul.f32 %v2082, %v2082
  %v2115 = vmul.f32 %v2083, %v2083
  %v2116 = vmul.f32 %v2084, %v2084
  %v2117 = vmul.f32 %v2085, %v2085
  %v2118 = vmul.f32 %v2086, %v2086
  %v2119 = vmul.f32 %v2087, %v2087
  %v2120 = vmul.f32 %v2088, %v2088
  %v2121 = vmul.f32 %v2089, %v2089
  %v2122 = vadd.f32 %v2090, %v2091
  %2123 = vadd.xlane.f32.xlu0 %v2122
  %v2124 = vpop.xlane.xlu0 %2123
  %v2125 = vadd.f32 %v2092, %v2093
  %2126 = vadd.xlane.f32.xlu0 %v2125
  %v2127 = vpop.xlane.xlu0 %2126
  %v2128 = vadd.f32 %v2094, %v2095
  %2129 = vadd.xlane.f32.xlu0 %v2128
  %v2130 = vpop.xlane.xlu0 %2129
  %v2131 = vadd.f32 %v2096, %v2097
  %2132 = vadd.xlane.f32.xlu0 %v2131
  %v2133 = vpop.xlane.xlu0 %2132
  %v2134 = vadd.f32 %v2098, %v2099
  %2135 = vadd.xlane.f32.xlu0 %v2134
  %v2136 = vpop.xlane.xlu0 %2135
  %v2137 = vadd.f32 %v2100, %v2101
  %2138 = vadd.xlane.f32.xlu0 %v2137
  %v2139 = vpop.xlane.xlu0 %2138
  %v2140 = vadd.f32 %v2102, %v2103
  %2141 = vadd.xlane.f32.xlu0 %v2140
  %v2142 = vpop.xlane.xlu0 %2141
  %v2143 = vadd.f32 %v2104, %v2105
  %2144 = vadd.xlane.f32.xlu0 %v2143
  %v2145 = vpop.xlane.xlu0 %2144
  %v2146 = vadd.f32 %v2106, %v2107
  %2147 = vadd.xlane.f32.xlu0 %v2146
  %v2148 = vpop.xlane.xlu0 %2147
  %v2149 = vadd.f32 %v2108, %v2109
  %2150 = vadd.xlane.f32.xlu0 %v2149
  %v2151 = vpop.xlane.xlu0 %2150
  %v2152 = vadd.f32 %v2110, %v2111
  %2153 = vadd.xlane.f32.xlu0 %v2152
  %v2154 = vpop.xlane.xlu0 %2153
  %v2155 = vadd.f32 %v2112, %v2113
  %2156 = vadd.xlane.f32.xlu0 %v2155
  %v2157 = vpop.xlane.xlu0 %2156
  %v2158 = vadd.f32 %v2114, %v2115
  %2159 = vadd.xlane.f32.xlu0 %v2158
  %v2160 = vpop.xlane.xlu0 %2159
  %v2161 = vadd.f32 %v2116, %v2117
  %2162 = vadd.xlane.f32.xlu0 %v2161
  %v2163 = vpop.xlane.xlu0 %2162
  %v2164 = vadd.f32 %v2118, %v2119
  %2165 = vadd.xlane.f32.xlu0 %v2164
  %v2166 = vpop.xlane.xlu0 %2165
  %v2167 = vadd.f32 %v2120, %v2121
  %2168 = vadd.xlane.f32.xlu0 %v2167
  %v2169 = vpop.xlane.xlu0 %2168
  %v2170 = vmul.f32 %v2124, %v2041
  %v2171 = vmul.f32 %v2127, %v2041
  %v2172 = vmul.f32 %v2130, %v2041
  %v2173 = vmul.f32 %v2133, %v2041
  %v2174 = vmul.f32 %v2136, %v2041
  %v2175 = vmul.f32 %v2139, %v2041
  %v2176 = vmul.f32 %v2142, %v2041
  %v2177 = vmul.f32 %v2145, %v2041
  %v2178 = vmul.f32 %v2148, %v2041
  %v2179 = vmul.f32 %v2151, %v2041
  %v2180 = vmul.f32 %v2154, %v2041
  %v2181 = vmul.f32 %v2157, %v2041
  %v2182 = vmul.f32 %v2160, %v2041
  %v2183 = vmul.f32 %v2163, %v2041
  %v2184 = vmul.f32 %v2166, %v2041
  %v2185 = vmul.f32 %v2169, %v2041
  %v2186 = vadd.f32 %v2170, 1e-05
  %v2187 = vadd.f32 %v2171, 1e-05
  %v2188 = vadd.f32 %v2172, 1e-05
  %v2189 = vadd.f32 %v2173, 1e-05
  %v2190 = vadd.f32 %v2174, 1e-05
  %v2191 = vadd.f32 %v2175, 1e-05
  %v2192 = vadd.f32 %v2176, 1e-05
  %v2193 = vadd.f32 %v2177, 1e-05
  %v2194 = vadd.f32 %v2178, 1e-05
  %v2195 = vadd.f32 %v2179, 1e-05
  %v2196 = vadd.f32 %v2180, 1e-05
  %v2197 = vadd.f32 %v2181, 1e-05
  %v2198 = vadd.f32 %v2182, 1e-05
  %v2199 = vadd.f32 %v2183, 1e-05
  %v2200 = vadd.f32 %v2184, 1e-05
  %v2201 = vadd.f32 %v2185, 1e-05
  %v2202 = vrsqrt.pop %v2186
  %v2203 = vmul.f32 %v2202, %v2186
  %v2204 = vmul.f32 %v2203, %v2202
  %v2205 = vmul.f32 0.5, %v2204
  %v2206 = vsub.f32 1.5, %v2205
  %v2207 = vmul.f32 %v2202, %v2206
  %vm2208 = vweird.f32 %v2186
  %vm2209 = vweird.f32 %v2202
  %vm2210 = vmor %vm2208, %vm2209
  %v2211 = vsel %vm2210, %v2202, %v2207
  %v2212 = vrsqrt.pop %v2187
  %v2213 = vmul.f32 %v2212, %v2187
  %v2214 = vmul.f32 %v2213, %v2212
  %v2215 = vmul.f32 0.5, %v2214
  %v2216 = vsub.f32 1.5, %v2215
  %v2217 = vmul.f32 %v2212, %v2216
  %vm2218 = vweird.f32 %v2187
  %vm2219 = vweird.f32 %v2212
  %vm2220 = vmor %vm2218, %vm2219
  %v2221 = vsel %vm2220, %v2212, %v2217
  %v2222 = vrsqrt.pop %v2188
  %v2223 = vmul.f32 %v2222, %v2188
  %v2224 = vmul.f32 %v2223, %v2222
  %v2225 = vmul.f32 0.5, %v2224
  %v2226 = vsub.f32 1.5, %v2225
  %v2227 = vmul.f32 %v2222, %v2226
  %vm2228 = vweird.f32 %v2188
  %vm2229 = vweird.f32 %v2222
  %vm2230 = vmor %vm2228, %vm2229
  %v2231 = vsel %vm2230, %v2222, %v2227
  %v2232 = vrsqrt.pop %v2189
  %v2233 = vmul.f32 %v2232, %v2189
  %v2234 = vmul.f32 %v2233, %v2232
  %v2235 = vmul.f32 0.5, %v2234
  %v2236 = vsub.f32 1.5, %v2235
  %v2237 = vmul.f32 %v2232, %v2236
  %vm2238 = vweird.f32 %v2189
  %vm2239 = vweird.f32 %v2232
  %vm2240 = vmor %vm2238, %vm2239
  %v2241 = vsel %vm2240, %v2232, %v2237
  %v2242 = vrsqrt.pop %v2190
  %v2243 = vmul.f32 %v2242, %v2190
  %v2244 = vmul.f32 %v2243, %v2242
  %v2245 = vmul.f32 0.5, %v2244
  %v2246 = vsub.f32 1.5, %v2245
  %v2247 = vmul.f32 %v2242, %v2246
  %vm2248 = vweird.f32 %v2190
  %vm2249 = vweird.f32 %v2242
  %vm2250 = vmor %vm2248, %vm2249
  %v2251 = vsel %vm2250, %v2242, %v2247
  %v2252 = vrsqrt.pop %v2191
  %v2253 = vmul.f32 %v2252, %v2191
  %v2254 = vmul.f32 %v2253, %v2252
  %v2255 = vmul.f32 0.5, %v2254
  %v2256 = vsub.f32 1.5, %v2255
  %v2257 = vmul.f32 %v2252, %v2256
  %vm2258 = vweird.f32 %v2191
  %vm2259 = vweird.f32 %v2252
  %vm2260 = vmor %vm2258, %vm2259
  %v2261 = vsel %vm2260, %v2252, %v2257
  %v2262 = vrsqrt.pop %v2192
  %v2263 = vmul.f32 %v2262, %v2192
  %v2264 = vmul.f32 %v2263, %v2262
  %v2265 = vmul.f32 0.5, %v2264
  %v2266 = vsub.f32 1.5, %v2265
  %v2267 = vmul.f32 %v2262, %v2266
  %vm2268 = vweird.f32 %v2192
  %vm2269 = vweird.f32 %v2262
  %vm2270 = vmor %vm2268, %vm2269
  %v2271 = vsel %vm2270, %v2262, %v2267
  %v2272 = vrsqrt.pop %v2193
  %v2273 = vmul.f32 %v2272, %v2193
  %v2274 = vmul.f32 %v2273, %v2272
  %v2275 = vmul.f32 0.5, %v2274
  %v2276 = vsub.f32 1.5, %v2275
  %v2277 = vmul.f32 %v2272, %v2276
  %vm2278 = vweird.f32 %v2193
  %vm2279 = vweird.f32 %v2272
  %vm2280 = vmor %vm2278, %vm2279
  %v2281 = vsel %vm2280, %v2272, %v2277
  %v2282 = vrsqrt.pop %v2194
  %v2283 = vmul.f32 %v2282, %v2194
  %v2284 = vmul.f32 %v2283, %v2282
  %v2285 = vmul.f32 0.5, %v2284
  %v2286 = vsub.f32 1.5, %v2285
  %v2287 = vmul.f32 %v2282, %v2286
  %vm2288 = vweird.f32 %v2194
  %vm2289 = vweird.f32 %v2282
  %vm2290 = vmor %vm2288, %vm2289
  %v2291 = vsel %vm2290, %v2282, %v2287
  %v2292 = vrsqrt.pop %v2195
  %v2293 = vmul.f32 %v2292, %v2195
  %v2294 = vmul.f32 %v2293, %v2292
  %v2295 = vmul.f32 0.5, %v2294
  %v2296 = vsub.f32 1.5, %v2295
  %v2297 = vmul.f32 %v2292, %v2296
  %vm2298 = vweird.f32 %v2195
  %vm2299 = vweird.f32 %v2292
  %vm2300 = vmor %vm2298, %vm2299
  %v2301 = vsel %vm2300, %v2292, %v2297
  %v2302 = vrsqrt.pop %v2196
  %v2303 = vmul.f32 %v2302, %v2196
  %v2304 = vmul.f32 %v2303, %v2302
  %v2305 = vmul.f32 0.5, %v2304
  %v2306 = vsub.f32 1.5, %v2305
  %v2307 = vmul.f32 %v2302, %v2306
  %vm2308 = vweird.f32 %v2196
  %vm2309 = vweird.f32 %v2302
  %vm2310 = vmor %vm2308, %vm2309
  %v2311 = vsel %vm2310, %v2302, %v2307
  %v2312 = vrsqrt.pop %v2197
  %v2313 = vmul.f32 %v2312, %v2197
  %v2314 = vmul.f32 %v2313, %v2312
  %v2315 = vmul.f32 0.5, %v2314
  %v2316 = vsub.f32 1.5, %v2315
  %v2317 = vmul.f32 %v2312, %v2316
  %vm2318 = vweird.f32 %v2197
  %vm2319 = vweird.f32 %v2312
  %vm2320 = vmor %vm2318, %vm2319
  %v2321 = vsel %vm2320, %v2312, %v2317
  %v2322 = vrsqrt.pop %v2198
  %v2323 = vmul.f32 %v2322, %v2198
  %v2324 = vmul.f32 %v2323, %v2322
  %v2325 = vmul.f32 0.5, %v2324
  %v2326 = vsub.f32 1.5, %v2325
  %v2327 = vmul.f32 %v2322, %v2326
  %vm2328 = vweird.f32 %v2198
  %vm2329 = vweird.f32 %v2322
  %vm2330 = vmor %vm2328, %vm2329
  %v2331 = vsel %vm2330, %v2322, %v2327
  %v2332 = vrsqrt.pop %v2199
  %v2333 = vmul.f32 %v2332, %v2199
  %v2334 = vmul.f32 %v2333, %v2332
  %v2335 = vmul.f32 0.5, %v2334
  %v2336 = vsub.f32 1.5, %v2335
  %v2337 = vmul.f32 %v2332, %v2336
  %vm2338 = vweird.f32 %v2199
  %vm2339 = vweird.f32 %v2332
  %vm2340 = vmor %vm2338, %vm2339
  %v2341 = vsel %vm2340, %v2332, %v2337
  %v2342 = vrsqrt.pop %v2200
  %v2343 = vmul.f32 %v2342, %v2200
  %v2344 = vmul.f32 %v2343, %v2342
  %v2345 = vmul.f32 0.5, %v2344
  %v2346 = vsub.f32 1.5, %v2345
  %v2347 = vmul.f32 %v2342, %v2346
  %vm2348 = vweird.f32 %v2200
  %vm2349 = vweird.f32 %v2342
  %vm2350 = vmor %vm2348, %vm2349
  %v2351 = vsel %vm2350, %v2342, %v2347
  %v2352 = vrsqrt.pop %v2201
  %v2353 = vmul.f32 %v2352, %v2201
  %v2354 = vmul.f32 %v2353, %v2352
  %v2355 = vmul.f32 0.5, %v2354
  %v2356 = vsub.f32 1.5, %v2355
  %v2357 = vmul.f32 %v2352, %v2356
  %vm2358 = vweird.f32 %v2201
  %vm2359 = vweird.f32 %v2352
  %vm2360 = vmor %vm2358, %vm2359
  %v2361 = vsel %vm2360, %v2352, %v2357
  %v2362 = vmul.f32 %v2058, %v2211
  %v2363 = vmul.f32 %v2059, %v2211
  %v2364 = vmul.f32 %v2060, %v2221
  %v2365 = vmul.f32 %v2061, %v2221
  %v2366 = vmul.f32 %v2062, %v2231
  %v2367 = vmul.f32 %v2063, %v2231
  %v2368 = vmul.f32 %v2064, %v2241
  %v2369 = vmul.f32 %v2065, %v2241
  %v2370 = vmul.f32 %v2066, %v2251
  %v2371 = vmul.f32 %v2067, %v2251
  %v2372 = vmul.f32 %v2068, %v2261
  %v2373 = vmul.f32 %v2069, %v2261
  %v2374 = vmul.f32 %v2070, %v2271
  %v2375 = vmul.f32 %v2071, %v2271
  %v2376 = vmul.f32 %v2072, %v2281
  %v2377 = vmul.f32 %v2073, %v2281
  %v2378 = vmul.f32 %v2074, %v2291
  %v2379 = vmul.f32 %v2075, %v2291
  %v2380 = vmul.f32 %v2076, %v2301
  %v2381 = vmul.f32 %v2077, %v2301
  %v2382 = vmul.f32 %v2078, %v2311
  %v2383 = vmul.f32 %v2079, %v2311
  %v2384 = vmul.f32 %v2080, %v2321
  %v2385 = vmul.f32 %v2081, %v2321
  %v2386 = vmul.f32 %v2082, %v2331
  %v2387 = vmul.f32 %v2083, %v2331
  %v2388 = vmul.f32 %v2084, %v2341
  %v2389 = vmul.f32 %v2085, %v2341
  %v2390 = vmul.f32 %v2086, %v2351
  %v2391 = vmul.f32 %v2087, %v2351
  %v2392 = vmul.f32 %v2088, %v2361
  %v2393 = vmul.f32 %v2089, %v2361
  %v2395 = vperm.slane %v1985, 0
  %v2396 = vperm.slane %v1985, 1
  %v2399 = vmul.f32 %v2362, %v2395
  %v2400 = vmul.f32 %v2363, %v2396
  %v2401 = vmul.f32 %v2364, %v2395
  %v2402 = vmul.f32 %v2365, %v2396
  %v2403 = vmul.f32 %v2366, %v2395
  %v2404 = vmul.f32 %v2367, %v2396
  %v2405 = vmul.f32 %v2368, %v2395
  %v2406 = vmul.f32 %v2369, %v2396
  %v2407 = vmul.f32 %v2370, %v2395
  %v2408 = vmul.f32 %v2371, %v2396
  %v2409 = vmul.f32 %v2372, %v2395
  %v2410 = vmul.f32 %v2373, %v2396
  %v2411 = vmul.f32 %v2374, %v2395
  %v2412 = vmul.f32 %v2375, %v2396
  %v2413 = vmul.f32 %v2376, %v2395
  %v2414 = vmul.f32 %v2377, %v2396
  %v2415 = vmul.f32 %v2378, %v2395
  %v2416 = vmul.f32 %v2379, %v2396
  %v2417 = vmul.f32 %v2380, %v2395
  %v2418 = vmul.f32 %v2381, %v2396
  %v2419 = vmul.f32 %v2382, %v2395
  %v2420 = vmul.f32 %v2383, %v2396
  %v2421 = vmul.f32 %v2384, %v2395
  %v2422 = vmul.f32 %v2385, %v2396
  %v2423 = vmul.f32 %v2386, %v2395
  %v2424 = vmul.f32 %v2387, %v2396
  %v2425 = vmul.f32 %v2388, %v2395
  %v2426 = vmul.f32 %v2389, %v2396
  %v2427 = vmul.f32 %v2390, %v2395
  %v2428 = vmul.f32 %v2391, %v2396
  %v2429 = vmul.f32 %v2392, %v2395
  %v2430 = vmul.f32 %v2393, %v2396
  %v2432 = vperm.slane %v1986, 0
  %v2433 = vperm.slane %v1986, 1
  %v2436 = vadd.f32 %v2399, %v2432
  %v2437 = vadd.f32 %v2400, %v2433
  %v2438 = vadd.f32 %v2401, %v2432
  %v2439 = vadd.f32 %v2402, %v2433
  %v2440 = vadd.f32 %v2403, %v2432
  %v2441 = vadd.f32 %v2404, %v2433
  %v2442 = vadd.f32 %v2405, %v2432
  %v2443 = vadd.f32 %v2406, %v2433
  %v2444 = vadd.f32 %v2407, %v2432
  %v2445 = vadd.f32 %v2408, %v2433
  %v2446 = vadd.f32 %v2409, %v2432
  %v2447 = vadd.f32 %v2410, %v2433
  %v2448 = vadd.f32 %v2411, %v2432
  %v2449 = vadd.f32 %v2412, %v2433
  %v2450 = vadd.f32 %v2413, %v2432
  %v2451 = vadd.f32 %v2414, %v2433
  %v2452 = vadd.f32 %v2415, %v2432
  %v2453 = vadd.f32 %v2416, %v2433
  %v2454 = vadd.f32 %v2417, %v2432
  %v2455 = vadd.f32 %v2418, %v2433
  %v2456 = vadd.f32 %v2419, %v2432
  %v2457 = vadd.f32 %v2420, %v2433
  %v2458 = vadd.f32 %v2421, %v2432
  %v2459 = vadd.f32 %v2422, %v2433
  %v2460 = vadd.f32 %v2423, %v2432
  %v2461 = vadd.f32 %v2424, %v2433
  %v2462 = vadd.f32 %v2425, %v2432
  %v2463 = vadd.f32 %v2426, %v2433
  %v2464 = vadd.f32 %v2427, %v2432
  %v2465 = vadd.f32 %v2428, %v2433
  %v2466 = vadd.f32 %v2429, %v2432
  %v2467 = vadd.f32 %v2430, %v2433
  %vm2468 = vcmp.gt.f32.partialorder %v2436, 0.0
  %vm2469 = vcmp.gt.f32.partialorder %v2437, 0.0
  %vm2470 = vcmp.gt.f32.partialorder %v2438, 0.0
  %vm2471 = vcmp.gt.f32.partialorder %v2439, 0.0
  %vm2472 = vcmp.gt.f32.partialorder %v2440, 0.0
  %vm2473 = vcmp.gt.f32.partialorder %v2441, 0.0
  %vm2474 = vcmp.gt.f32.partialorder %v2442, 0.0
  %vm2475 = vcmp.gt.f32.partialorder %v2443, 0.0
  %vm2476 = vcmp.gt.f32.partialorder %v2444, 0.0
  %vm2477 = vcmp.gt.f32.partialorder %v2445, 0.0
  %vm2478 = vcmp.gt.f32.partialorder %v2446, 0.0
  %vm2479 = vcmp.gt.f32.partialorder %v2447, 0.0
  %vm2480 = vcmp.gt.f32.partialorder %v2448, 0.0
  %vm2481 = vcmp.gt.f32.partialorder %v2449, 0.0
  %vm2482 = vcmp.gt.f32.partialorder %v2450, 0.0
  %vm2483 = vcmp.gt.f32.partialorder %v2451, 0.0
  %vm2484 = vcmp.gt.f32.partialorder %v2452, 0.0
  %vm2485 = vcmp.gt.f32.partialorder %v2453, 0.0
  %vm2486 = vcmp.gt.f32.partialorder %v2454, 0.0
  %vm2487 = vcmp.gt.f32.partialorder %v2455, 0.0
  %vm2488 = vcmp.gt.f32.partialorder %v2456, 0.0
  %vm2489 = vcmp.gt.f32.partialorder %v2457, 0.0
  %vm2490 = vcmp.gt.f32.partialorder %v2458, 0.0
  %vm2491 = vcmp.gt.f32.partialorder %v2459, 0.0
  %vm2492 = vcmp.gt.f32.partialorder %v2460, 0.0
  %vm2493 = vcmp.gt.f32.partialorder %v2461, 0.0
  %vm2494 = vcmp.gt.f32.partialorder %v2462, 0.0
  %vm2495 = vcmp.gt.f32.partialorder %v2463, 0.0
  %vm2496 = vcmp.gt.f32.partialorder %v2464, 0.0
  %vm2497 = vcmp.gt.f32.partialorder %v2465, 0.0
  %vm2498 = vcmp.gt.f32.partialorder %v2466, 0.0
  %vm2499 = vcmp.gt.f32.partialorder %v2467, 0.0
  %v2500 = vmul.f32 %v2436, 0.1
  %v2501 = vmul.f32 %v2437, 0.1
  %v2502 = vmul.f32 %v2438, 0.1
  %v2503 = vmul.f32 %v2439, 0.1
  %v2504 = vmul.f32 %v2440, 0.1
  %v2505 = vmul.f32 %v2441, 0.1
  %v2506 = vmul.f32 %v2442, 0.1
  %v2507 = vmul.f32 %v2443, 0.1
  %v2508 = vmul.f32 %v2444, 0.1
  %v2509 = vmul.f32 %v2445, 0.1
  %v2510 = vmul.f32 %v2446, 0.1
  %v2511 = vmul.f32 %v2447, 0.1
  %v2512 = vmul.f32 %v2448, 0.1
  %v2513 = vmul.f32 %v2449, 0.1
  %v2514 = vmul.f32 %v2450, 0.1
  %v2515 = vmul.f32 %v2451, 0.1
  %v2516 = vmul.f32 %v2452, 0.1
  %v2517 = vmul.f32 %v2453, 0.1
  %v2518 = vmul.f32 %v2454, 0.1
  %v2519 = vmul.f32 %v2455, 0.1
  %v2520 = vmul.f32 %v2456, 0.1
  %v2521 = vmul.f32 %v2457, 0.1
  %v2522 = vmul.f32 %v2458, 0.1
  %v2523 = vmul.f32 %v2459, 0.1
  %v2524 = vmul.f32 %v2460, 0.1
  %v2525 = vmul.f32 %v2461, 0.1
  %v2526 = vmul.f32 %v2462, 0.1
  %v2527 = vmul.f32 %v2463, 0.1
  %v2528 = vmul.f32 %v2464, 0.1
  %v2529 = vmul.f32 %v2465, 0.1
  %v2530 = vmul.f32 %v2466, 0.1
  %v2531 = vmul.f32 %v2467, 0.1
  %v2532 = vsel %vm2468, %v2436, %v2500
  %v2533 = vsel %vm2469, %v2437, %v2501
  %v2534 = vsel %vm2470, %v2438, %v2502
  %v2535 = vsel %vm2471, %v2439, %v2503
  %v2536 = vsel %vm2472, %v2440, %v2504
  %v2537 = vsel %vm2473, %v2441, %v2505
  %v2538 = vsel %vm2474, %v2442, %v2506
  %v2539 = vsel %vm2475, %v2443, %v2507
  %v2540 = vsel %vm2476, %v2444, %v2508
  %v2541 = vsel %vm2477, %v2445, %v2509
  %v2542 = vsel %vm2478, %v2446, %v2510
  %v2543 = vsel %vm2479, %v2447, %v2511
  %v2544 = vsel %vm2480, %v2448, %v2512
  %v2545 = vsel %vm2481, %v2449, %v2513
  %v2546 = vsel %vm2482, %v2450, %v2514
  %v2547 = vsel %vm2483, %v2451, %v2515
  %v2548 = vsel %vm2484, %v2452, %v2516
  %v2549 = vsel %vm2485, %v2453, %v2517
  %v2550 = vsel %vm2486, %v2454, %v2518
  %v2551 = vsel %vm2487, %v2455, %v2519
  %v2552 = vsel %vm2488, %v2456, %v2520
  %v2553 = vsel %vm2489, %v2457, %v2521
  %v2554 = vsel %vm2490, %v2458, %v2522
  %v2555 = vsel %vm2491, %v2459, %v2523
  %v2556 = vsel %vm2492, %v2460, %v2524
  %v2557 = vsel %vm2493, %v2461, %v2525
  %v2558 = vsel %vm2494, %v2462, %v2526
  %v2559 = vsel %vm2495, %v2463, %v2527
  %v2560 = vsel %vm2496, %v2464, %v2528
  %v2561 = vsel %vm2497, %v2465, %v2529
  %v2562 = vsel %vm2498, %v2466, %v2530
  %v2563 = vsel %vm2499, %v2467, %v2531
  %v2564 = vld [vmem:[%s10] sm:$0xff]
  %v2565 = vld [vmem:[%s10 + $0x8] sm:$0xff]
  %v2566 = vld [vmem:[%s10 + $0x10] sm:$0xff]
  %v2567 = vld [vmem:[%s10 + $0x18] sm:$0xff]
  %v2568 = vld [vmem:[%s10 + $0x20] sm:$0xff]
  %v2569 = vld [vmem:[%s10 + $0x28] sm:$0xff]
  %v2570 = vld [vmem:[%s10 + $0x30] sm:$0xff]
  %v2571 = vld [vmem:[%s10 + $0x38] sm:$0xff]
  %v2572 = vld [vmem:[%s10 + $0x40] sm:$0xff]
  %v2573 = vld [vmem:[%s10 + $0x48] sm:$0xff]
  %v2574 = vld [vmem:[%s10 + $0x50] sm:$0xff]
  %v2575 = vld [vmem:[%s10 + $0x58] sm:$0xff]
  %v2576 = vld [vmem:[%s10 + $0x60] sm:$0xff]
  %v2577 = vld [vmem:[%s10 + $0x68] sm:$0xff]
  %v2578 = vld [vmem:[%s10 + $0x70] sm:$0xff]
  %v2579 = vld [vmem:[%s10 + $0x78] sm:$0xff]
  %v2580 = vld [vmem:[%s10 + $0x80] sm:$0xff]
  %v2581 = vld [vmem:[%s10 + $0x88] sm:$0xff]
  %v2582 = vld [vmem:[%s10 + $0x90] sm:$0xff]
  %v2583 = vld [vmem:[%s10 + $0x98] sm:$0xff]
  %v2584 = vld [vmem:[%s10 + $0xa0] sm:$0xff]
  %v2585 = vld [vmem:[%s10 + $0xa8] sm:$0xff]
  %v2586 = vld [vmem:[%s10 + $0xb0] sm:$0xff]
  %v2587 = vld [vmem:[%s10 + $0xb8] sm:$0xff]
  %v2588 = vld [vmem:[%s10 + $0xc0] sm:$0xff]
  %v2589 = vld [vmem:[%s10 + $0xc8] sm:$0xff]
  %v2590 = vld [vmem:[%s10 + $0xd0] sm:$0xff]
  %v2591 = vld [vmem:[%s10 + $0xd8] sm:$0xff]
  %v2592 = vld [vmem:[%s10 + $0xe0] sm:$0xff]
  %v2593 = vld [vmem:[%s10 + $0xe8] sm:$0xff]
  %v2594 = vld [vmem:[%s10 + $0xf0] sm:$0xff]
  %v2595 = vld [vmem:[%s10 + $0xf8] sm:$0xff]
  %v2596 = vld [vmem:[%s10 + $0x100] sm:$0xff]
  %v2597 = vld [vmem:[%s10 + $0x108] sm:$0xff]
  %v2598 = vld [vmem:[%s10 + $0x110] sm:$0xff]
  %v2599 = vld [vmem:[%s10 + $0x118] sm:$0xff]
  %v2600 = vld [vmem:[%s10 + $0x120] sm:$0xff]
  %v2601 = vld [vmem:[%s10 + $0x128] sm:$0xff]
  %v2602 = vld [vmem:[%s10 + $0x130] sm:$0xff]
  %v2603 = vld [vmem:[%s10 + $0x138] sm:$0xff]
  %v2604 = vld [vmem:[%s10 + $0x140] sm:$0xff]
  %v2605 = vld [vmem:[%s10 + $0x148] sm:$0xff]
  %v2606 = vld [vmem:[%s10 + $0x150] sm:$0xff]
  %v2607 = vld [vmem:[%s10 + $0x158] sm:$0xff]
  %v2608 = vld [vmem:[%s10 + $0x160] sm:$0xff]
  %v2609 = vld [vmem:[%s10 + $0x168] sm:$0xff]
  %v2610 = vld [vmem:[%s10 + $0x170] sm:$0xff]
  %v2611 = vld [vmem:[%s10 + $0x178] sm:$0xff]
  %v2612 = vld [vmem:[%s10 + $0x180] sm:$0xff]
  %v2613 = vld [vmem:[%s10 + $0x188] sm:$0xff]
  %v2614 = vld [vmem:[%s10 + $0x190] sm:$0xff]
  %v2615 = vld [vmem:[%s10 + $0x198] sm:$0xff]
  %v2616 = vld [vmem:[%s10 + $0x1a0] sm:$0xff]
  %v2617 = vld [vmem:[%s10 + $0x1a8] sm:$0xff]
  %v2618 = vld [vmem:[%s10 + $0x1b0] sm:$0xff]
  %v2619 = vld [vmem:[%s10 + $0x1b8] sm:$0xff]
  %v2620 = vld [vmem:[%s10 + $0x1c0] sm:$0xff]
  %v2621 = vld [vmem:[%s10 + $0x1c8] sm:$0xff]
  %v2622 = vld [vmem:[%s10 + $0x1d0] sm:$0xff]
  %v2623 = vld [vmem:[%s10 + $0x1d8] sm:$0xff]
  %v2624 = vld [vmem:[%s10 + $0x1e0] sm:$0xff]
  %v2625 = vld [vmem:[%s10 + $0x1e8] sm:$0xff]
  %v2626 = vld [vmem:[%s10 + $0x1f0] sm:$0xff]
  %v2627 = vld [vmem:[%s10 + $0x1f8] sm:$0xff]
  %v2628 = vld [vmem:[%s11] sm:$0x3]
  %v2630 = vperm.slane %v2628, 0
  %v2631 = vperm.slane %v2628, 1
  %2634 = vmatpush.msra.mxu0 %v2594
  %2635 = vmatpush.msra.mxu0 %v2592
  %2636 = vmatpush.msra.mxu0 %v2590
  %2637 = vmatpush.msra.mxu0 %v2588
  %2638 = vmatpush.msra.mxu0 %v2586
  %2639 = vmatpush.msra.mxu0 %v2584
  %2640 = vmatpush.msra.mxu0 %v2582
  %2641 = vmatpush.msra.mxu0 %v2580
  %2642 = vmatpush.msra.mxu0 %v2578
  %2643 = vmatpush.msra.mxu0 %v2576
  %2644 = vmatpush.msra.mxu0 %v2574
  %2645 = vmatpush.msra.mxu0 %v2572
  %2646 = vmatpush.msra.mxu0 %v2570
  %2647 = vmatpush.msra.mxu0 %v2568
  %2648 = vmatpush.msra.mxu0 %v2566
  %2649 = vmatpush.msra.mxu0 %v2564
  %2650 = vmatmul.f32.gmra.mxu0 %v2532
  %v2651 = vpop.f32.mrf.mxu0
  %v2652 = vadd.f32 %v2630, %v2651
  %2653 = vmatmul.f32.gmra.mxu0 %v2534
  %v2654 = vpop.f32.mrf.mxu0
  %v2655 = vadd.f32 %v2630, %v2654
  %2656 = vmatmul.f32.gmra.mxu0 %v2536
  %v2657 = vpop.f32.mrf.mxu0
  %v2658 = vadd.f32 %v2630, %v2657
  %2659 = vmatmul.f32.gmra.mxu0 %v2538
  %v2660 = vpop.f32.mrf.mxu0
  %v2661 = vadd.f32 %v2630, %v2660
  %2662 = vmatmul.f32.gmra.mxu0 %v2540
  %v2663 = vpop.f32.mrf.mxu0
  %v2664 = vadd.f32 %v2630, %v2663
  %2665 = vmatmul.f32.gmra.mxu0 %v2542
  %v2666 = vpop.f32.mrf.mxu0
  %v2667 = vadd.f32 %v2630, %v2666
  %2668 = vmatmul.f32.gmra.mxu0 %v2544
  %v2669 = vpop.f32.mrf.mxu0
  %v2670 = vadd.f32 %v2630, %v2669
  %2671 = vmatmul.f32.gmra.mxu0 %v2546
  %v2672 = vpop.f32.mrf.mxu0
  %v2673 = vadd.f32 %v2630, %v2672
  %2674 = vmatmul.f32.gmra.mxu0 %v2548
  %v2675 = vpop.f32.mrf.mxu0
  %v2676 = vadd.f32 %v2630, %v2675
  %2677 = vmatmul.f32.gmra.mxu0 %v2550
  %v2678 = vpop.f32.mrf.mxu0
  %v2679 = vadd.f32 %v2630, %v2678
  %2680 = vmatmul.f32.gmra.mxu0 %v2552
  %v2681 = vpop.f32.mrf.mxu0
  %v2682 = vadd.f32 %v2630, %v2681
  %2683 = vmatmul.f32.gmra.mxu0 %v2554
  %v2684 = vpop.f32.mrf.mxu0
  %v2685 = vadd.f32 %v2630, %v2684
  %2686 = vmatmul.f32.gmra.mxu0 %v2556
  %v2687 = vpop.f32.mrf.mxu0
  %v2688 = vadd.f32 %v2630, %v2687
  %2689 = vmatmul.f32.gmra.mxu0 %v2558
  %v2690 = vpop.f32.mrf.mxu0
  %v2691 = vadd.f32 %v2630, %v2690
  %2692 = vmatmul.f32.gmra.mxu0 %v2560
  %v2693 = vpop.f32.mrf.mxu0
  %v2694 = vadd.f32 %v2630, %v2693
  %2695 = vmatmul.f32.gmra.mxu0 %v2562
  %v2696 = vpop.f32.mrf.mxu0
  %v2697 = vadd.f32 %v2630, %v2696
  %2698 = vdwg.mxu0
  %2699 = vmatpush.msra.mxu0 %v2626
  %2700 = vmatpush.msra.mxu0 %v2624
  %2701 = vmatpush.msra.mxu0 %v2622
  %2702 = vmatpush.msra.mxu0 %v2620
  %2703 = vmatpush.msra.mxu0 %v2618
  %2704 = vmatpush.msra.mxu0 %v2616
  %2705 = vmatpush.msra.mxu0 %v2614
  %2706 = vmatpush.msra.mxu0 %v2612
  %2707 = vmatpush.msra.mxu0 %v2610
  %2708 = vmatpush.msra.mxu0 %v2608
  %2709 = vmatpush.msra.mxu0 %v2606
  %2710 = vmatpush.msra.mxu0 %v2604
  %2711 = vmatpush.msra.mxu0 %v2602
  %2712 = vmatpush.msra.mxu0 %v2600
  %2713 = vmatpush.msra.mxu0 %v2598
  %2714 = vmatpush.msra.mxu0 %v2596
  %2715 = vmatmul.f32.gmra.mxu0 %v2533
  %v2716 = vpop.f32.mrf.mxu0
  %v2717 = vadd.f32 %v2652, %v2716
  %2718 = vmatmul.f32.gmra.mxu0 %v2535
  %v2719 = vpop.f32.mrf.mxu0
  %v2720 = vadd.f32 %v2655, %v2719
  %2721 = vmatmul.f32.gmra.mxu0 %v2537
  %v2722 = vpop.f32.mrf.mxu0
  %v2723 = vadd.f32 %v2658, %v2722
  %2724 = vmatmul.f32.gmra.mxu0 %v2539
  %v2725 = vpop.f32.mrf.mxu0
  %v2726 = vadd.f32 %v2661, %v2725
  %2727 = vmatmul.f32.gmra.mxu0 %v2541
  %v2728 = vpop.f32.mrf.mxu0
  %v2729 = vadd.f32 %v2664, %v2728
  %2730 = vmatmul.f32.gmra.mxu0 %v2543
  %v2731 = vpop.f32.mrf.mxu0
  %v2732 = vadd.f32 %v2667, %v2731
  %2733 = vmatmul.f32.gmra.mxu0 %v2545
  %v2734 = vpop.f32.mrf.mxu0
  %v2735 = vadd.f32 %v2670, %v2734
  %2736 = vmatmul.f32.gmra.mxu0 %v2547
  %v2737 = vpop.f32.mrf.mxu0
  %v2738 = vadd.f32 %v2673, %v2737
  %2739 = vmatmul.f32.gmra.mxu0 %v2549
  %v2740 = vpop.f32.mrf.mxu0
  %v2741 = vadd.f32 %v2676, %v2740
  %2742 = vmatmul.f32.gmra.mxu0 %v2551
  %v2743 = vpop.f32.mrf.mxu0
  %v2744 = vadd.f32 %v2679, %v2743
  %2745 = vmatmul.f32.gmra.mxu0 %v2553
  %v2746 = vpop.f32.mrf.mxu0
  %v2747 = vadd.f32 %v2682, %v2746
  %2748 = vmatmul.f32.gmra.mxu0 %v2555
  %v2749 = vpop.f32.mrf.mxu0
  %v2750 = vadd.f32 %v2685, %v2749
  %2751 = vmatmul.f32.gmra.mxu0 %v2557
  %v2752 = vpop.f32.mrf.mxu0
  %v2753 = vadd.f32 %v2688, %v2752
  %2754 = vmatmul.f32.gmra.mxu0 %v2559
  %v2755 = vpop.f32.mrf.mxu0
  %v2756 = vadd.f32 %v2691, %v2755
  %2757 = vmatmul.f32.gmra.mxu0 %v2561
  %v2758 = vpop.f32.mrf.mxu0
  %v2759 = vadd.f32 %v2694, %v2758
  %2760 = vmatmul.f32.gmra.mxu0 %v2563
  %v2761 = vpop.f32.mrf.mxu0
  %v2762 = vadd.f32 %v2697, %v2761
  %2763 = vdwg.mxu0
  %2764 = vmatpush.msra.mxu0 %v2595
  %2765 = vmatpush.msra.mxu0 %v2593
  %2766 = vmatpush.msra.mxu0 %v2591
  %2767 = vmatpush.msra.mxu0 %v2589
  %2768 = vmatpush.msra.mxu0 %v2587
  %2769 = vmatpush.msra.mxu0 %v2585
  %2770 = vmatpush.msra.mxu0 %v2583
  %2771 = vmatpush.msra.mxu0 %v2581
  %2772 = vmatpush.msra.mxu0 %v2579
  %2773 = vmatpush.msra.mxu0 %v2577
  %2774 = vmatpush.msra.mxu0 %v2575
  %2775 = vmatpush.msra.mxu0 %v2573
  %2776 = vmatpush.msra.mxu0 %v2571
  %2777 = vmatpush.msra.mxu0 %v2569
  %2778 = vmatpush.msra.mxu0 %v2567
  %2779 = vmatpush.msra.mxu0 %v2565
  %2780 = vmatmul.f32.gmra.mxu0 %v2532
  %v2781 = vpop.f32.mrf.mxu0
  %v2782 = vadd.f32 %v2631, %v2781
  %2783 = vmatmul.f32.gmra.mxu0 %v2534
  %v2784 = vpop.f32.mrf.mxu0
  %v2785 = vadd.f32 %v2631, %v2784
  %2786 = vmatmul.f32.gmra.mxu0 %v2536
  %v2787 = vpop.f32.mrf.mxu0
  %v2788 = vadd.f32 %v2631, %v2787
  %2789 = vmatmul.f32.gmra.mxu0 %v2538
  %v2790 = vpop.f32.mrf.mxu0
  %v2791 = vadd.f32 %v2631, %v2790
  %2792 = vmatmul.f32.gmra.mxu0 %v2540
  %v2793 = vpop.f32.mrf.mxu0
  %v2794 = vadd.f32 %v2631, %v2793
  %2795 = vmatmul.f32.gmra.mxu0 %v2542
  %v2796 = vpop.f32.mrf.mxu0
  %v2797 = vadd.f32 %v2631, %v2796
  %2798 = vmatmul.f32.gmra.mxu0 %v2544
  %v2799 = vpop.f32.mrf.mxu0
  %v2800 = vadd.f32 %v2631, %v2799
  %2801 = vmatmul.f32.gmra.mxu0 %v2546
  %v2802 = vpop.f32.mrf.mxu0
  %v2803 = vadd.f32 %v2631, %v2802
  %2804 = vmatmul.f32.gmra.mxu0 %v2548
  %v2805 = vpop.f32.mrf.mxu0
  %v2806 = vadd.f32 %v2631, %v2805
  %2807 = vmatmul.f32.gmra.mxu0 %v2550
  %v2808 = vpop.f32.mrf.mxu0
  %v2809 = vadd.f32 %v2631, %v2808
  %2810 = vmatmul.f32.gmra.mxu0 %v2552
  %v2811 = vpop.f32.mrf.mxu0
  %v2812 = vadd.f32 %v2631, %v2811
  %2813 = vmatmul.f32.gmra.mxu0 %v2554
  %v2814 = vpop.f32.mrf.mxu0
  %v2815 = vadd.f32 %v2631, %v2814
  %2816 = vmatmul.f32.gmra.mxu0 %v2556
  %v2817 = vpop.f32.mrf.mxu0
  %v2818 = vadd.f32 %v2631, %v2817
  %2819 = vmatmul.f32.gmra.mxu0 %v2558
  %v2820 = vpop.f32.mrf.mxu0
  %v2821 = vadd.f32 %v2631, %v2820
  %2822 = vmatmul.f32.gmra.mxu0 %v2560
  %v2823 = vpop.f32.mrf.mxu0
  %v2824 = vadd.f32 %v2631, %v2823
  %2825 = vmatmul.f32.gmra.mxu0 %v2562
  %v2826 = vpop.f32.mrf.mxu0
  %v2827 = vadd.f32 %v2631, %v2826
  %2828 = vdwg.mxu0
  %2829 = vmatpush.msra.mxu0 %v2627
  %2830 = vmatpush.msra.mxu0 %v2625
  %2831 = vmatpush.msra.mxu0 %v2623
  %2832 = vmatpush.msra.mxu0 %v2621
  %2833 = vmatpush.msra.mxu0 %v2619
  %2834 = vmatpush.msra.mxu0 %v2617
  %2835 = vmatpush.msra.mxu0 %v2615
  %2836 = vmatpush.msra.mxu0 %v2613
  %2837 = vmatpush.msra.mxu0 %v2611
  %2838 = vmatpush.msra.mxu0 %v2609
  %2839 = vmatpush.msra.mxu0 %v2607
  %2840 = vmatpush.msra.mxu0 %v2605
  %2841 = vmatpush.msra.mxu0 %v2603
  %2842 = vmatpush.msra.mxu0 %v2601
  %2843 = vmatpush.msra.mxu0 %v2599
  %2844 = vmatpush.msra.mxu0 %v2597
  %2845 = vmatmul.f32.gmra.mxu0 %v2533
  %v2846 = vpop.f32.mrf.mxu0
  %v2847 = vadd.f32 %v2782, %v2846
  %2848 = vmatmul.f32.gmra.mxu0 %v2535
  %v2849 = vpop.f32.mrf.mxu0
  %v2850 = vadd.f32 %v2785, %v2849
  %2851 = vmatmul.f32.gmra.mxu0 %v2537
  %v2852 = vpop.f32.mrf.mxu0
  %v2853 = vadd.f32 %v2788, %v2852
  %2854 = vmatmul.f32.gmra.mxu0 %v2539
  %v2855 = vpop.f32.mrf.mxu0
  %v2856 = vadd.f32 %v2791, %v2855
  %2857 = vmatmul.f32.gmra.mxu0 %v2541
  %v2858 = vpop.f32.mrf.mxu0
  %v2859 = vadd.f32 %v2794, %v2858
  %2860 = vmatmul.f32.gmra.mxu0 %v2543
  %v2861 = vpop.f32.mrf.mxu0
  %v2862 = vadd.f32 %v2797, %v2861
  %2863 = vmatmul.f32.gmra.mxu0 %v2545
  %v2864 = vpop.f32.mrf.mxu0
  %v2865 = vadd.f32 %v2800, %v2864
  %2866 = vmatmul.f32.gmra.mxu0 %v2547
  %v2867 = vpop.f32.mrf.mxu0
  %v2868 = vadd.f32 %v2803, %v2867
  %2869 = vmatmul.f32.gmra.mxu0 %v2549
  %v2870 = vpop.f32.mrf.mxu0
  %v2871 = vadd.f32 %v2806, %v2870
  %2872 = vmatmul.f32.gmra.mxu0 %v2551
  %v2873 = vpop.f32.mrf.mxu0
  %v2874 = vadd.f32 %v2809, %v2873
  %2875 = vmatmul.f32.gmra.mxu0 %v2553
  %v2876 = vpop.f32.mrf.mxu0
  %v2877 = vadd.f32 %v2812, %v2876
  %2878 = vmatmul.f32.gmra.mxu0 %v2555
  %v2879 = vpop.f32.mrf.mxu0
  %v2880 = vadd.f32 %v2815, %v2879
  %2881 = vmatmul.f32.gmra.mxu0 %v2557
  %v2882 = vpop.f32.mrf.mxu0
  %v2883 = vadd.f32 %v2818, %v2882
  %2884 = vmatmul.f32.gmra.mxu0 %v2559
  %v2885 = vpop.f32.mrf.mxu0
  %v2886 = vadd.f32 %v2821, %v2885
  %2887 = vmatmul.f32.gmra.mxu0 %v2561
  %v2888 = vpop.f32.mrf.mxu0
  %v2889 = vadd.f32 %v2824, %v2888
  %2890 = vmatmul.f32.gmra.mxu0 %v2563
  %v2891 = vpop.f32.mrf.mxu0
  %v2892 = vadd.f32 %v2827, %v2891
  %2893 = vdwg.mxu0
  %v2894 = vmax.f32 %v2847, -10.0
  %v2895 = vmax.f32 %v2850, -10.0
  %v2896 = vmax.f32 %v2853, -10.0
  %v2897 = vmax.f32 %v2856, -10.0
  %v2898 = vmax.f32 %v2859, -10.0
  %v2899 = vmax.f32 %v2862, -10.0
  %v2900 = vmax.f32 %v2865, -10.0
  %v2901 = vmax.f32 %v2868, -10.0
  %v2902 = vmax.f32 %v2871, -10.0
  %v2903 = vmax.f32 %v2874, -10.0
  %v2904 = vmax.f32 %v2877, -10.0
  %v2905 = vmax.f32 %v2880, -10.0
  %v2906 = vmax.f32 %v2883, -10.0
  %v2907 = vmax.f32 %v2886, -10.0
  %v2908 = vmax.f32 %v2889, -10.0
  %v2909 = vmax.f32 %v2892, -10.0
  %v2910 = vmin.f32 %v2894, 10.0
  %v2911 = vmin.f32 %v2895, 10.0
  %v2912 = vmin.f32 %v2896, 10.0
  %v2913 = vmin.f32 %v2897, 10.0
  %v2914 = vmin.f32 %v2898, 10.0
  %v2915 = vmin.f32 %v2899, 10.0
  %v2916 = vmin.f32 %v2900, 10.0
  %v2917 = vmin.f32 %v2901, 10.0
  %v2918 = vmin.f32 %v2902, 10.0
  %v2919 = vmin.f32 %v2903, 10.0
  %v2920 = vmin.f32 %v2904, 10.0
  %v2921 = vmin.f32 %v2905, 10.0
  %v2922 = vmin.f32 %v2906, 10.0
  %v2923 = vmin.f32 %v2907, 10.0
  %v2924 = vmin.f32 %v2908, 10.0
  %v2925 = vmin.f32 %v2909, 10.0
  %v2926 = vld [vmem:[%s1] sm:$0xff]
  %v2927 = vld [vmem:[%s1 + $0x8] sm:$0xff]
  %v2928 = vld [vmem:[%s1 + $0x10] sm:$0xff]
  %v2929 = vld [vmem:[%s1 + $0x18] sm:$0xff]
  %v2930 = vld [vmem:[%s1 + $0x20] sm:$0xff]
  %v2931 = vld [vmem:[%s1 + $0x28] sm:$0xff]
  %v2932 = vld [vmem:[%s1 + $0x30] sm:$0xff]
  %v2933 = vld [vmem:[%s1 + $0x38] sm:$0xff]
  %v2934 = vld [vmem:[%s1 + $0x40] sm:$0xff]
  %v2935 = vld [vmem:[%s1 + $0x48] sm:$0xff]
  %v2936 = vld [vmem:[%s1 + $0x50] sm:$0xff]
  %v2937 = vld [vmem:[%s1 + $0x58] sm:$0xff]
  %v2938 = vld [vmem:[%s1 + $0x60] sm:$0xff]
  %v2939 = vld [vmem:[%s1 + $0x68] sm:$0xff]
  %v2940 = vld [vmem:[%s1 + $0x70] sm:$0xff]
  %v2941 = vld [vmem:[%s1 + $0x78] sm:$0xff]
  %v2942 = vmul.f32 %v2910, 0.5
  %v2943 = vmul.f32 %v2911, 0.5
  %v2944 = vmul.f32 %v2912, 0.5
  %v2945 = vmul.f32 %v2913, 0.5
  %v2946 = vmul.f32 %v2914, 0.5
  %v2947 = vmul.f32 %v2915, 0.5
  %v2948 = vmul.f32 %v2916, 0.5
  %v2949 = vmul.f32 %v2917, 0.5
  %v2950 = vmul.f32 %v2918, 0.5
  %v2951 = vmul.f32 %v2919, 0.5
  %v2952 = vmul.f32 %v2920, 0.5
  %v2953 = vmul.f32 %v2921, 0.5
  %v2954 = vmul.f32 %v2922, 0.5
  %v2955 = vmul.f32 %v2923, 0.5
  %v2956 = vmul.f32 %v2924, 0.5
  %v2957 = vmul.f32 %v2925, 0.5
  %v2958 = vmul.f32 %v2942, 1.442695
  %v2959 = vpow.pop %v2958
  %v2960 = vmul.f32 %v2943, 1.442695
  %v2961 = vpow.pop %v2960
  %v2962 = vmul.f32 %v2944, 1.442695
  %v2963 = vpow.pop %v2962
  %v2964 = vmul.f32 %v2945, 1.442695
  %v2965 = vpow.pop %v2964
  %v2966 = vmul.f32 %v2946, 1.442695
  %v2967 = vpow.pop %v2966
  %v2968 = vmul.f32 %v2947, 1.442695
  %v2969 = vpow.pop %v2968
  %v2970 = vmul.f32 %v2948, 1.442695
  %v2971 = vpow.pop %v2970
  %v2972 = vmul.f32 %v2949, 1.442695
  %v2973 = vpow.pop %v2972
  %v2974 = vmul.f32 %v2950, 1.442695
  %v2975 = vpow.pop %v2974
  %v2976 = vmul.f32 %v2951, 1.442695
  %v2977 = vpow.pop %v2976
  %v2978 = vmul.f32 %v2952, 1.442695
  %v2979 = vpow.pop %v2978
  %v2980 = vmul.f32 %v2953, 1.442695
  %v2981 = vpow.pop %v2980
  %v2982 = vmul.f32 %v2954, 1.442695
  %v2983 = vpow.pop %v2982
  %v2984 = vmul.f32 %v2955, 1.442695
  %v2985 = vpow.pop %v2984
  %v2986 = vmul.f32 %v2956, 1.442695
  %v2987 = vpow.pop %v2986
  %v2988 = vmul.f32 %v2957, 1.442695
  %v2989 = vpow.pop %v2988
  %v2990 = vmul.f32 %v2926, %v2959
  %v2991 = vmul.f32 %v2927, %v2961
  %v2992 = vmul.f32 %v2928, %v2963
  %v2993 = vmul.f32 %v2929, %v2965
  %v2994 = vmul.f32 %v2930, %v2967
  %v2995 = vmul.f32 %v2931, %v2969
  %v2996 = vmul.f32 %v2932, %v2971
  %v2997 = vmul.f32 %v2933, %v2973
  %v2998 = vmul.f32 %v2934, %v2975
  %v2999 = vmul.f32 %v2935, %v2977
  %v3000 = vmul.f32 %v2936, %v2979
  %v3001 = vmul.f32 %v2937, %v2981
  %v3002 = vmul.f32 %v2938, %v2983
  %v3003 = vmul.f32 %v2939, %v2985
  %v3004 = vmul.f32 %v2940, %v2987
  %v3005 = vmul.f32 %v2941, %v2989
  %v3006 = vadd.f32 %v2717, %v2990
  %v3007 = vadd.f32 %v2720, %v2991
  %v3008 = vadd.f32 %v2723, %v2992
  %v3009 = vadd.f32 %v2726, %v2993
  %v3010 = vadd.f32 %v2729, %v2994
  %v3011 = vadd.f32 %v2732, %v2995
  %v3012 = vadd.f32 %v2735, %v2996
  %v3013 = vadd.f32 %v2738, %v2997
  %v3014 = vadd.f32 %v2741, %v2998
  %v3015 = vadd.f32 %v2744, %v2999
  %v3016 = vadd.f32 %v2747, %v3000
  %v3017 = vadd.f32 %v2750, %v3001
  %v3018 = vadd.f32 %v2753, %v3002
  %v3019 = vadd.f32 %v2756, %v3003
  %v3020 = vadd.f32 %v2759, %v3004
  %v3021 = vadd.f32 %v2762, %v3005
  %v3022 = vld [vmem:[%s12] sm:$0xff]
  %v3023 = vld [vmem:[%s12 + $0x8] sm:$0xff]
  %v3024 = vld [vmem:[%s12 + $0x10] sm:$0xff]
  %v3025 = vld [vmem:[%s12 + $0x18] sm:$0xff]
  %v3026 = vld [vmem:[%s12 + $0x20] sm:$0xff]
  %v3027 = vld [vmem:[%s12 + $0x28] sm:$0xff]
  %v3028 = vld [vmem:[%s12 + $0x30] sm:$0xff]
  %v3029 = vld [vmem:[%s12 + $0x38] sm:$0xff]
  %v3030 = vld [vmem:[%s12 + $0x40] sm:$0xff]
  %v3031 = vld [vmem:[%s12 + $0x48] sm:$0xff]
  %v3032 = vld [vmem:[%s12 + $0x50] sm:$0xff]
  %v3033 = vld [vmem:[%s12 + $0x58] sm:$0xff]
  %v3034 = vld [vmem:[%s12 + $0x60] sm:$0xff]
  %v3035 = vld [vmem:[%s12 + $0x68] sm:$0xff]
  %v3036 = vld [vmem:[%s12 + $0x70] sm:$0xff]
  %v3037 = vld [vmem:[%s12 + $0x78] sm:$0xff]
  %v3038 = vld [vmem:[%s12 + $0x80] sm:$0xff]
  %v3039 = vld [vmem:[%s12 + $0x88] sm:$0xff]
  %v3040 = vld [vmem:[%s12 + $0x90] sm:$0xff]
  %v3041 = vld [vmem:[%s12 + $0x98] sm:$0xff]
  %v3042 = vld [vmem:[%s12 + $0xa0] sm:$0xff]
  %v3043 = vld [vmem:[%s12 + $0xa8] sm:$0xff]
  %v3044 = vld [vmem:[%s12 + $0xb0] sm:$0xff]
  %v3045 = vld [vmem:[%s12 + $0xb8] sm:$0xff]
  %v3046 = vld [vmem:[%s12 + $0xc0] sm:$0xff]
  %v3047 = vld [vmem:[%s12 + $0xc8] sm:$0xff]
  %v3048 = vld [vmem:[%s12 + $0xd0] sm:$0xff]
  %v3049 = vld [vmem:[%s12 + $0xd8] sm:$0xff]
  %v3050 = vld [vmem:[%s12 + $0xe0] sm:$0xff]
  %v3051 = vld [vmem:[%s12 + $0xe8] sm:$0xff]
  %v3052 = vld [vmem:[%s12 + $0xf0] sm:$0xff]
  %v3053 = vld [vmem:[%s12 + $0xf8] sm:$0xff]
  %v3054 = vld [vmem:[%s13] sm:$0x3]
  %v3056 = vperm.slane %v3054, 0
  %v3057 = vperm.slane %v3054, 1
  %3060 = vmatpush.msra.mxu0 %v3052
  %3061 = vmatpush.msra.mxu0 %v3050
  %3062 = vmatpush.msra.mxu0 %v3048
  %3063 = vmatpush.msra.mxu0 %v3046
  %3064 = vmatpush.msra.mxu0 %v3044
  %3065 = vmatpush.msra.mxu0 %v3042
  %3066 = vmatpush.msra.mxu0 %v3040
  %3067 = vmatpush.msra.mxu0 %v3038
  %3068 = vmatpush.msra.mxu0 %v3036
  %3069 = vmatpush.msra.mxu0 %v3034
  %3070 = vmatpush.msra.mxu0 %v3032
  %3071 = vmatpush.msra.mxu0 %v3030
  %3072 = vmatpush.msra.mxu0 %v3028
  %3073 = vmatpush.msra.mxu0 %v3026
  %3074 = vmatpush.msra.mxu0 %v3024
  %3075 = vmatpush.msra.mxu0 %v3022
  %3076 = vmatmul.f32.gmra.mxu0 %v3006
  %v3077 = vpop.f32.mrf.mxu0
  %v3078 = vadd.f32 %v3056, %v3077
  %3079 = vmatmul.f32.gmra.mxu0 %v3007
  %v3080 = vpop.f32.mrf.mxu0
  %v3081 = vadd.f32 %v3056, %v3080
  %3082 = vmatmul.f32.gmra.mxu0 %v3008
  %v3083 = vpop.f32.mrf.mxu0
  %v3084 = vadd.f32 %v3056, %v3083
  %3085 = vmatmul.f32.gmra.mxu0 %v3009
  %v3086 = vpop.f32.mrf.mxu0
  %v3087 = vadd.f32 %v3056, %v3086
  %3088 = vmatmul.f32.gmra.mxu0 %v3010
  %v3089 = vpop.f32.mrf.mxu0
  %v3090 = vadd.f32 %v3056, %v3089
  %3091 = vmatmul.f32.gmra.mxu0 %v3011
  %v3092 = vpop.f32.mrf.mxu0
  %v3093 = vadd.f32 %v3056, %v3092
  %3094 = vmatmul.f32.gmra.mxu0 %v3012
  %v3095 = vpop.f32.mrf.mxu0
  %v3096 = vadd.f32 %v3056, %v3095
  %3097 = vmatmul.f32.gmra.mxu0 %v3013
  %v3098 = vpop.f32.mrf.mxu0
  %v3099 = vadd.f32 %v3056, %v3098
  %3100 = vmatmul.f32.gmra.mxu0 %v3014
  %v3101 = vpop.f32.mrf.mxu0
  %v3102 = vadd.f32 %v3056, %v3101
  %3103 = vmatmul.f32.gmra.mxu0 %v3015
  %v3104 = vpop.f32.mrf.mxu0
  %v3105 = vadd.f32 %v3056, %v3104
  %3106 = vmatmul.f32.gmra.mxu0 %v3016
  %v3107 = vpop.f32.mrf.mxu0
  %v3108 = vadd.f32 %v3056, %v3107
  %3109 = vmatmul.f32.gmra.mxu0 %v3017
  %v3110 = vpop.f32.mrf.mxu0
  %v3111 = vadd.f32 %v3056, %v3110
  %3112 = vmatmul.f32.gmra.mxu0 %v3018
  %v3113 = vpop.f32.mrf.mxu0
  %v3114 = vadd.f32 %v3056, %v3113
  %3115 = vmatmul.f32.gmra.mxu0 %v3019
  %v3116 = vpop.f32.mrf.mxu0
  %v3117 = vadd.f32 %v3056, %v3116
  %3118 = vmatmul.f32.gmra.mxu0 %v3020
  %v3119 = vpop.f32.mrf.mxu0
  %v3120 = vadd.f32 %v3056, %v3119
  %3121 = vmatmul.f32.gmra.mxu0 %v3021
  %v3122 = vpop.f32.mrf.mxu0
  %v3123 = vadd.f32 %v3056, %v3122
  %3124 = vdwg.mxu0
  %3125 = vmatpush.msra.mxu0 %v3053
  %3126 = vmatpush.msra.mxu0 %v3051
  %3127 = vmatpush.msra.mxu0 %v3049
  %3128 = vmatpush.msra.mxu0 %v3047
  %3129 = vmatpush.msra.mxu0 %v3045
  %3130 = vmatpush.msra.mxu0 %v3043
  %3131 = vmatpush.msra.mxu0 %v3041
  %3132 = vmatpush.msra.mxu0 %v3039
  %3133 = vmatpush.msra.mxu0 %v3037
  %3134 = vmatpush.msra.mxu0 %v3035
  %3135 = vmatpush.msra.mxu0 %v3033
  %3136 = vmatpush.msra.mxu0 %v3031
  %3137 = vmatpush.msra.mxu0 %v3029
  %3138 = vmatpush.msra.mxu0 %v3027
  %3139 = vmatpush.msra.mxu0 %v3025
  %3140 = vmatpush.msra.mxu0 %v3023
  %3141 = vmatmul.f32.gmra.mxu0 %v3006
  %v3142 = vpop.f32.mrf.mxu0
  %v3143 = vadd.f32 %v3057, %v3142
  %3144 = vmatmul.f32.gmra.mxu0 %v3007
  %v3145 = vpop.f32.mrf.mxu0
  %v3146 = vadd.f32 %v3057, %v3145
  %3147 = vmatmul.f32.gmra.mxu0 %v3008
  %v3148 = vpop.f32.mrf.mxu0
  %v3149 = vadd.f32 %v3057, %v3148
  %3150 = vmatmul.f32.gmra.mxu0 %v3009
  %v3151 = vpop.f32.mrf.mxu0
  %v3152 = vadd.f32 %v3057, %v3151
  %3153 = vmatmul.f32.gmra.mxu0 %v3010
  %v3154 = vpop.f32.mrf.mxu0
  %v3155 = vadd.f32 %v3057, %v3154
  %3156 = vmatmul.f32.gmra.mxu0 %v3011
  %v3157 = vpop.f32.mrf.mxu0
  %v3158 = vadd.f32 %v3057, %v3157
  %3159 = vmatmul.f32.gmra.mxu0 %v3012
  %v3160 = vpop.f32.mrf.mxu0
  %v3161 = vadd.f32 %v3057, %v3160
  %3162 = vmatmul.f32.gmra.mxu0 %v3013
  %v3163 = vpop.f32.mrf.mxu0
  %v3164 = vadd.f32 %v3057, %v3163
  %3165 = vmatmul.f32.gmra.mxu0 %v3014
  %v3166 = vpop.f32.mrf.mxu0
  %v3167 = vadd.f32 %v3057, %v3166
  %3168 = vmatmul.f32.gmra.mxu0 %v3015
  %v3169 = vpop.f32.mrf.mxu0
  %v3170 = vadd.f32 %v3057, %v3169
  %3171 = vmatmul.f32.gmra.mxu0 %v3016
  %v3172 = vpop.f32.mrf.mxu0
  %v3173 = vadd.f32 %v3057, %v3172
  %3174 = vmatmul.f32.gmra.mxu0 %v3017
  %v3175 = vpop.f32.mrf.mxu0
  %v3176 = vadd.f32 %v3057, %v3175
  %3177 = vmatmul.f32.gmra.mxu0 %v3018
  %v3178 = vpop.f32.mrf.mxu0
  %v3179 = vadd.f32 %v3057, %v3178
  %3180 = vmatmul.f32.gmra.mxu0 %v3019
  %v3181 = vpop.f32.mrf.mxu0
  %v3182 = vadd.f32 %v3057, %v3181
  %3183 = vmatmul.f32.gmra.mxu0 %v3020
  %v3184 = vpop.f32.mrf.mxu0
  %v3185 = vadd.f32 %v3057, %v3184
  %3186 = vmatmul.f32.gmra.mxu0 %v3021
  %v3187 = vpop.f32.mrf.mxu0
  %v3188 = vadd.f32 %v3057, %v3187
  %3189 = vdwg.mxu0
  %v3190 = vld [vmem:[%s14] sm:$0x3]
  %v3191 = vld [vmem:[%s15] sm:$0x3]
  %v3192 = vadd.f32 %v3078, %v3143
  %3193 = vadd.xlane.f32.xlu0 %v3192
  %v3194 = vpop.xlane.xlu0 %3193
  %v3195 = vadd.f32 %v3081, %v3146
  %3196 = vadd.xlane.f32.xlu0 %v3195
  %v3197 = vpop.xlane.xlu0 %3196
  %v3198 = vadd.f32 %v3084, %v3149
  %3199 = vadd.xlane.f32.xlu0 %v3198
  %v3200 = vpop.xlane.xlu0 %3199
  %v3201 = vadd.f32 %v3087, %v3152
  %3202 = vadd.xlane.f32.xlu0 %v3201
  %v3203 = vpop.xlane.xlu0 %3202
  %v3204 = vadd.f32 %v3090, %v3155
  %3205 = vadd.xlane.f32.xlu0 %v3204
  %v3206 = vpop.xlane.xlu0 %3205
  %v3207 = vadd.f32 %v3093, %v3158
  %3208 = vadd.xlane.f32.xlu0 %v3207
  %v3209 = vpop.xlane.xlu0 %3208
  %v3210 = vadd.f32 %v3096, %v3161
  %3211 = vadd.xlane.f32.xlu0 %v3210
  %v3212 = vpop.xlane.xlu0 %3211
  %v3213 = vadd.f32 %v3099, %v3164
  %3214 = vadd.xlane.f32.xlu0 %v3213
  %v3215 = vpop.xlane.xlu0 %3214
  %v3216 = vadd.f32 %v3102, %v3167
  %3217 = vadd.xlane.f32.xlu0 %v3216
  %v3218 = vpop.xlane.xlu0 %3217
  %v3219 = vadd.f32 %v3105, %v3170
  %3220 = vadd.xlane.f32.xlu0 %v3219
  %v3221 = vpop.xlane.xlu0 %3220
  %v3222 = vadd.f32 %v3108, %v3173
  %3223 = vadd.xlane.f32.xlu0 %v3222
  %v3224 = vpop.xlane.xlu0 %3223
  %v3225 = vadd.f32 %v3111, %v3176
  %3226 = vadd.xlane.f32.xlu0 %v3225
  %v3227 = vpop.xlane.xlu0 %3226
  %v3228 = vadd.f32 %v3114, %v3179
  %3229 = vadd.xlane.f32.xlu0 %v3228
  %v3230 = vpop.xlane.xlu0 %3229
  %v3231 = vadd.f32 %v3117, %v3182
  %3232 = vadd.xlane.f32.xlu0 %v3231
  %v3233 = vpop.xlane.xlu0 %3232
  %v3234 = vadd.f32 %v3120, %v3185
  %3235 = vadd.xlane.f32.xlu0 %v3234
  %v3236 = vpop.xlane.xlu0 %3235
  %v3237 = vadd.f32 %v3123, %v3188
  %3238 = vadd.xlane.f32.xlu0 %v3237
  %v3239 = vpop.xlane.xlu0 %3238
  %v3240 = vmul.f32 %v3194, %v2041
  %v3241 = vmul.f32 %v3197, %v2041
  %v3242 = vmul.f32 %v3200, %v2041
  %v3243 = vmul.f32 %v3203, %v2041
  %v3244 = vmul.f32 %v3206, %v2041
  %v3245 = vmul.f32 %v3209, %v2041
  %v3246 = vmul.f32 %v3212, %v2041
  %v3247 = vmul.f32 %v3215, %v2041
  %v3248 = vmul.f32 %v3218, %v2041
  %v3249 = vmul.f32 %v3221, %v2041
  %v3250 = vmul.f32 %v3224, %v2041
  %v3251 = vmul.f32 %v3227, %v2041
  %v3252 = vmul.f32 %v3230, %v2041
  %v3253 = vmul.f32 %v3233, %v2041
  %v3254 = vmul.f32 %v3236, %v2041
  %v3255 = vmul.f32 %v3239, %v2041
  %v3256 = vsub.f32 %v3078, %v3240
  %v3257 = vsub.f32 %v3143, %v3240
  %v3258 = vsub.f32 %v3081, %v3241
  %v3259 = vsub.f32 %v3146, %v3241
  %v3260 = vsub.f32 %v3084, %v3242
  %v3261 = vsub.f32 %v3149, %v3242
  %v3262 = vsub.f32 %v3087, %v3243
  %v3263 = vsub.f32 %v3152, %v3243
  %v3264 = vsub.f32 %v3090, %v3244
  %v3265 = vsub.f32 %v3155, %v3244
  %v3266 = vsub.f32 %v3093, %v3245
  %v3267 = vsub.f32 %v3158, %v3245
  %v3268 = vsub.f32 %v3096, %v3246
  %v3269 = vsub.f32 %v3161, %v3246
  %v3270 = vsub.f32 %v3099, %v3247
  %v3271 = vsub.f32 %v3164, %v3247
  %v3272 = vsub.f32 %v3102, %v3248
  %v3273 = vsub.f32 %v3167, %v3248
  %v3274 = vsub.f32 %v3105, %v3249
  %v3275 = vsub.f32 %v3170, %v3249
  %v3276 = vsub.f32 %v3108, %v3250
  %v3277 = vsub.f32 %v3173, %v3250
  %v3278 = vsub.f32 %v3111, %v3251
  %v3279 = vsub.f32 %v3176, %v3251
  %v3280 = vsub.f32 %v3114, %v3252
  %v3281 = vsub.f32 %v3179, %v3252
  %v3282 = vsub.f32 %v3117, %v3253
  %v3283 = vsub.f32 %v3182, %v3253
  %v3284 = vsub.f32 %v3120, %v3254
  %v3285 = vsub.f32 %v3185, %v3254
  %v3286 = vsub.f32 %v3123, %v3255
  %v3287 = vsub.f32 %v3188, %v3255
  %v3288 = vmul.f32 %v3256, %v3256
  %v3289 = vmul.f32 %v3257, %v3257
  %v3290 = vmul.f32 %v3258, %v3258
  %v3291 = vmul.f32 %v3259, %v3259
  %v3292 = vmul.f32 %v3260, %v3260
  %v3293 = vmul.f32 %v3261, %v3261
  %v3294 = vmul.f32 %v3262, %v3262
  %v3295 = vmul.f32 %v3263, %v3263
  %v3296 = vmul.f32 %v3264, %v3264
  %v3297 = vmul.f32 %v3265, %v3265
  %v3298 = vmul.f32 %v3266, %v3266
  %v3299 = vmul.f32 %v3267, %v3267
  %v3300 = vmul.f32 %v3268, %v3268
  %v3301 = vmul.f32 %v3269, %v3269
  %v3302 = vmul.f32 %v3270, %v3270
  %v3303 = vmul.f32 %v3271, %v3271
  %v3304 = vmul.f32 %v3272, %v3272
  %v3305 = vmul.f32 %v3273, %v3273
  %v3306 = vmul.f32 %v3274, %v3274
  %v3307 = vmul.f32 %v3275, %v3275
  %v3308 = vmul.f32 %v3276, %v3276
  %v3309 = vmul.f32 %v3277, %v3277
  %v3310 = vmul.f32 %v3278, %v3278
  %v3311 = vmul.f32 %v3279, %v3279
  %v3312 = vmul.f32 %v3280, %v3280
  %v3313 = vmul.f32 %v3281, %v3281
  %v3314 = vmul.f32 %v3282, %v3282
  %v3315 = vmul.f32 %v3283, %v3283
  %v3316 = vmul.f32 %v3284, %v3284
  %v3317 = vmul.f32 %v3285, %v3285
  %v3318 = vmul.f32 %v3286, %v3286
  %v3319 = vmul.f32 %v3287, %v3287
  %v3320 = vadd.f32 %v3288, %v3289
  %3321 = vadd.xlane.f32.xlu0 %v3320
  %v3322 = vpop.xlane.xlu0 %3321
  %v3323 = vadd.f32 %v3290, %v3291
  %3324 = vadd.xlane.f32.xlu0 %v3323
  %v3325 = vpop.xlane.xlu0 %3324
  %v3326 = vadd.f32 %v3292, %v3293
  %3327 = vadd.xlane.f32.xlu0 %v3326
  %v3328 = vpop.xlane.xlu0 %3327
  %v3329 = vadd.f32 %v3294, %v3295
  %3330 = vadd.xlane.f32.xlu0 %v3329
  %v3331 = vpop.xlane.xlu0 %3330
  %v3332 = vadd.f32 %v3296, %v3297
  %3333 = vadd.xlane.f32.xlu0 %v3332
  %v3334 = vpop.xlane.xlu0 %3333
  %v3335 = vadd.f32 %v3298, %v3299
  %3336 = vadd.xlane.f32.xlu0 %v3335
  %v3337 = vpop.xlane.xlu0 %3336
  %v3338 = vadd.f32 %v3300, %v3301
  %3339 = vadd.xlane.f32.xlu0 %v3338
  %v3340 = vpop.xlane.xlu0 %3339
  %v3341 = vadd.f32 %v3302, %v3303
  %3342 = vadd.xlane.f32.xlu0 %v3341
  %v3343 = vpop.xlane.xlu0 %3342
  %v3344 = vadd.f32 %v3304, %v3305
  %3345 = vadd.xlane.f32.xlu0 %v3344
  %v3346 = vpop.xlane.xlu0 %3345
  %v3347 = vadd.f32 %v3306, %v3307
  %3348 = vadd.xlane.f32.xlu0 %v3347
  %v3349 = vpop.xlane.xlu0 %3348
  %v3350 = vadd.f32 %v3308, %v3309
  %3351 = vadd.xlane.f32.xlu0 %v3350
  %v3352 = vpop.xlane.xlu0 %3351
  %v3353 = vadd.f32 %v3310, %v3311
  %3354 = vadd.xlane.f32.xlu0 %v3353
  %v3355 = vpop.xlane.xlu0 %3354
  %v3356 = vadd.f32 %v3312, %v3313
  %3357 = vadd.xlane.f32.xlu0 %v3356
  %v3358 = vpop.xlane.xlu0 %3357
  %v3359 = vadd.f32 %v3314, %v3315
  %3360 = vadd.xlane.f32.xlu0 %v3359
  %v3361 = vpop.xlane.xlu0 %3360
  %v3362 = vadd.f32 %v3316, %v3317
  %3363 = vadd.xlane.f32.xlu0 %v3362
  %v3364 = vpop.xlane.xlu0 %3363
  %v3365 = vadd.f32 %v3318, %v3319
  %3366 = vadd.xlane.f32.xlu0 %v3365
  %v3367 = vpop.xlane.xlu0 %3366
  %v3368 = vmul.f32 %v3322, %v2041
  %v3369 = vmul.f32 %v3325, %v2041
  %v3370 = vmul.f32 %v3328, %v2041
  %v3371 = vmul.f32 %v3331, %v2041
  %v3372 = vmul.f32 %v3334, %v2041
  %v3373 = vmul.f32 %v3337, %v2041
  %v3374 = vmul.f32 %v3340, %v2041
  %v3375 = vmul.f32 %v3343, %v2041
  %v3376 = vmul.f32 %v3346, %v2041
  %v3377 = vmul.f32 %v3349, %v2041
  %v3378 = vmul.f32 %v3352, %v2041
  %v3379 = vmul.f32 %v3355, %v2041
  %v3380 = vmul.f32 %v3358, %v2041
  %v3381 = vmul.f32 %v3361, %v2041
  %v3382 = vmul.f32 %v3364, %v2041
  %v3383 = vmul.f32 %v3367, %v2041
  %v3384 = vadd.f32 %v3368, 1e-05
  %v3385 = vadd.f32 %v3369, 1e-05
  %v3386 = vadd.f32 %v3370, 1e-05
  %v3387 = vadd.f32 %v3371, 1e-05
  %v3388 = vadd.f32 %v3372, 1e-05
  %v3389 = vadd.f32 %v3373, 1e-05
  %v3390 = vadd.f32 %v3374, 1e-05
  %v3391 = vadd.f32 %v3375, 1e-05
  %v3392 = vadd.f32 %v3376, 1e-05
  %v3393 = vadd.f32 %v3377, 1e-05
  %v3394 = vadd.f32 %v3378, 1e-05
  %v3395 = vadd.f32 %v3379, 1e-05
  %v3396 = vadd.f32 %v3380, 1e-05
  %v3397 = vadd.f32 %v3381, 1e-05
  %v3398 = vadd.f32 %v3382, 1e-05
  %v3399 = vadd.f32 %v3383, 1e-05
  %v3400 = vrsqrt.pop %v3384
  %v3401 = vmul.f32 %v3400, %v3384
  %v3402 = vmul.f32 %v3401, %v3400
  %v3403 = vmul.f32 0.5, %v3402
  %v3404 = vsub.f32 1.5, %v3403
  %v3405 = vmul.f32 %v3400, %v3404
  %vm3406 = vweird.f32 %v3384
  %vm3407 = vweird.f32 %v3400
  %vm3408 = vmor %vm3406, %vm3407
  %v3409 = vsel %vm3408, %v3400, %v3405
  %v3410 = vrsqrt.pop %v3385
  %v3411 = vmul.f32 %v3410, %v3385
  %v3412 = vmul.f32 %v3411, %v3410
  %v3413 = vmul.f32 0.5, %v3412
  %v3414 = vsub.f32 1.5, %v3413
  %v3415 = vmul.f32 %v3410, %v3414
  %vm3416 = vweird.f32 %v3385
  %vm3417 = vweird.f32 %v3410
  %vm3418 = vmor %vm3416, %vm3417
  %v3419 = vsel %vm3418, %v3410, %v3415
  %v3420 = vrsqrt.pop %v3386
  %v3421 = vmul.f32 %v3420, %v3386
  %v3422 = vmul.f32 %v3421, %v3420
  %v3423 = vmul.f32 0.5, %v3422
  %v3424 = vsub.f32 1.5, %v3423
  %v3425 = vmul.f32 %v3420, %v3424
  %vm3426 = vweird.f32 %v3386
  %vm3427 = vweird.f32 %v3420
  %vm3428 = vmor %vm3426, %vm3427
  %v3429 = vsel %vm3428, %v3420, %v3425
  %v3430 = vrsqrt.pop %v3387
  %v3431 = vmul.f32 %v3430, %v3387
  %v3432 = vmul.f32 %v3431, %v3430
  %v3433 = vmul.f32 0.5, %v3432
  %v3434 = vsub.f32 1.5, %v3433
  %v3435 = vmul.f32 %v3430, %v3434
  %vm3436 = vweird.f32 %v3387
  %vm3437 = vweird.f32 %v3430
  %vm3438 = vmor %vm3436, %vm3437
  %v3439 = vsel %vm3438, %v3430, %v3435
  %v3440 = vrsqrt.pop %v3388
  %v3441 = vmul.f32 %v3440, %v3388
  %v3442 = vmul.f32 %v3441, %v3440
  %v3443 = vmul.f32 0.5, %v3442
  %v3444 = vsub.f32 1.5, %v3443
  %v3445 = vmul.f32 %v3440, %v3444
  %vm3446 = vweird.f32 %v3388
  %vm3447 = vweird.f32 %v3440
  %vm3448 = vmor %vm3446, %vm3447
  %v3449 = vsel %vm3448, %v3440, %v3445
  %v3450 = vrsqrt.pop %v3389
  %v3451 = vmul.f32 %v3450, %v3389
  %v3452 = vmul.f32 %v3451, %v3450
  %v3453 = vmul.f32 0.5, %v3452
  %v3454 = vsub.f32 1.5, %v3453
  %v3455 = vmul.f32 %v3450, %v3454
  %vm3456 = vweird.f32 %v3389
  %vm3457 = vweird.f32 %v3450
  %vm3458 = vmor %vm3456, %vm3457
  %v3459 = vsel %vm3458, %v3450, %v3455
  %v3460 = vrsqrt.pop %v3390
  %v3461 = vmul.f32 %v3460, %v3390
  %v3462 = vmul.f32 %v3461, %v3460
  %v3463 = vmul.f32 0.5, %v3462
  %v3464 = vsub.f32 1.5, %v3463
  %v3465 = vmul.f32 %v3460, %v3464
  %vm3466 = vweird.f32 %v3390
  %vm3467 = vweird.f32 %v3460
  %vm3468 = vmor %vm3466, %vm3467
  %v3469 = vsel %vm3468, %v3460, %v3465
  %v3470 = vrsqrt.pop %v3391
  %v3471 = vmul.f32 %v3470, %v3391
  %v3472 = vmul.f32 %v3471, %v3470
  %v3473 = vmul.f32 0.5, %v3472
  %v3474 = vsub.f32 1.5, %v3473
  %v3475 = vmul.f32 %v3470, %v3474
  %vm3476 = vweird.f32 %v3391
  %vm3477 = vweird.f32 %v3470
  %vm3478 = vmor %vm3476, %vm3477
  %v3479 = vsel %vm3478, %v3470, %v3475
  %v3480 = vrsqrt.pop %v3392
  %v3481 = vmul.f32 %v3480, %v3392
  %v3482 = vmul.f32 %v3481, %v3480
  %v3483 = vmul.f32 0.5, %v3482
  %v3484 = vsub.f32 1.5, %v3483
  %v3485 = vmul.f32 %v3480, %v3484
  %vm3486 = vweird.f32 %v3392
  %vm3487 = vweird.f32 %v3480
  %vm3488 = vmor %vm3486, %vm3487
  %v3489 = vsel %vm3488, %v3480, %v3485
  %v3490 = vrsqrt.pop %v3393
  %v3491 = vmul.f32 %v3490, %v3393
  %v3492 = vmul.f32 %v3491, %v3490
  %v3493 = vmul.f32 0.5, %v3492
  %v3494 = vsub.f32 1.5, %v3493
  %v3495 = vmul.f32 %v3490, %v3494
  %vm3496 = vweird.f32 %v3393
  %vm3497 = vweird.f32 %v3490
  %vm3498 = vmor %vm3496, %vm3497
  %v3499 = vsel %vm3498, %v3490, %v3495
  %v3500 = vrsqrt.pop %v3394
  %v3501 = vmul.f32 %v3500, %v3394
  %v3502 = vmul.f32 %v3501, %v3500
  %v3503 = vmul.f32 0.5, %v3502
  %v3504 = vsub.f32 1.5, %v3503
  %v3505 = vmul.f32 %v3500, %v3504
  %vm3506 = vweird.f32 %v3394
  %vm3507 = vweird.f32 %v3500
  %vm3508 = vmor %vm3506, %vm3507
  %v3509 = vsel %vm3508, %v3500, %v3505
  %v3510 = vrsqrt.pop %v3395
  %v3511 = vmul.f32 %v3510, %v3395
  %v3512 = vmul.f32 %v3511, %v3510
  %v3513 = vmul.f32 0.5, %v3512
  %v3514 = vsub.f32 1.5, %v3513
  %v3515 = vmul.f32 %v3510, %v3514
  %vm3516 = vweird.f32 %v3395
  %vm3517 = vweird.f32 %v3510
  %vm3518 = vmor %vm3516, %vm3517
  %v3519 = vsel %vm3518, %v3510, %v3515
  %v3520 = vrsqrt.pop %v3396
  %v3521 = vmul.f32 %v3520, %v3396
  %v3522 = vmul.f32 %v3521, %v3520
  %v3523 = vmul.f32 0.5, %v3522
  %v3524 = vsub.f32 1.5, %v3523
  %v3525 = vmul.f32 %v3520, %v3524
  %vm3526 = vweird.f32 %v3396
  %vm3527 = vweird.f32 %v3520
  %vm3528 = vmor %vm3526, %vm3527
  %v3529 = vsel %vm3528, %v3520, %v3525
  %v3530 = vrsqrt.pop %v3397
  %v3531 = vmul.f32 %v3530, %v3397
  %v3532 = vmul.f32 %v3531, %v3530
  %v3533 = vmul.f32 0.5, %v3532
  %v3534 = vsub.f32 1.5, %v3533
  %v3535 = vmul.f32 %v3530, %v3534
  %vm3536 = vweird.f32 %v3397
  %vm3537 = vweird.f32 %v3530
  %vm3538 = vmor %vm3536, %vm3537
  %v3539 = vsel %vm3538, %v3530, %v3535
  %v3540 = vrsqrt.pop %v3398
  %v3541 = vmul.f32 %v3540, %v3398
  %v3542 = vmul.f32 %v3541, %v3540
  %v3543 = vmul.f32 0.5, %v3542
  %v3544 = vsub.f32 1.5, %v3543
  %v3545 = vmul.f32 %v3540, %v3544
  %vm3546 = vweird.f32 %v3398
  %vm3547 = vweird.f32 %v3540
  %vm3548 = vmor %vm3546, %vm3547
  %v3549 = vsel %vm3548, %v3540, %v3545
  %v3550 = vrsqrt.pop %v3399
  %v3551 = vmul.f32 %v3550, %v3399
  %v3552 = vmul.f32 %v3551, %v3550
  %v3553 = vmul.f32 0.5, %v3552
  %v3554 = vsub.f32 1.5, %v3553
  %v3555 = vmul.f32 %v3550, %v3554
  %vm3556 = vweird.f32 %v3399
  %vm3557 = vweird.f32 %v3550
  %vm3558 = vmor %vm3556, %vm3557
  %v3559 = vsel %vm3558, %v3550, %v3555
  %v3560 = vmul.f32 %v3256, %v3409
  %v3561 = vmul.f32 %v3257, %v3409
  %v3562 = vmul.f32 %v3258, %v3419
  %v3563 = vmul.f32 %v3259, %v3419
  %v3564 = vmul.f32 %v3260, %v3429
  %v3565 = vmul.f32 %v3261, %v3429
  %v3566 = vmul.f32 %v3262, %v3439
  %v3567 = vmul.f32 %v3263, %v3439
  %v3568 = vmul.f32 %v3264, %v3449
  %v3569 = vmul.f32 %v3265, %v3449
  %v3570 = vmul.f32 %v3266, %v3459
  %v3571 = vmul.f32 %v3267, %v3459
  %v3572 = vmul.f32 %v3268, %v3469
  %v3573 = vmul.f32 %v3269, %v3469
  %v3574 = vmul.f32 %v3270, %v3479
  %v3575 = vmul.f32 %v3271, %v3479
  %v3576 = vmul.f32 %v3272, %v3489
  %v3577 = vmul.f32 %v3273, %v3489
  %v3578 = vmul.f32 %v3274, %v3499
  %v3579 = vmul.f32 %v3275, %v3499
  %v3580 = vmul.f32 %v3276, %v3509
  %v3581 = vmul.f32 %v3277, %v3509
  %v3582 = vmul.f32 %v3278, %v3519
  %v3583 = vmul.f32 %v3279, %v3519
  %v3584 = vmul.f32 %v3280, %v3529
  %v3585 = vmul.f32 %v3281, %v3529
  %v3586 = vmul.f32 %v3282, %v3539
  %v3587 = vmul.f32 %v3283, %v3539
  %v3588 = vmul.f32 %v3284, %v3549
  %v3589 = vmul.f32 %v3285, %v3549
  %v3590 = vmul.f32 %v3286, %v3559
  %v3591 = vmul.f32 %v3287, %v3559
  %v3593 = vperm.slane %v3190, 0
  %v3594 = vperm.slane %v3190, 1
  %v3597 = vmul.f32 %v3560, %v3593
  %v3598 = vmul.f32 %v3561, %v3594
  %v3599 = vmul.f32 %v3562, %v3593
  %v3600 = vmul.f32 %v3563, %v3594
  %v3601 = vmul.f32 %v3564, %v3593
  %v3602 = vmul.f32 %v3565, %v3594
  %v3603 = vmul.f32 %v3566, %v3593
  %v3604 = vmul.f32 %v3567, %v3594
  %v3605 = vmul.f32 %v3568, %v3593
  %v3606 = vmul.f32 %v3569, %v3594
  %v3607 = vmul.f32 %v3570, %v3593
  %v3608 = vmul.f32 %v3571, %v3594
  %v3609 = vmul.f32 %v3572, %v3593
  %v3610 = vmul.f32 %v3573, %v3594
  %v3611 = vmul.f32 %v3574, %v3593
  %v3612 = vmul.f32 %v3575, %v3594
  %v3613 = vmul.f32 %v3576, %v3593
  %v3614 = vmul.f32 %v3577, %v3594
  %v3615 = vmul.f32 %v3578, %v3593
  %v3616 = vmul.f32 %v3579, %v3594
  %v3617 = vmul.f32 %v3580, %v3593
  %v3618 = vmul.f32 %v3581, %v3594
  %v3619 = vmul.f32 %v3582, %v3593
  %v3620 = vmul.f32 %v3583, %v3594
  %v3621 = vmul.f32 %v3584, %v3593
  %v3622 = vmul.f32 %v3585, %v3594
  %v3623 = vmul.f32 %v3586, %v3593
  %v3624 = vmul.f32 %v3587, %v3594
  %v3625 = vmul.f32 %v3588, %v3593
  %v3626 = vmul.f32 %v3589, %v3594
  %v3627 = vmul.f32 %v3590, %v3593
  %v3628 = vmul.f32 %v3591, %v3594
  %v3630 = vperm.slane %v3191, 0
  %v3631 = vperm.slane %v3191, 1
  %v3634 = vadd.f32 %v3597, %v3630
  %v3635 = vadd.f32 %v3598, %v3631
  %v3636 = vadd.f32 %v3599, %v3630
  %v3637 = vadd.f32 %v3600, %v3631
  %v3638 = vadd.f32 %v3601, %v3630
  %v3639 = vadd.f32 %v3602, %v3631
  %v3640 = vadd.f32 %v3603, %v3630
  %v3641 = vadd.f32 %v3604, %v3631
  %v3642 = vadd.f32 %v3605, %v3630
  %v3643 = vadd.f32 %v3606, %v3631
  %v3644 = vadd.f32 %v3607, %v3630
  %v3645 = vadd.f32 %v3608, %v3631
  %v3646 = vadd.f32 %v3609, %v3630
  %v3647 = vadd.f32 %v3610, %v3631
  %v3648 = vadd.f32 %v3611, %v3630
  %v3649 = vadd.f32 %v3612, %v3631
  %v3650 = vadd.f32 %v3613, %v3630
  %v3651 = vadd.f32 %v3614, %v3631
  %v3652 = vadd.f32 %v3615, %v3630
  %v3653 = vadd.f32 %v3616, %v3631
  %v3654 = vadd.f32 %v3617, %v3630
  %v3655 = vadd.f32 %v3618, %v3631
  %v3656 = vadd.f32 %v3619, %v3630
  %v3657 = vadd.f32 %v3620, %v3631
  %v3658 = vadd.f32 %v3621, %v3630
  %v3659 = vadd.f32 %v3622, %v3631
  %v3660 = vadd.f32 %v3623, %v3630
  %v3661 = vadd.f32 %v3624, %v3631
  %v3662 = vadd.f32 %v3625, %v3630
  %v3663 = vadd.f32 %v3626, %v3631
  %v3664 = vadd.f32 %v3627, %v3630
  %v3665 = vadd.f32 %v3628, %v3631
  %vm3666 = vcmp.gt.f32.partialorder %v3634, 0.0
  %vm3667 = vcmp.gt.f32.partialorder %v3635, 0.0
  %vm3668 = vcmp.gt.f32.partialorder %v3636, 0.0
  %vm3669 = vcmp.gt.f32.partialorder %v3637, 0.0
  %vm3670 = vcmp.gt.f32.partialorder %v3638, 0.0
  %vm3671 = vcmp.gt.f32.partialorder %v3639, 0.0
  %vm3672 = vcmp.gt.f32.partialorder %v3640, 0.0
  %vm3673 = vcmp.gt.f32.partialorder %v3641, 0.0
  %vm3674 = vcmp.gt.f32.partialorder %v3642, 0.0
  %vm3675 = vcmp.gt.f32.partialorder %v3643, 0.0
  %vm3676 = vcmp.gt.f32.partialorder %v3644, 0.0
  %vm3677 = vcmp.gt.f32.partialorder %v3645, 0.0
  %vm3678 = vcmp.gt.f32.partialorder %v3646, 0.0
  %vm3679 = vcmp.gt.f32.partialorder %v3647, 0.0
  %vm3680 = vcmp.gt.f32.partialorder %v3648, 0.0
  %vm3681 = vcmp.gt.f32.partialorder %v3649, 0.0
  %vm3682 = vcmp.gt.f32.partialorder %v3650, 0.0
  %vm3683 = vcmp.gt.f32.partialorder %v3651, 0.0
  %vm3684 = vcmp.gt.f32.partialorder %v3652, 0.0
  %vm3685 = vcmp.gt.f32.partialorder %v3653, 0.0
  %vm3686 = vcmp.gt.f32.partialorder %v3654, 0.0
  %vm3687 = vcmp.gt.f32.partialorder %v3655, 0.0
  %vm3688 = vcmp.gt.f32.partialorder %v3656, 0.0
  %vm3689 = vcmp.gt.f32.partialorder %v3657, 0.0
  %vm3690 = vcmp.gt.f32.partialorder %v3658, 0.0
  %vm3691 = vcmp.gt.f32.partialorder %v3659, 0.0
  %vm3692 = vcmp.gt.f32.partialorder %v3660, 0.0
  %vm3693 = vcmp.gt.f32.partialorder %v3661, 0.0
  %vm3694 = vcmp.gt.f32.partialorder %v3662, 0.0
  %vm3695 = vcmp.gt.f32.partialorder %v3663, 0.0
  %vm3696 = vcmp.gt.f32.partialorder %v3664, 0.0
  %vm3697 = vcmp.gt.f32.partialorder %v3665, 0.0
  %v3698 = vmul.f32 %v3634, 0.1
  %v3699 = vmul.f32 %v3635, 0.1
  %v3700 = vmul.f32 %v3636, 0.1
  %v3701 = vmul.f32 %v3637, 0.1
  %v3702 = vmul.f32 %v3638, 0.1
  %v3703 = vmul.f32 %v3639, 0.1
  %v3704 = vmul.f32 %v3640, 0.1
  %v3705 = vmul.f32 %v3641, 0.1
  %v3706 = vmul.f32 %v3642, 0.1
  %v3707 = vmul.f32 %v3643, 0.1
  %v3708 = vmul.f32 %v3644, 0.1
  %v3709 = vmul.f32 %v3645, 0.1
  %v3710 = vmul.f32 %v3646, 0.1
  %v3711 = vmul.f32 %v3647, 0.1
  %v3712 = vmul.f32 %v3648, 0.1
  %v3713 = vmul.f32 %v3649, 0.1
  %v3714 = vmul.f32 %v3650, 0.1
  %v3715 = vmul.f32 %v3651, 0.1
  %v3716 = vmul.f32 %v3652, 0.1
  %v3717 = vmul.f32 %v3653, 0.1
  %v3718 = vmul.f32 %v3654, 0.1
  %v3719 = vmul.f32 %v3655, 0.1
  %v3720 = vmul.f32 %v3656, 0.1
  %v3721 = vmul.f32 %v3657, 0.1
  %v3722 = vmul.f32 %v3658, 0.1
  %v3723 = vmul.f32 %v3659, 0.1
  %v3724 = vmul.f32 %v3660, 0.1
  %v3725 = vmul.f32 %v3661, 0.1
  %v3726 = vmul.f32 %v3662, 0.1
  %v3727 = vmul.f32 %v3663, 0.1
  %v3728 = vmul.f32 %v3664, 0.1
  %v3729 = vmul.f32 %v3665, 0.1
  %v3730 = vsel %vm3666, %v3634, %v3698
  %v3731 = vsel %vm3667, %v3635, %v3699
  %v3732 = vsel %vm3668, %v3636, %v3700
  %v3733 = vsel %vm3669, %v3637, %v3701
  %v3734 = vsel %vm3670, %v3638, %v3702
  %v3735 = vsel %vm3671, %v3639, %v3703
  %v3736 = vsel %vm3672, %v3640, %v3704
  %v3737 = vsel %vm3673, %v3641, %v3705
  %v3738 = vsel %vm3674, %v3642, %v3706
  %v3739 = vsel %vm3675, %v3643, %v3707
  %v3740 = vsel %vm3676, %v3644, %v3708
  %v3741 = vsel %vm3677, %v3645, %v3709
  %v3742 = vsel %vm3678, %v3646, %v3710
  %v3743 = vsel %vm3679, %v3647, %v3711
  %v3744 = vsel %vm3680, %v3648, %v3712
  %v3745 = vsel %vm3681, %v3649, %v3713
  %v3746 = vsel %vm3682, %v3650, %v3714
  %v3747 = vsel %vm3683, %v3651, %v3715
  %v3748 = vsel %vm3684, %v3652, %v3716
  %v3749 = vsel %vm3685, %v3653, %v3717
  %v3750 = vsel %vm3686, %v3654, %v3718
  %v3751 = vsel %vm3687, %v3655, %v3719
  %v3752 = vsel %vm3688, %v3656, %v3720
  %v3753 = vsel %vm3689, %v3657, %v3721
  %v3754 = vsel %vm3690, %v3658, %v3722
  %v3755 = vsel %vm3691, %v3659, %v3723
  %v3756 = vsel %vm3692, %v3660, %v3724
  %v3757 = vsel %vm3693, %v3661, %v3725
  %v3758 = vsel %vm3694, %v3662, %v3726
  %v3759 = vsel %vm3695, %v3663, %v3727
  %v3760 = vsel %vm3696, %v3664, %v3728
  %v3761 = vsel %vm3697, %v3665, %v3729
  %v3762 = vld [vmem:[%s16] sm:$0xff]
  %v3763 = vld [vmem:[%s16 + $0x8] sm:$0xff]
  %v3764 = vld [vmem:[%s16 + $0x10] sm:$0xff]
  %v3765 = vld [vmem:[%s16 + $0x18] sm:$0xff]
  %v3766 = vld [vmem:[%s16 + $0x20] sm:$0xff]
  %v3767 = vld [vmem:[%s16 + $0x28] sm:$0xff]
  %v3768 = vld [vmem:[%s16 + $0x30] sm:$0xff]
  %v3769 = vld [vmem:[%s16 + $0x38] sm:$0xff]
  %v3770 = vld [vmem:[%s16 + $0x40] sm:$0xff]
  %v3771 = vld [vmem:[%s16 + $0x48] sm:$0xff]
  %v3772 = vld [vmem:[%s16 + $0x50] sm:$0xff]
  %v3773 = vld [vmem:[%s16 + $0x58] sm:$0xff]
  %v3774 = vld [vmem:[%s16 + $0x60] sm:$0xff]
  %v3775 = vld [vmem:[%s16 + $0x68] sm:$0xff]
  %v3776 = vld [vmem:[%s16 + $0x70] sm:$0xff]
  %v3777 = vld [vmem:[%s16 + $0x78] sm:$0xff]
  %v3778 = vld [vmem:[%s16 + $0x80] sm:$0xff]
  %v3779 = vld [vmem:[%s16 + $0x88] sm:$0xff]
  %v3780 = vld [vmem:[%s16 + $0x90] sm:$0xff]
  %v3781 = vld [vmem:[%s16 + $0x98] sm:$0xff]
  %v3782 = vld [vmem:[%s16 + $0xa0] sm:$0xff]
  %v3783 = vld [vmem:[%s16 + $0xa8] sm:$0xff]
  %v3784 = vld [vmem:[%s16 + $0xb0] sm:$0xff]
  %v3785 = vld [vmem:[%s16 + $0xb8] sm:$0xff]
  %v3786 = vld [vmem:[%s16 + $0xc0] sm:$0xff]
  %v3787 = vld [vmem:[%s16 + $0xc8] sm:$0xff]
  %v3788 = vld [vmem:[%s16 + $0xd0] sm:$0xff]
  %v3789 = vld [vmem:[%s16 + $0xd8] sm:$0xff]
  %v3790 = vld [vmem:[%s16 + $0xe0] sm:$0xff]
  %v3791 = vld [vmem:[%s16 + $0xe8] sm:$0xff]
  %v3792 = vld [vmem:[%s16 + $0xf0] sm:$0xff]
  %v3793 = vld [vmem:[%s16 + $0xf8] sm:$0xff]
  %v3794 = vld [vmem:[%s16 + $0x100] sm:$0xff]
  %v3795 = vld [vmem:[%s16 + $0x108] sm:$0xff]
  %v3796 = vld [vmem:[%s16 + $0x110] sm:$0xff]
  %v3797 = vld [vmem:[%s16 + $0x118] sm:$0xff]
  %v3798 = vld [vmem:[%s16 + $0x120] sm:$0xff]
  %v3799 = vld [vmem:[%s16 + $0x128] sm:$0xff]
  %v3800 = vld [vmem:[%s16 + $0x130] sm:$0xff]
  %v3801 = vld [vmem:[%s16 + $0x138] sm:$0xff]
  %v3802 = vld [vmem:[%s16 + $0x140] sm:$0xff]
  %v3803 = vld [vmem:[%s16 + $0x148] sm:$0xff]
  %v3804 = vld [vmem:[%s16 + $0x150] sm:$0xff]
  %v3805 = vld [vmem:[%s16 + $0x158] sm:$0xff]
  %v3806 = vld [vmem:[%s16 + $0x160] sm:$0xff]
  %v3807 = vld [vmem:[%s16 + $0x168] sm:$0xff]
  %v3808 = vld [vmem:[%s16 + $0x170] sm:$0xff]
  %v3809 = vld [vmem:[%s16 + $0x178] sm:$0xff]
  %v3810 = vld [vmem:[%s16 + $0x180] sm:$0xff]
  %v3811 = vld [vmem:[%s16 + $0x188] sm:$0xff]
  %v3812 = vld [vmem:[%s16 + $0x190] sm:$0xff]
  %v3813 = vld [vmem:[%s16 + $0x198] sm:$0xff]
  %v3814 = vld [vmem:[%s16 + $0x1a0] sm:$0xff]
  %v3815 = vld [vmem:[%s16 + $0x1a8] sm:$0xff]
  %v3816 = vld [vmem:[%s16 + $0x1b0] sm:$0xff]
  %v3817 = vld [vmem:[%s16 + $0x1b8] sm:$0xff]
  %v3818 = vld [vmem:[%s16 + $0x1c0] sm:$0xff]
  %v3819 = vld [vmem:[%s16 + $0x1c8] sm:$0xff]
  %v3820 = vld [vmem:[%s16 + $0x1d0] sm:$0xff]
  %v3821 = vld [vmem:[%s16 + $0x1d8] sm:$0xff]
  %v3822 = vld [vmem:[%s16 + $0x1e0] sm:$0xff]
  %v3823 = vld [vmem:[%s16 + $0x1e8] sm:$0xff]
  %v3824 = vld [vmem:[%s16 + $0x1f0] sm:$0xff]
  %v3825 = vld [vmem:[%s16 + $0x1f8] sm:$0xff]
  %v3826 = vld [vmem:[%s16 + $0x200] sm:$0xff]
  %v3827 = vld [vmem:[%s16 + $0x208] sm:$0xff]
  %v3828 = vld [vmem:[%s16 + $0x210] sm:$0xff]
  %v3829 = vld [vmem:[%s16 + $0x218] sm:$0xff]
  %v3830 = vld [vmem:[%s16 + $0x220] sm:$0xff]
  %v3831 = vld [vmem:[%s16 + $0x228] sm:$0xff]
  %v3832 = vld [vmem:[%s16 + $0x230] sm:$0xff]
  %v3833 = vld [vmem:[%s16 + $0x238] sm:$0xff]
  %v3834 = vld [vmem:[%s16 + $0x240] sm:$0xff]
  %v3835 = vld [vmem:[%s16 + $0x248] sm:$0xff]
  %v3836 = vld [vmem:[%s16 + $0x250] sm:$0xff]
  %v3837 = vld [vmem:[%s16 + $0x258] sm:$0xff]
  %v3838 = vld [vmem:[%s16 + $0x260] sm:$0xff]
  %v3839 = vld [vmem:[%s16 + $0x268] sm:$0xff]
  %v3840 = vld [vmem:[%s16 + $0x270] sm:$0xff]
  %v3841 = vld [vmem:[%s16 + $0x278] sm:$0xff]
  %v3842 = vld [vmem:[%s16 + $0x280] sm:$0xff]
  %v3843 = vld [vmem:[%s16 + $0x288] sm:$0xff]
  %v3844 = vld [vmem:[%s16 + $0x290] sm:$0xff]
  %v3845 = vld [vmem:[%s16 + $0x298] sm:$0xff]
  %v3846 = vld [vmem:[%s16 + $0x2a0] sm:$0xff]
  %v3847 = vld [vmem:[%s16 + $0x2a8] sm:$0xff]
  %v3848 = vld [vmem:[%s16 + $0x2b0] sm:$0xff]
  %v3849 = vld [vmem:[%s16 + $0x2b8] sm:$0xff]
  %v3850 = vld [vmem:[%s16 + $0x2c0] sm:$0xff]
  %v3851 = vld [vmem:[%s16 + $0x2c8] sm:$0xff]
  %v3852 = vld [vmem:[%s16 + $0x2d0] sm:$0xff]
  %v3853 = vld [vmem:[%s16 + $0x2d8] sm:$0xff]
  %v3854 = vld [vmem:[%s16 + $0x2e0] sm:$0xff]
  %v3855 = vld [vmem:[%s16 + $0x2e8] sm:$0xff]
  %v3856 = vld [vmem:[%s16 + $0x2f0] sm:$0xff]
  %v3857 = vld [vmem:[%s16 + $0x2f8] sm:$0xff]
  %v3858 = vld [vmem:[%s16 + $0x300] sm:$0xff]
  %v3859 = vld [vmem:[%s16 + $0x308] sm:$0xff]
  %v3860 = vld [vmem:[%s16 + $0x310] sm:$0xff]
  %v3861 = vld [vmem:[%s16 + $0x318] sm:$0xff]
  %v3862 = vld [vmem:[%s16 + $0x320] sm:$0xff]
  %v3863 = vld [vmem:[%s16 + $0x328] sm:$0xff]
  %v3864 = vld [vmem:[%s16 + $0x330] sm:$0xff]
  %v3865 = vld [vmem:[%s16 + $0x338] sm:$0xff]
  %v3866 = vld [vmem:[%s16 + $0x340] sm:$0xff]
  %v3867 = vld [vmem:[%s16 + $0x348] sm:$0xff]
  %v3868 = vld [vmem:[%s16 + $0x350] sm:$0xff]
  %v3869 = vld [vmem:[%s16 + $0x358] sm:$0xff]
  %v3870 = vld [vmem:[%s16 + $0x360] sm:$0xff]
  %v3871 = vld [vmem:[%s16 + $0x368] sm:$0xff]
  %v3872 = vld [vmem:[%s16 + $0x370] sm:$0xff]
  %v3873 = vld [vmem:[%s16 + $0x378] sm:$0xff]
  %v3874 = vld [vmem:[%s16 + $0x380] sm:$0xff]
  %v3875 = vld [vmem:[%s16 + $0x388] sm:$0xff]
  %v3876 = vld [vmem:[%s16 + $0x390] sm:$0xff]
  %v3877 = vld [vmem:[%s16 + $0x398] sm:$0xff]
  %v3878 = vld [vmem:[%s16 + $0x3a0] sm:$0xff]
  %v3879 = vld [vmem:[%s16 + $0x3a8] sm:$0xff]
  %v3880 = vld [vmem:[%s16 + $0x3b0] sm:$0xff]
  %v3881 = vld [vmem:[%s16 + $0x3b8] sm:$0xff]
  %v3882 = vld [vmem:[%s16 + $0x3c0] sm:$0xff]
  %v3883 = vld [vmem:[%s16 + $0x3c8] sm:$0xff]
  %v3884 = vld [vmem:[%s16 + $0x3d0] sm:$0xff]
  %v3885 = vld [vmem:[%s16 + $0x3d8] sm:$0xff]
  %v3886 = vld [vmem:[%s16 + $0x3e0] sm:$0xff]
  %v3887 = vld [vmem:[%s16 + $0x3e8] sm:$0xff]
  %v3888 = vld [vmem:[%s16 + $0x3f0] sm:$0xff]
  %v3889 = vld [vmem:[%s16 + $0x3f8] sm:$0xff]
  %v3890 = vld [vmem:[%s17] sm:$0xf]
  %v3892 = vperm.slane %v3890, 0
  %v3893 = vperm.slane %v3890, 1
  %v3894 = vperm.slane %v3890, 2
  %v3895 = vperm.slane %v3890, 3
  %3900 = vmatpush.msra.mxu0 %v3822
  %3901 = vmatpush.msra.mxu0 %v3818
  %3902 = vmatpush.msra.mxu0 %v3814
  %3903 = vmatpush.msra.mxu0 %v3810
  %3904 = vmatpush.msra.mxu0 %v3806
  %3905 = vmatpush.msra.mxu0 %v3802
  %3906 = vmatpush.msra.mxu0 %v3798
  %3907 = vmatpush.msra.mxu0 %v3794
  %3908 = vmatpush.msra.mxu0 %v3790
  %3909 = vmatpush.msra.mxu0 %v3786
  %3910 = vmatpush.msra.mxu0 %v3782
  %3911 = vmatpush.msra.mxu0 %v3778
  %3912 = vmatpush.msra.mxu0 %v3774
  %3913 = vmatpush.msra.mxu0 %v3770
  %3914 = vmatpush.msra.mxu0 %v3766
  %3915 = vmatpush.msra.mxu0 %v3762
  %3916 = vmatmul.f32.gmra.mxu0 %v3730
  %v3917 = vpop.f32.mrf.mxu0
  %v3918 = vadd.f32 %v3892, %v3917
  %3919 = vmatmul.f32.gmra.mxu0 %v3732
  %v3920 = vpop.f32.mrf.mxu0
  %v3921 = vadd.f32 %v3892, %v3920
  %3922 = vmatmul.f32.gmra.mxu0 %v3734
  %v3923 = vpop.f32.mrf.mxu0
  %v3924 = vadd.f32 %v3892, %v3923
  %3925 = vmatmul.f32.gmra.mxu0 %v3736
  %v3926 = vpop.f32.mrf.mxu0
  %v3927 = vadd.f32 %v3892, %v3926
  %3928 = vmatmul.f32.gmra.mxu0 %v3738
  %v3929 = vpop.f32.mrf.mxu0
  %v3930 = vadd.f32 %v3892, %v3929
  %3931 = vmatmul.f32.gmra.mxu0 %v3740
  %v3932 = vpop.f32.mrf.mxu0
  %v3933 = vadd.f32 %v3892, %v3932
  %3934 = vmatmul.f32.gmra.mxu0 %v3742
  %v3935 = vpop.f32.mrf.mxu0
  %v3936 = vadd.f32 %v3892, %v3935
  %3937 = vmatmul.f32.gmra.mxu0 %v3744
  %v3938 = vpop.f32.mrf.mxu0
  %v3939 = vadd.f32 %v3892, %v3938
  %3940 = vmatmul.f32.gmra.mxu0 %v3746
  %v3941 = vpop.f32.mrf.mxu0
  %v3942 = vadd.f32 %v3892, %v3941
  %3943 = vmatmul.f32.gmra.mxu0 %v3748
  %v3944 = vpop.f32.mrf.mxu0
  %v3945 = vadd.f32 %v3892, %v3944
  %3946 = vmatmul.f32.gmra.mxu0 %v3750
  %v3947 = vpop.f32.mrf.mxu0
  %v3948 = vadd.f32 %v3892, %v3947
  %3949 = vmatmul.f32.gmra.mxu0 %v3752
  %v3950 = vpop.f32.mrf.mxu0
  %v3951 = vadd.f32 %v3892, %v3950
  %3952 = vmatmul.f32.gmra.mxu0 %v3754
  %v3953 = vpop.f32.mrf.mxu0
  %v3954 = vadd.f32 %v3892, %v3953
  %3955 = vmatmul.f32.gmra.mxu0 %v3756
  %v3956 = vpop.f32.mrf.mxu0
  %v3957 = vadd.f32 %v3892, %v3956
  %3958 = vmatmul.f32.gmra.mxu0 %v3758
  %v3959 = vpop.f32.mrf.mxu0
  %v3960 = vadd.f32 %v3892, %v3959
  %3961 = vmatmul.f32.gmra.mxu0 %v3760
  %v3962 = vpop.f32.mrf.mxu0
  %v3963 = vadd.f32 %v3892, %v3962
  %3964 = vdwg.mxu0
  %3965 = vmatpush.msra.mxu0 %v3886
  %3966 = vmatpush.msra.mxu0 %v3882
  %3967 = vmatpush.msra.mxu0 %v3878
  %3968 = vmatpush.msra.mxu0 %v3874
  %3969 = vmatpush.msra.mxu0 %v3870
  %3970 = vmatpush.msra.mxu0 %v3866
  %3971 = vmatpush.msra.mxu0 %v3862
  %3972 = vmatpush.msra.mxu0 %v3858
  %3973 = vmatpush.msra.mxu0 %v3854
  %3974 = vmatpush.msra.mxu0 %v3850
  %3975 = vmatpush.msra.mxu0 %v3846
  %3976 = vmatpush.msra.mxu0 %v3842
  %3977 = vmatpush.msra.mxu0 %v3838
  %3978 = vmatpush.msra.mxu0 %v3834
  %3979 = vmatpush.msra.mxu0 %v3830
  %3980 = vmatpush.msra.mxu0 %v3826
  %3981 = vmatmul.f32.gmra.mxu0 %v3731
  %v3982 = vpop.f32.mrf.mxu0
  %v3983 = vadd.f32 %v3918, %v3982
  %3984 = vmatmul.f32.gmra.mxu0 %v3733
  %v3985 = vpop.f32.mrf.mxu0
  %v3986 = vadd.f32 %v3921, %v3985
  %3987 = vmatmul.f32.gmra.mxu0 %v3735
  %v3988 = vpop.f32.mrf.mxu0
  %v3989 = vadd.f32 %v3924, %v3988
  %3990 = vmatmul.f32.gmra.mxu0 %v3737
  %v3991 = vpop.f32.mrf.mxu0
  %v3992 = vadd.f32 %v3927, %v3991
  %3993 = vmatmul.f32.gmra.mxu0 %v3739
  %v3994 = vpop.f32.mrf.mxu0
  %v3995 = vadd.f32 %v3930, %v3994
  %3996 = vmatmul.f32.gmra.mxu0 %v3741
  %v3997 = vpop.f32.mrf.mxu0
  %v3998 = vadd.f32 %v3933, %v3997
  %3999 = vmatmul.f32.gmra.mxu0 %v3743
  %v4000 = vpop.f32.mrf.mxu0
  %v4001 = vadd.f32 %v3936, %v4000
  %4002 = vmatmul.f32.gmra.mxu0 %v3745
  %v4003 = vpop.f32.mrf.mxu0
  %v4004 = vadd.f32 %v3939, %v4003
  %4005 = vmatmul.f32.gmra.mxu0 %v3747
  %v4006 = vpop.f32.mrf.mxu0
  %v4007 = vadd.f32 %v3942, %v4006
  %4008 = vmatmul.f32.gmra.mxu0 %v3749
  %v4009 = vpop.f32.mrf.mxu0
  %v4010 = vadd.f32 %v3945, %v4009
  %4011 = vmatmul.f32.gmra.mxu0 %v3751
  %v4012 = vpop.f32.mrf.mxu0
  %v4013 = vadd.f32 %v3948, %v4012
  %4014 = vmatmul.f32.gmra.mxu0 %v3753
  %v4015 = vpop.f32.mrf.mxu0
  %v4016 = vadd.f32 %v3951, %v4015
  %4017 = vmatmul.f32.gmra.mxu0 %v3755
  %v4018 = vpop.f32.mrf.mxu0
  %v4019 = vadd.f32 %v3954, %v4018
  %4020 = vmatmul.f32.gmra.mxu0 %v3757
  %v4021 = vpop.f32.mrf.mxu0
  %v4022 = vadd.f32 %v3957, %v4021
  %4023 = vmatmul.f32.gmra.mxu0 %v3759
  %v4024 = vpop.f32.mrf.mxu0
  %v4025 = vadd.f32 %v3960, %v4024
  %4026 = vmatmul.f32.gmra.mxu0 %v3761
  %v4027 = vpop.f32.mrf.mxu0
  %v4028 = vadd.f32 %v3963, %v4027
  %4029 = vdwg.mxu0
  %4030 = vmatpush.msra.mxu0 %v3823
  %4031 = vmatpush.msra.mxu0 %v3819
  %4032 = vmatpush.msra.mxu0 %v3815
  %4033 = vmatpush.msra.mxu0 %v3811
  %4034 = vmatpush.msra.mxu0 %v3807
  %4035 = vmatpush.msra.mxu0 %v3803
  %4036 = vmatpush.msra.mxu0 %v3799
  %4037 = vmatpush.msra.mxu0 %v3795
  %4038 = vmatpush.msra.mxu0 %v3791
  %4039 = vmatpush.msra.mxu0 %v3787
  %4040 = vmatpush.msra.mxu0 %v3783
  %4041 = vmatpush.msra.mxu0 %v3779
  %4042 = vmatpush.msra.mxu0 %v3775
  %4043 = vmatpush.msra.mxu0 %v3771
  %4044 = vmatpush.msra.mxu0 %v3767
  %4045 = vmatpush.msra.mxu0 %v3763
  %4046 = vmatmul.f32.gmra.mxu0 %v3730
  %v4047 = vpop.f32.mrf.mxu0
  %v4048 = vadd.f32 %v3893, %v4047
  %4049 = vmatmul.f32.gmra.mxu0 %v3732
  %v4050 = vpop.f32.mrf.mxu0
  %v4051 = vadd.f32 %v3893, %v4050
  %4052 = vmatmul.f32.gmra.mxu0 %v3734
  %v4053 = vpop.f32.mrf.mxu0
  %v4054 = vadd.f32 %v3893, %v4053
  %4055 = vmatmul.f32.gmra.mxu0 %v3736
  %v4056 = vpop.f32.mrf.mxu0
  %v4057 = vadd.f32 %v3893, %v4056
  %4058 = vmatmul.f32.gmra.mxu0 %v3738
  %v4059 = vpop.f32.mrf.mxu0
  %v4060 = vadd.f32 %v3893, %v4059
  %4061 = vmatmul.f32.gmra.mxu0 %v3740
  %v4062 = vpop.f32.mrf.mxu0
  %v4063 = vadd.f32 %v3893, %v4062
  %4064 = vmatmul.f32.gmra.mxu0 %v3742
  %v4065 = vpop.f32.mrf.mxu0
  %v4066 = vadd.f32 %v3893, %v4065
  %4067 = vmatmul.f32.gmra.mxu0 %v3744
  %v4068 = vpop.f32.mrf.mxu0
  %v4069 = vadd.f32 %v3893, %v4068
  %4070 = vmatmul.f32.gmra.mxu0 %v3746
  %v4071 = vpop.f32.mrf.mxu0
  %v4072 = vadd.f32 %v3893, %v4071
  %4073 = vmatmul.f32.gmra.mxu0 %v3748
  %v4074 = vpop.f32.mrf.mxu0
  %v4075 = vadd.f32 %v3893, %v4074
  %4076 = vmatmul.f32.gmra.mxu0 %v3750
  %v4077 = vpop.f32.mrf.mxu0
  %v4078 = vadd.f32 %v3893, %v4077
  %4079 = vmatmul.f32.gmra.mxu0 %v3752
  %v4080 = vpop.f32.mrf.mxu0
  %v4081 = vadd.f32 %v3893, %v4080
  %4082 = vmatmul.f32.gmra.mxu0 %v3754
  %v4083 = vpop.f32.mrf.mxu0
  %v4084 = vadd.f32 %v3893, %v4083
  %4085 = vmatmul.f32.gmra.mxu0 %v3756
  %v4086 = vpop.f32.mrf.mxu0
  %v4087 = vadd.f32 %v3893, %v4086
  %4088 = vmatmul.f32.gmra.mxu0 %v3758
  %v4089 = vpop.f32.mrf.mxu0
  %v4090 = vadd.f32 %v3893, %v4089
  %4091 = vmatmul.f32.gmra.mxu0 %v3760
  %v4092 = vpop.f32.mrf.mxu0
  %v4093 = vadd.f32 %v3893, %v4092
  %4094 = vdwg.mxu0
  %4095 = vmatpush.msra.mxu0 %v3887
  %4096 = vmatpush.msra.mxu0 %v3883
  %4097 = vmatpush.msra.mxu0 %v3879
  %4098 = vmatpush.msra.mxu0 %v3875
  %4099 = vmatpush.msra.mxu0 %v3871
  %4100 = vmatpush.msra.mxu0 %v3867
  %4101 = vmatpush.msra.mxu0 %v3863
  %4102 = vmatpush.msra.mxu0 %v3859
  %4103 = vmatpush.msra.mxu0 %v3855
  %4104 = vmatpush.msra.mxu0 %v3851
  %4105 = vmatpush.msra.mxu0 %v3847
  %4106 = vmatpush.msra.mxu0 %v3843
  %4107 = vmatpush.msra.mxu0 %v3839
  %4108 = vmatpush.msra.mxu0 %v3835
  %4109 = vmatpush.msra.mxu0 %v3831
  %4110 = vmatpush.msra.mxu0 %v3827
  %4111 = vmatmul.f32.gmra.mxu0 %v3731
  %v4112 = vpop.f32.mrf.mxu0
  %v4113 = vadd.f32 %v4048, %v4112
  %4114 = vmatmul.f32.gmra.mxu0 %v3733
  %v4115 = vpop.f32.mrf.mxu0
  %v4116 = vadd.f32 %v4051, %v4115
  %4117 = vmatmul.f32.gmra.mxu0 %v3735
  %v4118 = vpop.f32.mrf.mxu0
  %v4119 = vadd.f32 %v4054, %v4118
  %4120 = vmatmul.f32.gmra.mxu0 %v3737
  %v4121 = vpop.f32.mrf.mxu0
  %v4122 = vadd.f32 %v4057, %v4121
  %4123 = vmatmul.f32.gmra.mxu0 %v3739
  %v4124 = vpop.f32.mrf.mxu0
  %v4125 = vadd.f32 %v4060, %v4124
  %4126 = vmatmul.f32.gmra.mxu0 %v3741
  %v4127 = vpop.f32.mrf.mxu0
  %v4128 = vadd.f32 %v4063, %v4127
  %4129 = vmatmul.f32.gmra.mxu0 %v3743
  %v4130 = vpop.f32.mrf.mxu0
  %v4131 = vadd.f32 %v4066, %v4130
  %4132 = vmatmul.f32.gmra.mxu0 %v3745
  %v4133 = vpop.f32.mrf.mxu0
  %v4134 = vadd.f32 %v4069, %v4133
  %4135 = vmatmul.f32.gmra.mxu0 %v3747
  %v4136 = vpop.f32.mrf.mxu0
  %v4137 = vadd.f32 %v4072, %v4136
  %4138 = vmatmul.f32.gmra.mxu0 %v3749
  %v4139 = vpop.f32.mrf.mxu0
  %v4140 = vadd.f32 %v4075, %v4139
  %4141 = vmatmul.f32.gmra.mxu0 %v3751
  %v4142 = vpop.f32.mrf.mxu0
  %v4143 = vadd.f32 %v4078, %v4142
  %4144 = vmatmul.f32.gmra.mxu0 %v3753
  %v4145 = vpop.f32.mrf.mxu0
  %v4146 = vadd.f32 %v4081, %v4145
  %4147 = vmatmul.f32.gmra.mxu0 %v3755
  %v4148 = vpop.f32.mrf.mxu0
  %v4149 = vadd.f32 %v4084, %v4148
  %4150 = vmatmul.f32.gmra.mxu0 %v3757
  %v4151 = vpop.f32.mrf.mxu0
  %v4152 = vadd.f32 %v4087, %v4151
  %4153 = vmatmul.f32.gmra.mxu0 %v3759
  %v4154 = vpop.f32.mrf.mxu0
  %v4155 = vadd.f32 %v4090, %v4154
  %4156 = vmatmul.f32.gmra.mxu0 %v3761
  %v4157 = vpop.f32.mrf.mxu0
  %v4158 = vadd.f32 %v4093, %v4157
  %4159 = vdwg.mxu0
  %4160 = vmatpush.msra.mxu0 %v3824
  %4161 = vmatpush.msra.mxu0 %v3820
  %4162 = vmatpush.msra.mxu0 %v3816
  %4163 = vmatpush.msra.mxu0 %v3812
  %4164 = vmatpush.msra.mxu0 %v3808
  %4165 = vmatpush.msra.mxu0 %v3804
  %4166 = vmatpush.msra.mxu0 %v3800
  %4167 = vmatpush.msra.mxu0 %v3796
  %4168 = vmatpush.msra.mxu0 %v3792
  %4169 = vmatpush.msra.mxu0 %v3788
  %4170 = vmatpush.msra.mxu0 %v3784
  %4171 = vmatpush.msra.mxu0 %v3780
  %4172 = vmatpush.msra.mxu0 %v3776
  %4173 = vmatpush.msra.mxu0 %v3772
  %4174 = vmatpush.msra.mxu0 %v3768
  %4175 = vmatpush.msra.mxu0 %v3764
  %4176 = vmatmul.f32.gmra.mxu0 %v3730
  %v4177 = vpop.f32.mrf.mxu0
  %v4178 = vadd.f32 %v3894, %v4177
  %4179 = vmatmul.f32.gmra.mxu0 %v3732
  %v4180 = vpop.f32.mrf.mxu0
  %v4181 = vadd.f32 %v3894, %v4180
  %4182 = vmatmul.f32.gmra.mxu0 %v3734
  %v4183 = vpop.f32.mrf.mxu0
  %v4184 = vadd.f32 %v3894, %v4183
  %4185 = vmatmul.f32.gmra.mxu0 %v3736
  %v4186 = vpop.f32.mrf.mxu0
  %v4187 = vadd.f32 %v3894, %v4186
  %4188 = vmatmul.f32.gmra.mxu0 %v3738
  %v4189 = vpop.f32.mrf.mxu0
  %v4190 = vadd.f32 %v3894, %v4189
  %4191 = vmatmul.f32.gmra.mxu0 %v3740
  %v4192 = vpop.f32.mrf.mxu0
  %v4193 = vadd.f32 %v3894, %v4192
  %4194 = vmatmul.f32.gmra.mxu0 %v3742
  %v4195 = vpop.f32.mrf.mxu0
  %v4196 = vadd.f32 %v3894, %v4195
  %4197 = vmatmul.f32.gmra.mxu0 %v3744
  %v4198 = vpop.f32.mrf.mxu0
  %v4199 = vadd.f32 %v3894, %v4198
  %4200 = vmatmul.f32.gmra.mxu0 %v3746
  %v4201 = vpop.f32.mrf.mxu0
  %v4202 = vadd.f32 %v3894, %v4201
  %4203 = vmatmul.f32.gmra.mxu0 %v3748
  %v4204 = vpop.f32.mrf.mxu0
  %v4205 = vadd.f32 %v3894, %v4204
  %4206 = vmatmul.f32.gmra.mxu0 %v3750
  %v4207 = vpop.f32.mrf.mxu0
  %v4208 = vadd.f32 %v3894, %v4207
  %4209 = vmatmul.f32.gmra.mxu0 %v3752
  %v4210 = vpop.f32.mrf.mxu0
  %v4211 = vadd.f32 %v3894, %v4210
  %4212 = vmatmul.f32.gmra.mxu0 %v3754
  %v4213 = vpop.f32.mrf.mxu0
  %v4214 = vadd.f32 %v3894, %v4213
  %4215 = vmatmul.f32.gmra.mxu0 %v3756
  %v4216 = vpop.f32.mrf.mxu0
  %v4217 = vadd.f32 %v3894, %v4216
  %4218 = vmatmul.f32.gmra.mxu0 %v3758
  %v4219 = vpop.f32.mrf.mxu0
  %v4220 = vadd.f32 %v3894, %v4219
  %4221 = vmatmul.f32.gmra.mxu0 %v3760
  %v4222 = vpop.f32.mrf.mxu0
  %v4223 = vadd.f32 %v3894, %v4222
  %4224 = vdwg.mxu0
  %4225 = vmatpush.msra.mxu0 %v3888
  %4226 = vmatpush.msra.mxu0 %v3884
  %4227 = vmatpush.msra.mxu0 %v3880
  %4228 = vmatpush.msra.mxu0 %v3876
  %4229 = vmatpush.msra.mxu0 %v3872
  %4230 = vmatpush.msra.mxu0 %v3868
  %4231 = vmatpush.msra.mxu0 %v3864
  %4232 = vmatpush.msra.mxu0 %v3860
  %4233 = vmatpush.msra.mxu0 %v3856
  %4234 = vmatpush.msra.mxu0 %v3852
  %4235 = vmatpush.msra.mxu0 %v3848
  %4236 = vmatpush.msra.mxu0 %v3844
  %4237 = vmatpush.msra.mxu0 %v3840
  %4238 = vmatpush.msra.mxu0 %v3836
  %4239 = vmatpush.msra.mxu0 %v3832
  %4240 = vmatpush.msra.mxu0 %v3828
  %4241 = vmatmul.f32.gmra.mxu0 %v3731
  %v4242 = vpop.f32.mrf.mxu0
  %v4243 = vadd.f32 %v4178, %v4242
  %4244 = vmatmul.f32.gmra.mxu0 %v3733
  %v4245 = vpop.f32.mrf.mxu0
  %v4246 = vadd.f32 %v4181, %v4245
  %4247 = vmatmul.f32.gmra.mxu0 %v3735
  %v4248 = vpop.f32.mrf.mxu0
  %v4249 = vadd.f32 %v4184, %v4248
  %4250 = vmatmul.f32.gmra.mxu0 %v3737
  %v4251 = vpop.f32.mrf.mxu0
  %v4252 = vadd.f32 %v4187, %v4251
  %4253 = vmatmul.f32.gmra.mxu0 %v3739
  %v4254 = vpop.f32.mrf.mxu0
  %v4255 = vadd.f32 %v4190, %v4254
  %4256 = vmatmul.f32.gmra.mxu0 %v3741
  %v4257 = vpop.f32.mrf.mxu0
  %v4258 = vadd.f32 %v4193, %v4257
  %4259 = vmatmul.f32.gmra.mxu0 %v3743
  %v4260 = vpop.f32.mrf.mxu0
  %v4261 = vadd.f32 %v4196, %v4260
  %4262 = vmatmul.f32.gmra.mxu0 %v3745
  %v4263 = vpop.f32.mrf.mxu0
  %v4264 = vadd.f32 %v4199, %v4263
  %4265 = vmatmul.f32.gmra.mxu0 %v3747
  %v4266 = vpop.f32.mrf.mxu0
  %v4267 = vadd.f32 %v4202, %v4266
  %4268 = vmatmul.f32.gmra.mxu0 %v3749
  %v4269 = vpop.f32.mrf.mxu0
  %v4270 = vadd.f32 %v4205, %v4269
  %4271 = vmatmul.f32.gmra.mxu0 %v3751
  %v4272 = vpop.f32.mrf.mxu0
  %v4273 = vadd.f32 %v4208, %v4272
  %4274 = vmatmul.f32.gmra.mxu0 %v3753
  %v4275 = vpop.f32.mrf.mxu0
  %v4276 = vadd.f32 %v4211, %v4275
  %4277 = vmatmul.f32.gmra.mxu0 %v3755
  %v4278 = vpop.f32.mrf.mxu0
  %v4279 = vadd.f32 %v4214, %v4278
  %4280 = vmatmul.f32.gmra.mxu0 %v3757
  %v4281 = vpop.f32.mrf.mxu0
  %v4282 = vadd.f32 %v4217, %v4281
  %4283 = vmatmul.f32.gmra.mxu0 %v3759
  %v4284 = vpop.f32.mrf.mxu0
  %v4285 = vadd.f32 %v4220, %v4284
  %4286 = vmatmul.f32.gmra.mxu0 %v3761
  %v4287 = vpop.f32.mrf.mxu0
  %v4288 = vadd.f32 %v4223, %v4287
  %4289 = vdwg.mxu0
  %4290 = vmatpush.msra.mxu0 %v3825
  %4291 = vmatpush.msra.mxu0 %v3821
  %4292 = vmatpush.msra.mxu0 %v3817
  %4293 = vmatpush.msra.mxu0 %v3813
  %4294 = vmatpush.msra.mxu0 %v3809
  %4295 = vmatpush.msra.mxu0 %v3805
  %4296 = vmatpush.msra.mxu0 %v3801
  %4297 = vmatpush.msra.mxu0 %v3797
  %4298 = vmatpush.msra.mxu0 %v3793
  %4299 = vmatpush.msra.mxu0 %v3789
  %4300 = vmatpush.msra.mxu0 %v3785
  %4301 = vmatpush.msra.mxu0 %v3781
  %4302 = vmatpush.msra.mxu0 %v3777
  %4303 = vmatpush.msra.mxu0 %v3773
  %4304 = vmatpush.msra.mxu0 %v3769
  %4305 = vmatpush.msra.mxu0 %v3765
  %4306 = vmatmul.f32.gmra.mxu0 %v3730
  %v4307 = vpop.f32.mrf.mxu0
  %v4308 = vadd.f32 %v3895, %v4307
  %4309 = vmatmul.f32.gmra.mxu0 %v3732
  %v4310 = vpop.f32.mrf.mxu0
  %v4311 = vadd.f32 %v3895, %v4310
  %4312 = vmatmul.f32.gmra.mxu0 %v3734
  %v4313 = vpop.f32.mrf.mxu0
  %v4314 = vadd.f32 %v3895, %v4313
  %4315 = vmatmul.f32.gmra.mxu0 %v3736
  %v4316 = vpop.f32.mrf.mxu0
  %v4317 = vadd.f32 %v3895, %v4316
  %4318 = vmatmul.f32.gmra.mxu0 %v3738
  %v4319 = vpop.f32.mrf.mxu0
  %v4320 = vadd.f32 %v3895, %v4319
  %4321 = vmatmul.f32.gmra.mxu0 %v3740
  %v4322 = vpop.f32.mrf.mxu0
  %v4323 = vadd.f32 %v3895, %v4322
  %4324 = vmatmul.f32.gmra.mxu0 %v3742
  %v4325 = vpop.f32.mrf.mxu0
  %v4326 = vadd.f32 %v3895, %v4325
  %4327 = vmatmul.f32.gmra.mxu0 %v3744
  %v4328 = vpop.f32.mrf.mxu0
  %v4329 = vadd.f32 %v3895, %v4328
  %4330 = vmatmul.f32.gmra.mxu0 %v3746
  %v4331 = vpop.f32.mrf.mxu0
  %v4332 = vadd.f32 %v3895, %v4331
  %4333 = vmatmul.f32.gmra.mxu0 %v3748
  %v4334 = vpop.f32.mrf.mxu0
  %v4335 = vadd.f32 %v3895, %v4334
  %4336 = vmatmul.f32.gmra.mxu0 %v3750
  %v4337 = vpop.f32.mrf.mxu0
  %v4338 = vadd.f32 %v3895, %v4337
  %4339 = vmatmul.f32.gmra.mxu0 %v3752
  %v4340 = vpop.f32.mrf.mxu0
  %v4341 = vadd.f32 %v3895, %v4340
  %4342 = vmatmul.f32.gmra.mxu0 %v3754
  %v4343 = vpop.f32.mrf.mxu0
  %v4344 = vadd.f32 %v3895, %v4343
  %4345 = vmatmul.f32.gmra.mxu0 %v3756
  %v4346 = vpop.f32.mrf.mxu0
  %v4347 = vadd.f32 %v3895, %v4346
  %4348 = vmatmul.f32.gmra.mxu0 %v3758
  %v4349 = vpop.f32.mrf.mxu0
  %v4350 = vadd.f32 %v3895, %v4349
  %4351 = vmatmul.f32.gmra.mxu0 %v3760
  %v4352 = vpop.f32.mrf.mxu0
  %v4353 = vadd.f32 %v3895, %v4352
  %4354 = vdwg.mxu0
  %4355 = vmatpush.msra.mxu0 %v3889
  %4356 = vmatpush.msra.mxu0 %v3885
  %4357 = vmatpush.msra.mxu0 %v3881
  %4358 = vmatpush.msra.mxu0 %v3877
  %4359 = vmatpush.msra.mxu0 %v3873
  %4360 = vmatpush.msra.mxu0 %v3869
  %4361 = vmatpush.msra.mxu0 %v3865
  %4362 = vmatpush.msra.mxu0 %v3861
  %4363 = vmatpush.msra.mxu0 %v3857
  %4364 = vmatpush.msra.mxu0 %v3853
  %4365 = vmatpush.msra.mxu0 %v3849
  %4366 = vmatpush.msra.mxu0 %v3845
  %4367 = vmatpush.msra.mxu0 %v3841
  %4368 = vmatpush.msra.mxu0 %v3837
  %4369 = vmatpush.msra.mxu0 %v3833
  %4370 = vmatpush.msra.mxu0 %v3829
  %4371 = vmatmul.f32.gmra.mxu0 %v3731
  %v4372 = vpop.f32.mrf.mxu0
  %v4373 = vadd.f32 %v4308, %v4372
  %4374 = vmatmul.f32.gmra.mxu0 %v3733
  %v4375 = vpop.f32.mrf.mxu0
  %v4376 = vadd.f32 %v4311, %v4375
  %4377 = vmatmul.f32.gmra.mxu0 %v3735
  %v4378 = vpop.f32.mrf.mxu0
  %v4379 = vadd.f32 %v4314, %v4378
  %4380 = vmatmul.f32.gmra.mxu0 %v3737
  %v4381 = vpop.f32.mrf.mxu0
  %v4382 = vadd.f32 %v4317, %v4381
  %4383 = vmatmul.f32.gmra.mxu0 %v3739
  %v4384 = vpop.f32.mrf.mxu0
  %v4385 = vadd.f32 %v4320, %v4384
  %4386 = vmatmul.f32.gmra.mxu0 %v3741
  %v4387 = vpop.f32.mrf.mxu0
  %v4388 = vadd.f32 %v4323, %v4387
  %4389 = vmatmul.f32.gmra.mxu0 %v3743
  %v4390 = vpop.f32.mrf.mxu0
  %v4391 = vadd.f32 %v4326, %v4390
  %4392 = vmatmul.f32.gmra.mxu0 %v3745
  %v4393 = vpop.f32.mrf.mxu0
  %v4394 = vadd.f32 %v4329, %v4393
  %4395 = vmatmul.f32.gmra.mxu0 %v3747
  %v4396 = vpop.f32.mrf.mxu0
  %v4397 = vadd.f32 %v4332, %v4396
  %4398 = vmatmul.f32.gmra.mxu0 %v3749
  %v4399 = vpop.f32.mrf.mxu0
  %v4400 = vadd.f32 %v4335, %v4399
  %4401 = vmatmul.f32.gmra.mxu0 %v3751
  %v4402 = vpop.f32.mrf.mxu0
  %v4403 = vadd.f32 %v4338, %v4402
  %4404 = vmatmul.f32.gmra.mxu0 %v3753
  %v4405 = vpop.f32.mrf.mxu0
  %v4406 = vadd.f32 %v4341, %v4405
  %4407 = vmatmul.f32.gmra.mxu0 %v3755
  %v4408 = vpop.f32.mrf.mxu0
  %v4409 = vadd.f32 %v4344, %v4408
  %4410 = vmatmul.f32.gmra.mxu0 %v3757
  %v4411 = vpop.f32.mrf.mxu0
  %v4412 = vadd.f32 %v4347, %v4411
  %4413 = vmatmul.f32.gmra.mxu0 %v3759
  %v4414 = vpop.f32.mrf.mxu0
  %v4415 = vadd.f32 %v4350, %v4414
  %4416 = vmatmul.f32.gmra.mxu0 %v3761
  %v4417 = vpop.f32.mrf.mxu0
  %v4418 = vadd.f32 %v4353, %v4417
  %4419 = vdwg.mxu0
  %v4420 = vld [vmem:[%s18] sm:$0xf]
  %v4421 = vld [vmem:[%s19] sm:$0xf]
  %v4422 = vadd.f32 %v3983, %v4113
  %v4423 = vadd.f32 %v4422, %v4243
  %v4424 = vadd.f32 %v4423, %v4373
  %4425 = vadd.xlane.f32.xlu0 %v4424
  %v4426 = vpop.xlane.xlu0 %4425
  %v4427 = vadd.f32 %v3986, %v4116
  %v4428 = vadd.f32 %v4427, %v4246
  %v4429 = vadd.f32 %v4428, %v4376
  %4430 = vadd.xlane.f32.xlu0 %v4429
  %v4431 = vpop.xlane.xlu0 %4430
  %v4432 = vadd.f32 %v3989, %v4119
  %v4433 = vadd.f32 %v4432, %v4249
  %v4434 = vadd.f32 %v4433, %v4379
  %4435 = vadd.xlane.f32.xlu0 %v4434
  %v4436 = vpop.xlane.xlu0 %4435
  %v4437 = vadd.f32 %v3992, %v4122
  %v4438 = vadd.f32 %v4437, %v4252
  %v4439 = vadd.f32 %v4438, %v4382
  %4440 = vadd.xlane.f32.xlu0 %v4439
  %v4441 = vpop.xlane.xlu0 %4440
  %v4442 = vadd.f32 %v3995, %v4125
  %v4443 = vadd.f32 %v4442, %v4255
  %v4444 = vadd.f32 %v4443, %v4385
  %4445 = vadd.xlane.f32.xlu0 %v4444
  %v4446 = vpop.xlane.xlu0 %4445
  %v4447 = vadd.f32 %v3998, %v4128
  %v4448 = vadd.f32 %v4447, %v4258
  %v4449 = vadd.f32 %v4448, %v4388
  %4450 = vadd.xlane.f32.xlu0 %v4449
  %v4451 = vpop.xlane.xlu0 %4450
  %v4452 = vadd.f32 %v4001, %v4131
  %v4453 = vadd.f32 %v4452, %v4261
  %v4454 = vadd.f32 %v4453, %v4391
  %4455 = vadd.xlane.f32.xlu0 %v4454
  %v4456 = vpop.xlane.xlu0 %4455
  %v4457 = vadd.f32 %v4004, %v4134
  %v4458 = vadd.f32 %v4457, %v4264
  %v4459 = vadd.f32 %v4458, %v4394
  %4460 = vadd.xlane.f32.xlu0 %v4459
  %v4461 = vpop.xlane.xlu0 %4460
  %v4462 = vadd.f32 %v4007, %v4137
  %v4463 = vadd.f32 %v4462, %v4267
  %v4464 = vadd.f32 %v4463, %v4397
  %4465 = vadd.xlane.f32.xlu0 %v4464
  %v4466 = vpop.xlane.xlu0 %4465
  %v4467 = vadd.f32 %v4010, %v4140
  %v4468 = vadd.f32 %v4467, %v4270
  %v4469 = vadd.f32 %v4468, %v4400
  %4470 = vadd.xlane.f32.xlu0 %v4469
  %v4471 = vpop.xlane.xlu0 %4470
  %v4472 = vadd.f32 %v4013, %v4143
  %v4473 = vadd.f32 %v4472, %v4273
  %v4474 = vadd.f32 %v4473, %v4403
  %4475 = vadd.xlane.f32.xlu0 %v4474
  %v4476 = vpop.xlane.xlu0 %4475
  %v4477 = vadd.f32 %v4016, %v4146
  %v4478 = vadd.f32 %v4477, %v4276
  %v4479 = vadd.f32 %v4478, %v4406
  %4480 = vadd.xlane.f32.xlu0 %v4479
  %v4481 = vpop.xlane.xlu0 %4480
  %v4482 = vadd.f32 %v4019, %v4149
  %v4483 = vadd.f32 %v4482, %v4279
  %v4484 = vadd.f32 %v4483, %v4409
  %4485 = vadd.xlane.f32.xlu0 %v4484
  %v4486 = vpop.xlane.xlu0 %4485
  %v4487 = vadd.f32 %v4022, %v4152
  %v4488 = vadd.f32 %v4487, %v4282
  %v4489 = vadd.f32 %v4488, %v4412
  %4490 = vadd.xlane.f32.xlu0 %v4489
  %v4491 = vpop.xlane.xlu0 %4490
  %v4492 = vadd.f32 %v4025, %v4155
  %v4493 = vadd.f32 %v4492, %v4285
  %v4494 = vadd.f32 %v4493, %v4415
  %4495 = vadd.xlane.f32.xlu0 %v4494
  %v4496 = vpop.xlane.xlu0 %4495
  %v4497 = vadd.f32 %v4028, %v4158
  %v4498 = vadd.f32 %v4497, %v4288
  %v4499 = vadd.f32 %v4498, %v4418
  %4500 = vadd.xlane.f32.xlu0 %v4499
  %v4501 = vpop.xlane.xlu0 %4500
  %v4502 = vmul.f32 %v4426, %v512
  %v4503 = vmul.f32 %v4431, %v512
  %v4504 = vmul.f32 %v4436, %v512
  %v4505 = vmul.f32 %v4441, %v512
  %v4506 = vmul.f32 %v4446, %v512
  %v4507 = vmul.f32 %v4451, %v512
  %v4508 = vmul.f32 %v4456, %v512
  %v4509 = vmul.f32 %v4461, %v512
  %v4510 = vmul.f32 %v4466, %v512
  %v4511 = vmul.f32 %v4471, %v512
  %v4512 = vmul.f32 %v4476, %v512
  %v4513 = vmul.f32 %v4481, %v512
  %v4514 = vmul.f32 %v4486, %v512
  %v4515 = vmul.f32 %v4491, %v512
  %v4516 = vmul.f32 %v4496, %v512
  %v4517 = vmul.f32 %v4501, %v512
  %v4518 = vsub.f32 %v3983, %v4502
  %v4519 = vsub.f32 %v4113, %v4502
  %v4520 = vsub.f32 %v4243, %v4502
  %v4521 = vsub.f32 %v4373, %v4502
  %v4522 = vsub.f32 %v3986, %v4503
  %v4523 = vsub.f32 %v4116, %v4503
  %v4524 = vsub.f32 %v4246, %v4503
  %v4525 = vsub.f32 %v4376, %v4503
  %v4526 = vsub.f32 %v3989, %v4504
  %v4527 = vsub.f32 %v4119, %v4504
  %v4528 = vsub.f32 %v4249, %v4504
  %v4529 = vsub.f32 %v4379, %v4504
  %v4530 = vsub.f32 %v3992, %v4505
  %v4531 = vsub.f32 %v4122, %v4505
  %v4532 = vsub.f32 %v4252, %v4505
  %v4533 = vsub.f32 %v4382, %v4505
  %v4534 = vsub.f32 %v3995, %v4506
  %v4535 = vsub.f32 %v4125, %v4506
  %v4536 = vsub.f32 %v4255, %v4506
  %v4537 = vsub.f32 %v4385, %v4506
  %v4538 = vsub.f32 %v3998, %v4507
  %v4539 = vsub.f32 %v4128, %v4507
  %v4540 = vsub.f32 %v4258, %v4507
  %v4541 = vsub.f32 %v4388, %v4507
  %v4542 = vsub.f32 %v4001, %v4508
  %v4543 = vsub.f32 %v4131, %v4508
  %v4544 = vsub.f32 %v4261, %v4508
  %v4545 = vsub.f32 %v4391, %v4508
  %v4546 = vsub.f32 %v4004, %v4509
  %v4547 = vsub.f32 %v4134, %v4509
  %v4548 = vsub.f32 %v4264, %v4509
  %v4549 = vsub.f32 %v4394, %v4509
  %v4550 = vsub.f32 %v4007, %v4510
  %v4551 = vsub.f32 %v4137, %v4510
  %v4552 = vsub.f32 %v4267, %v4510
  %v4553 = vsub.f32 %v4397, %v4510
  %v4554 = vsub.f32 %v4010, %v4511
  %v4555 = vsub.f32 %v4140, %v4511
  %v4556 = vsub.f32 %v4270, %v4511
  %v4557 = vsub.f32 %v4400, %v4511
  %v4558 = vsub.f32 %v4013, %v4512
  %v4559 = vsub.f32 %v4143, %v4512
  %v4560 = vsub.f32 %v4273, %v4512
  %v4561 = vsub.f32 %v4403, %v4512
  %v4562 = vsub.f32 %v4016, %v4513
  %v4563 = vsub.f32 %v4146, %v4513
  %v4564 = vsub.f32 %v4276, %v4513
  %v4565 = vsub.f32 %v4406, %v4513
  %v4566 = vsub.f32 %v4019, %v4514
  %v4567 = vsub.f32 %v4149, %v4514
  %v4568 = vsub.f32 %v4279, %v4514
  %v4569 = vsub.f32 %v4409, %v4514
  %v4570 = vsub.f32 %v4022, %v4515
  %v4571 = vsub.f32 %v4152, %v4515
  %v4572 = vsub.f32 %v4282, %v4515
  %v4573 = vsub.f32 %v4412, %v4515
  %v4574 = vsub.f32 %v4025, %v4516
  %v4575 = vsub.f32 %v4155, %v4516
  %v4576 = vsub.f32 %v4285, %v4516
  %v4577 = vsub.f32 %v4415, %v4516
  %v4578 = vsub.f32 %v4028, %v4517
  %v4579 = vsub.f32 %v4158, %v4517
  %v4580 = vsub.f32 %v4288, %v4517
  %v4581 = vsub.f32 %v4418, %v4517
  %v4582 = vmul.f32 %v4518, %v4518
  %v4583 = vmul.f32 %v4519, %v4519
  %v4584 = vmul.f32 %v4520, %v4520
  %v4585 = vmul.f32 %v4521, %v4521
  %v4586 = vmul.f32 %v4522, %v4522
  %v4587 = vmul.f32 %v4523, %v4523
  %v4588 = vmul.f32 %v4524, %v4524
  %v4589 = vmul.f32 %v4525, %v4525
  %v4590 = vmul.f32 %v4526, %v4526
  %v4591 = vmul.f32 %v4527, %v4527
  %v4592 = vmul.f32 %v4528, %v4528
  %v4593 = vmul.f32 %v4529, %v4529
  %v4594 = vmul.f32 %v4530, %v4530
  %v4595 = vmul.f32 %v4531, %v4531
  %v4596 = vmul.f32 %v4532, %v4532
  %v4597 = vmul.f32 %v4533, %v4533
  %v4598 = vmul.f32 %v4534, %v4534
  %v4599 = vmul.f32 %v4535, %v4535
  %v4600 = vmul.f32 %v4536, %v4536
  %v4601 = vmul.f32 %v4537, %v4537
  %v4602 = vmul.f32 %v4538, %v4538
  %v4603 = vmul.f32 %v4539, %v4539
  %v4604 = vmul.f32 %v4540, %v4540
  %v4605 = vmul.f32 %v4541, %v4541
  %v4606 = vmul.f32 %v4542, %v4542
  %v4607 = vmul.f32 %v4543, %v4543
  %v4608 = vmul.f32 %v4544, %v4544
  %v4609 = vmul.f32 %v4545, %v4545
  %v4610 = vmul.f32 %v4546, %v4546
  %v4611 = vmul.f32 %v4547, %v4547
  %v4612 = vmul.f32 %v4548, %v4548
  %v4613 = vmul.f32 %v4549, %v4549
  %v4614 = vmul.f32 %v4550, %v4550
  %v4615 = vmul.f32 %v4551, %v4551
  %v4616 = vmul.f32 %v4552, %v4552
  %v4617 = vmul.f32 %v4553, %v4553
  %v4618 = vmul.f32 %v4554, %v4554
  %v4619 = vmul.f32 %v4555, %v4555
  %v4620 = vmul.f32 %v4556, %v4556
  %v4621 = vmul.f32 %v4557, %v4557
  %v4622 = vmul.f32 %v4558, %v4558
  %v4623 = vmul.f32 %v4559, %v4559
  %v4624 = vmul.f32 %v4560, %v4560
  %v4625 = vmul.f32 %v4561, %v4561
  %v4626 = vmul.f32 %v4562, %v4562
  %v4627 = vmul.f32 %v4563, %v4563
  %v4628 = vmul.f32 %v4564, %v4564
  %v4629 = vmul.f32 %v4565, %v4565
  %v4630 = vmul.f32 %v4566, %v4566
  %v4631 = vmul.f32 %v4567, %v4567
  %v4632 = vmul.f32 %v4568, %v4568
  %v4633 = vmul.f32 %v4569, %v4569
  %v4634 = vmul.f32 %v4570, %v4570
  %v4635 = vmul.f32 %v4571, %v4571
  %v4636 = vmul.f32 %v4572, %v4572
  %v4637 = vmul.f32 %v4573, %v4573
  %v4638 = vmul.f32 %v4574, %v4574
  %v4639 = vmul.f32 %v4575, %v4575
  %v4640 = vmul.f32 %v4576, %v4576
  %v4641 = vmul.f32 %v4577, %v4577
  %v4642 = vmul.f32 %v4578, %v4578
  %v4643 = vmul.f32 %v4579, %v4579
  %v4644 = vmul.f32 %v4580, %v4580
  %v4645 = vmul.f32 %v4581, %v4581
  %v4646 = vadd.f32 %v4582, %v4583
  %v4647 = vadd.f32 %v4646, %v4584
  %v4648 = vadd.f32 %v4647, %v4585
  %4649 = vadd.xlane.f32.xlu0 %v4648
  %v4650 = vpop.xlane.xlu0 %4649
  %v4651 = vadd.f32 %v4586, %v4587
  %v4652 = vadd.f32 %v4651, %v4588
  %v4653 = vadd.f32 %v4652, %v4589
  %4654 = vadd.xlane.f32.xlu0 %v4653
  %v4655 = vpop.xlane.xlu0 %4654
  %v4656 = vadd.f32 %v4590, %v4591
  %v4657 = vadd.f32 %v4656, %v4592
  %v4658 = vadd.f32 %v4657, %v4593
  %4659 = vadd.xlane.f32.xlu0 %v4658
  %v4660 = vpop.xlane.xlu0 %4659
  %v4661 = vadd.f32 %v4594, %v4595
  %v4662 = vadd.f32 %v4661, %v4596
  %v4663 = vadd.f32 %v4662, %v4597
  %4664 = vadd.xlane.f32.xlu0 %v4663
  %v4665 = vpop.xlane.xlu0 %4664
  %v4666 = vadd.f32 %v4598, %v4599
  %v4667 = vadd.f32 %v4666, %v4600
  %v4668 = vadd.f32 %v4667, %v4601
  %4669 = vadd.xlane.f32.xlu0 %v4668
  %v4670 = vpop.xlane.xlu0 %4669
  %v4671 = vadd.f32 %v4602, %v4603
  %v4672 = vadd.f32 %v4671, %v4604
  %v4673 = vadd.f32 %v4672, %v4605
  %4674 = vadd.xlane.f32.xlu0 %v4673
  %v4675 = vpop.xlane.xlu0 %4674
  %v4676 = vadd.f32 %v4606, %v4607
  %v4677 = vadd.f32 %v4676, %v4608
  %v4678 = vadd.f32 %v4677, %v4609
  %4679 = vadd.xlane.f32.xlu0 %v4678
  %v4680 = vpop.xlane.xlu0 %4679
  %v4681 = vadd.f32 %v4610, %v4611
  %v4682 = vadd.f32 %v4681, %v4612
  %v4683 = vadd.f32 %v4682, %v4613
  %4684 = vadd.xlane.f32.xlu0 %v4683
  %v4685 = vpop.xlane.xlu0 %4684
  %v4686 = vadd.f32 %v4614, %v4615
  %v4687 = vadd.f32 %v4686, %v4616
  %v4688 = vadd.f32 %v4687, %v4617
  %4689 = vadd.xlane.f32.xlu0 %v4688
  %v4690 = vpop.xlane.xlu0 %4689
  %v4691 = vadd.f32 %v4618, %v4619
  %v4692 = vadd.f32 %v4691, %v4620
  %v4693 = vadd.f32 %v4692, %v4621
  %4694 = vadd.xlane.f32.xlu0 %v4693
  %v4695 = vpop.xlane.xlu0 %4694
  %v4696 = vadd.f32 %v4622, %v4623
  %v4697 = vadd.f32 %v4696, %v4624
  %v4698 = vadd.f32 %v4697, %v4625
  %4699 = vadd.xlane.f32.xlu0 %v4698
  %v4700 = vpop.xlane.xlu0 %4699
  %v4701 = vadd.f32 %v4626, %v4627
  %v4702 = vadd.f32 %v4701, %v4628
  %v4703 = vadd.f32 %v4702, %v4629
  %4704 = vadd.xlane.f32.xlu0 %v4703
  %v4705 = vpop.xlane.xlu0 %4704
  %v4706 = vadd.f32 %v4630, %v4631
  %v4707 = vadd.f32 %v4706, %v4632
  %v4708 = vadd.f32 %v4707, %v4633
  %4709 = vadd.xlane.f32.xlu0 %v4708
  %v4710 = vpop.xlane.xlu0 %4709
  %v4711 = vadd.f32 %v4634, %v4635
  %v4712 = vadd.f32 %v4711, %v4636
  %v4713 = vadd.f32 %v4712, %v4637
  %4714 = vadd.xlane.f32.xlu0 %v4713
  %v4715 = vpop.xlane.xlu0 %4714
  %v4716 = vadd.f32 %v4638, %v4639
  %v4717 = vadd.f32 %v4716, %v4640
  %v4718 = vadd.f32 %v4717, %v4641
  %4719 = vadd.xlane.f32.xlu0 %v4718
  %v4720 = vpop.xlane.xlu0 %4719
  %v4721 = vadd.f32 %v4642, %v4643
  %v4722 = vadd.f32 %v4721, %v4644
  %v4723 = vadd.f32 %v4722, %v4645
  %4724 = vadd.xlane.f32.xlu0 %v4723
  %v4725 = vpop.xlane.xlu0 %4724
  %v4726 = vmul.f32 %v4650, %v512
  %v4727 = vmul.f32 %v4655, %v512
  %v4728 = vmul.f32 %v4660, %v512
  %v4729 = vmul.f32 %v4665, %v512
  %v4730 = vmul.f32 %v4670, %v512
  %v4731 = vmul.f32 %v4675, %v512
  %v4732 = vmul.f32 %v4680, %v512
  %v4733 = vmul.f32 %v4685, %v512
  %v4734 = vmul.f32 %v4690, %v512
  %v4735 = vmul.f32 %v4695, %v512
  %v4736 = vmul.f32 %v4700, %v512
  %v4737 = vmul.f32 %v4705, %v512
  %v4738 = vmul.f32 %v4710, %v512
  %v4739 = vmul.f32 %v4715, %v512
  %v4740 = vmul.f32 %v4720, %v512
  %v4741 = vmul.f32 %v4725, %v512
  %v4742 = vadd.f32 %v4726, 1e-05
  %v4743 = vadd.f32 %v4727, 1e-05
  %v4744 = vadd.f32 %v4728, 1e-05
  %v4745 = vadd.f32 %v4729, 1e-05
  %v4746 = vadd.f32 %v4730, 1e-05
  %v4747 = vadd.f32 %v4731, 1e-05
  %v4748 = vadd.f32 %v4732, 1e-05
  %v4749 = vadd.f32 %v4733, 1e-05
  %v4750 = vadd.f32 %v4734, 1e-05
  %v4751 = vadd.f32 %v4735, 1e-05
  %v4752 = vadd.f32 %v4736, 1e-05
  %v4753 = vadd.f32 %v4737, 1e-05
  %v4754 = vadd.f32 %v4738, 1e-05
  %v4755 = vadd.f32 %v4739, 1e-05
  %v4756 = vadd.f32 %v4740, 1e-05
  %v4757 = vadd.f32 %v4741, 1e-05
  %v4758 = vrsqrt.pop %v4742
  %v4759 = vmul.f32 %v4758, %v4742
  %v4760 = vmul.f32 %v4759, %v4758
  %v4761 = vmul.f32 0.5, %v4760
  %v4762 = vsub.f32 1.5, %v4761
  %v4763 = vmul.f32 %v4758, %v4762
  %vm4764 = vweird.f32 %v4742
  %vm4765 = vweird.f32 %v4758
  %vm4766 = vmor %vm4764, %vm4765
  %v4767 = vsel %vm4766, %v4758, %v4763
  %v4768 = vrsqrt.pop %v4743
  %v4769 = vmul.f32 %v4768, %v4743
  %v4770 = vmul.f32 %v4769, %v4768
  %v4771 = vmul.f32 0.5, %v4770
  %v4772 = vsub.f32 1.5, %v4771
  %v4773 = vmul.f32 %v4768, %v4772
  %vm4774 = vweird.f32 %v4743
  %vm4775 = vweird.f32 %v4768
  %vm4776 = vmor %vm4774, %vm4775
  %v4777 = vsel %vm4776, %v4768, %v4773
  %v4778 = vrsqrt.pop %v4744
  %v4779 = vmul.f32 %v4778, %v4744
  %v4780 = vmul.f32 %v4779, %v4778
  %v4781 = vmul.f32 0.5, %v4780
  %v4782 = vsub.f32 1.5, %v4781
  %v4783 = vmul.f32 %v4778, %v4782
  %vm4784 = vweird.f32 %v4744
  %vm4785 = vweird.f32 %v4778
  %vm4786 = vmor %vm4784, %vm4785
  %v4787 = vsel %vm4786, %v4778, %v4783
  %v4788 = vrsqrt.pop %v4745
  %v4789 = vmul.f32 %v4788, %v4745
  %v4790 = vmul.f32 %v4789, %v4788
  %v4791 = vmul.f32 0.5, %v4790
  %v4792 = vsub.f32 1.5, %v4791
  %v4793 = vmul.f32 %v4788, %v4792
  %vm4794 = vweird.f32 %v4745
  %vm4795 = vweird.f32 %v4788
  %vm4796 = vmor %vm4794, %vm4795
  %v4797 = vsel %vm4796, %v4788, %v4793
  %v4798 = vrsqrt.pop %v4746
  %v4799 = vmul.f32 %v4798, %v4746
  %v4800 = vmul.f32 %v4799, %v4798
  %v4801 = vmul.f32 0.5, %v4800
  %v4802 = vsub.f32 1.5, %v4801
  %v4803 = vmul.f32 %v4798, %v4802
  %vm4804 = vweird.f32 %v4746
  %vm4805 = vweird.f32 %v4798
  %vm4806 = vmor %vm4804, %vm4805
  %v4807 = vsel %vm4806, %v4798, %v4803
  %v4808 = vrsqrt.pop %v4747
  %v4809 = vmul.f32 %v4808, %v4747
  %v4810 = vmul.f32 %v4809, %v4808
  %v4811 = vmul.f32 0.5, %v4810
  %v4812 = vsub.f32 1.5, %v4811
  %v4813 = vmul.f32 %v4808, %v4812
  %vm4814 = vweird.f32 %v4747
  %vm4815 = vweird.f32 %v4808
  %vm4816 = vmor %vm4814, %vm4815
  %v4817 = vsel %vm4816, %v4808, %v4813
  %v4818 = vrsqrt.pop %v4748
  %v4819 = vmul.f32 %v4818, %v4748
  %v4820 = vmul.f32 %v4819, %v4818
  %v4821 = vmul.f32 0.5, %v4820
  %v4822 = vsub.f32 1.5, %v4821
  %v4823 = vmul.f32 %v4818, %v4822
  %vm4824 = vweird.f32 %v4748
  %vm4825 = vweird.f32 %v4818
  %vm4826 = vmor %vm4824, %vm4825
  %v4827 = vsel %vm4826, %v4818, %v4823
  %v4828 = vrsqrt.pop %v4749
  %v4829 = vmul.f32 %v4828, %v4749
  %v4830 = vmul.f32 %v4829, %v4828
  %v4831 = vmul.f32 0.5, %v4830
  %v4832 = vsub.f32 1.5, %v4831
  %v4833 = vmul.f32 %v4828, %v4832
  %vm4834 = vweird.f32 %v4749
  %vm4835 = vweird.f32 %v4828
  %vm4836 = vmor %vm4834, %vm4835
  %v4837 = vsel %vm4836, %v4828, %v4833
  %v4838 = vrsqrt.pop %v4750
  %v4839 = vmul.f32 %v4838, %v4750
  %v4840 = vmul.f32 %v4839, %v4838
  %v4841 = vmul.f32 0.5, %v4840
  %v4842 = vsub.f32 1.5, %v4841
  %v4843 = vmul.f32 %v4838, %v4842
  %vm4844 = vweird.f32 %v4750
  %vm4845 = vweird.f32 %v4838
  %vm4846 = vmor %vm4844, %vm4845
  %v4847 = vsel %vm4846, %v4838, %v4843
  %v4848 = vrsqrt.pop %v4751
  %v4849 = vmul.f32 %v4848, %v4751
  %v4850 = vmul.f32 %v4849, %v4848
  %v4851 = vmul.f32 0.5, %v4850
  %v4852 = vsub.f32 1.5, %v4851
  %v4853 = vmul.f32 %v4848, %v4852
  %vm4854 = vweird.f32 %v4751
  %vm4855 = vweird.f32 %v4848
  %vm4856 = vmor %vm4854, %vm4855
  %v4857 = vsel %vm4856, %v4848, %v4853
  %v4858 = vrsqrt.pop %v4752
  %v4859 = vmul.f32 %v4858, %v4752
  %v4860 = vmul.f32 %v4859, %v4858
  %v4861 = vmul.f32 0.5, %v4860
  %v4862 = vsub.f32 1.5, %v4861
  %v4863 = vmul.f32 %v4858, %v4862
  %vm4864 = vweird.f32 %v4752
  %vm4865 = vweird.f32 %v4858
  %vm4866 = vmor %vm4864, %vm4865
  %v4867 = vsel %vm4866, %v4858, %v4863
  %v4868 = vrsqrt.pop %v4753
  %v4869 = vmul.f32 %v4868, %v4753
  %v4870 = vmul.f32 %v4869, %v4868
  %v4871 = vmul.f32 0.5, %v4870
  %v4872 = vsub.f32 1.5, %v4871
  %v4873 = vmul.f32 %v4868, %v4872
  %vm4874 = vweird.f32 %v4753
  %vm4875 = vweird.f32 %v4868
  %vm4876 = vmor %vm4874, %vm4875
  %v4877 = vsel %vm4876, %v4868, %v4873
  %v4878 = vrsqrt.pop %v4754
  %v4879 = vmul.f32 %v4878, %v4754
  %v4880 = vmul.f32 %v4879, %v4878
  %v4881 = vmul.f32 0.5, %v4880
  %v4882 = vsub.f32 1.5, %v4881
  %v4883 = vmul.f32 %v4878, %v4882
  %vm4884 = vweird.f32 %v4754
  %vm4885 = vweird.f32 %v4878
  %vm4886 = vmor %vm4884, %vm4885
  %v4887 = vsel %vm4886, %v4878, %v4883
  %v4888 = vrsqrt.pop %v4755
  %v4889 = vmul.f32 %v4888, %v4755
  %v4890 = vmul.f32 %v4889, %v4888
  %v4891 = vmul.f32 0.5, %v4890
  %v4892 = vsub.f32 1.5, %v4891
  %v4893 = vmul.f32 %v4888, %v4892
  %vm4894 = vweird.f32 %v4755
  %vm4895 = vweird.f32 %v4888
  %vm4896 = vmor %vm4894, %vm4895
  %v4897 = vsel %vm4896, %v4888, %v4893
  %v4898 = vrsqrt.pop %v4756
  %v4899 = vmul.f32 %v4898, %v4756
  %v4900 = vmul.f32 %v4899, %v4898
  %v4901 = vmul.f32 0.5, %v4900
  %v4902 = vsub.f32 1.5, %v4901
  %v4903 = vmul.f32 %v4898, %v4902
  %vm4904 = vweird.f32 %v4756
  %vm4905 = vweird.f32 %v4898
  %vm4906 = vmor %vm4904, %vm4905
  %v4907 = vsel %vm4906, %v4898, %v4903
  %v4908 = vrsqrt.pop %v4757
  %v4909 = vmul.f32 %v4908, %v4757
  %v4910 = vmul.f32 %v4909, %v4908
  %v4911 = vmul.f32 0.5, %v4910
  %v4912 = vsub.f32 1.5, %v4911
  %v4913 = vmul.f32 %v4908, %v4912
  %vm4914 = vweird.f32 %v4757
  %vm4915 = vweird.f32 %v4908
  %vm4916 = vmor %vm4914, %vm4915
  %v4917 = vsel %vm4916, %v4908, %v4913
  %v4918 = vmul.f32 %v4518, %v4767
  %v4919 = vmul.f32 %v4519, %v4767
  %v4920 = vmul.f32 %v4520, %v4767
  %v4921 = vmul.f32 %v4521, %v4767
  %v4922 = vmul.f32 %v4522, %v4777
  %v4923 = vmul.f32 %v4523, %v4777
  %v4924 = vmul.f32 %v4524, %v4777
  %v4925 = vmul.f32 %v4525, %v4777
  %v4926 = vmul.f32 %v4526, %v4787
  %v4927 = vmul.f32 %v4527, %v4787
  %v4928 = vmul.f32 %v4528, %v4787
  %v4929 = vmul.f32 %v4529, %v4787
  %v4930 = vmul.f32 %v4530, %v4797
  %v4931 = vmul.f32 %v4531, %v4797
  %v4932 = vmul.f32 %v4532, %v4797
  %v4933 = vmul.f32 %v4533, %v4797
  %v4934 = vmul.f32 %v4534, %v4807
  %v4935 = vmul.f32 %v4535, %v4807
  %v4936 = vmul.f32 %v4536, %v4807
  %v4937 = vmul.f32 %v4537, %v4807
  %v4938 = vmul.f32 %v4538, %v4817
  %v4939 = vmul.f32 %v4539, %v4817
  %v4940 = vmul.f32 %v4540, %v4817
  %v4941 = vmul.f32 %v4541, %v4817
  %v4942 = vmul.f32 %v4542, %v4827
  %v4943 = vmul.f32 %v4543, %v4827
  %v4944 = vmul.f32 %v4544, %v4827
  %v4945 = vmul.f32 %v4545, %v4827
  %v4946 = vmul.f32 %v4546, %v4837
  %v4947 = vmul.f32 %v4547, %v4837
  %v4948 = vmul.f32 %v4548, %v4837
  %v4949 = vmul.f32 %v4549, %v4837
  %v4950 = vmul.f32 %v4550, %v4847
  %v4951 = vmul.f32 %v4551, %v4847
  %v4952 = vmul.f32 %v4552, %v4847
  %v4953 = vmul.f32 %v4553, %v4847
  %v4954 = vmul.f32 %v4554, %v4857
  %v4955 = vmul.f32 %v4555, %v4857
  %v4956 = vmul.f32 %v4556, %v4857
  %v4957 = vmul.f32 %v4557, %v4857
  %v4958 = vmul.f32 %v4558, %v4867
  %v4959 = vmul.f32 %v4559, %v4867
  %v4960 = vmul.f32 %v4560, %v4867
  %v4961 = vmul.f32 %v4561, %v4867
  %v4962 = vmul.f32 %v4562, %v4877
  %v4963 = vmul.f32 %v4563, %v4877
  %v4964 = vmul.f32 %v4564, %v4877
  %v4965 = vmul.f32 %v4565, %v4877
  %v4966 = vmul.f32 %v4566, %v4887
  %v4967 = vmul.f32 %v4567, %v4887
  %v4968 = vmul.f32 %v4568, %v4887
  %v4969 = vmul.f32 %v4569, %v4887
  %v4970 = vmul.f32 %v4570, %v4897
  %v4971 = vmul.f32 %v4571, %v4897
  %v4972 = vmul.f32 %v4572, %v4897
  %v4973 = vmul.f32 %v4573, %v4897
  %v4974 = vmul.f32 %v4574, %v4907
  %v4975 = vmul.f32 %v4575, %v4907
  %v4976 = vmul.f32 %v4576, %v4907
  %v4977 = vmul.f32 %v4577, %v4907
  %v4978 = vmul.f32 %v4578, %v4917
  %v4979 = vmul.f32 %v4579, %v4917
  %v4980 = vmul.f32 %v4580, %v4917
  %v4981 = vmul.f32 %v4581, %v4917
  %v4983 = vperm.slane %v4420, 0
  %v4984 = vperm.slane %v4420, 1
  %v4985 = vperm.slane %v4420, 2
  %v4986 = vperm.slane %v4420, 3
  %v4991 = vmul.f32 %v4918, %v4983
  %v4992 = vmul.f32 %v4919, %v4984
  %v4993 = vmul.f32 %v4920, %v4985
  %v4994 = vmul.f32 %v4921, %v4986
  %v4995 = vmul.f32 %v4922, %v4983
  %v4996 = vmul.f32 %v4923, %v4984
  %v4997 = vmul.f32 %v4924, %v4985
  %v4998 = vmul.f32 %v4925, %v4986
  %v4999 = vmul.f32 %v4926, %v4983
  %v5000 = vmul.f32 %v4927, %v4984
  %v5001 = vmul.f32 %v4928, %v4985
  %v5002 = vmul.f32 %v4929, %v4986
  %v5003 = vmul.f32 %v4930, %v4983
  %v5004 = vmul.f32 %v4931, %v4984
  %v5005 = vmul.f32 %v4932, %v4985
  %v5006 = vmul.f32 %v4933, %v4986
  %v5007 = vmul.f32 %v4934, %v4983
  %v5008 = vmul.f32 %v4935, %v4984
  %v5009 = vmul.f32 %v4936, %v4985
  %v5010 = vmul.f32 %v4937, %v4986
  %v5011 = vmul.f32 %v4938, %v4983
  %v5012 = vmul.f32 %v4939, %v4984
  %v5013 = vmul.f32 %v4940, %v4985
  %v5014 = vmul.f32 %v4941, %v4986
  %v5015 = vmul.f32 %v4942, %v4983
  %v5016 = vmul.f32 %v4943, %v4984
  %v5017 = vmul.f32 %v4944, %v4985
  %v5018 = vmul.f32 %v4945, %v4986
  %v5019 = vmul.f32 %v4946, %v4983
  %v5020 = vmul.f32 %v4947, %v4984
  %v5021 = vmul.f32 %v4948, %v4985
  %v5022 = vmul.f32 %v4949, %v4986
  %v5023 = vmul.f32 %v4950, %v4983
  %v5024 = vmul.f32 %v4951, %v4984
  %v5025 = vmul.f32 %v4952, %v4985
  %v5026 = vmul.f32 %v4953, %v4986
  %v5027 = vmul.f32 %v4954, %v4983
  %v5028 = vmul.f32 %v4955, %v4984
  %v5029 = vmul.f32 %v4956, %v4985
  %v5030 = vmul.f32 %v4957, %v4986
  %v5031 = vmul.f32 %v4958, %v4983
  %v5032 = vmul.f32 %v4959, %v4984
  %v5033 = vmul.f32 %v4960, %v4985
  %v5034 = vmul.f32 %v4961, %v4986
  %v5035 = vmul.f32 %v4962, %v4983
  %v5036 = vmul.f32 %v4963, %v4984
  %v5037 = vmul.f32 %v4964, %v4985
  %v5038 = vmul.f32 %v4965, %v4986
  %v5039 = vmul.f32 %v4966, %v4983
  %v5040 = vmul.f32 %v4967, %v4984
  %v5041 = vmul.f32 %v4968, %v4985
  %v5042 = vmul.f32 %v4969, %v4986
  %v5043 = vmul.f32 %v4970, %v4983
  %v5044 = vmul.f32 %v4971, %v4984
  %v5045 = vmul.f32 %v4972, %v4985
  %v5046 = vmul.f32 %v4973, %v4986
  %v5047 = vmul.f32 %v4974, %v4983
  %v5048 = vmul.f32 %v4975, %v4984
  %v5049 = vmul.f32 %v4976, %v4985
  %v5050 = vmul.f32 %v4977, %v4986
  %v5051 = vmul.f32 %v4978, %v4983
  %v5052 = vmul.f32 %v4979, %v4984
  %v5053 = vmul.f32 %v4980, %v4985
  %v5054 = vmul.f32 %v4981, %v4986
  %v5056 = vperm.slane %v4421, 0
  %v5057 = vperm.slane %v4421, 1
  %v5058 = vperm.slane %v4421, 2
  %v5059 = vperm.slane %v4421, 3
  %v5064 = vadd.f32 %v4991, %v5056
  %v5065 = vadd.f32 %v4992, %v5057
  %v5066 = vadd.f32 %v4993, %v5058
  %v5067 = vadd.f32 %v4994, %v5059
  %v5068 = vadd.f32 %v4995, %v5056
  %v5069 = vadd.f32 %v4996, %v5057
  %v5070 = vadd.f32 %v4997, %v5058
  %v5071 = vadd.f32 %v4998, %v5059
  %v5072 = vadd.f32 %v4999, %v5056
  %v5073 = vadd.f32 %v5000, %v5057
  %v5074 = vadd.f32 %v5001, %v5058
  %v5075 = vadd.f32 %v5002, %v5059
  %v5076 = vadd.f32 %v5003, %v5056
  %v5077 = vadd.f32 %v5004, %v5057
  %v5078 = vadd.f32 %v5005, %v5058
  %v5079 = vadd.f32 %v5006, %v5059
  %v5080 = vadd.f32 %v5007, %v5056
  %v5081 = vadd.f32 %v5008, %v5057
  %v5082 = vadd.f32 %v5009, %v5058
  %v5083 = vadd.f32 %v5010, %v5059
  %v5084 = vadd.f32 %v5011, %v5056
  %v5085 = vadd.f32 %v5012, %v5057
  %v5086 = vadd.f32 %v5013, %v5058
  %v5087 = vadd.f32 %v5014, %v5059
  %v5088 = vadd.f32 %v5015, %v5056
  %v5089 = vadd.f32 %v5016, %v5057
  %v5090 = vadd.f32 %v5017, %v5058
  %v5091 = vadd.f32 %v5018, %v5059
  %v5092 = vadd.f32 %v5019, %v5056
  %v5093 = vadd.f32 %v5020, %v5057
  %v5094 = vadd.f32 %v5021, %v5058
  %v5095 = vadd.f32 %v5022, %v5059
  %v5096 = vadd.f32 %v5023, %v5056
  %v5097 = vadd.f32 %v5024, %v5057
  %v5098 = vadd.f32 %v5025, %v5058
  %v5099 = vadd.f32 %v5026, %v5059
  %v5100 = vadd.f32 %v5027, %v5056
  %v5101 = vadd.f32 %v5028, %v5057
  %v5102 = vadd.f32 %v5029, %v5058
  %v5103 = vadd.f32 %v5030, %v5059
  %v5104 = vadd.f32 %v5031, %v5056
  %v5105 = vadd.f32 %v5032, %v5057
  %v5106 = vadd.f32 %v5033, %v5058
  %v5107 = vadd.f32 %v5034, %v5059
  %v5108 = vadd.f32 %v5035, %v5056
  %v5109 = vadd.f32 %v5036, %v5057
  %v5110 = vadd.f32 %v5037, %v5058
  %v5111 = vadd.f32 %v5038, %v5059
  %v5112 = vadd.f32 %v5039, %v5056
  %v5113 = vadd.f32 %v5040, %v5057
  %v5114 = vadd.f32 %v5041, %v5058
  %v5115 = vadd.f32 %v5042, %v5059
  %v5116 = vadd.f32 %v5043, %v5056
  %v5117 = vadd.f32 %v5044, %v5057
  %v5118 = vadd.f32 %v5045, %v5058
  %v5119 = vadd.f32 %v5046, %v5059
  %v5120 = vadd.f32 %v5047, %v5056
  %v5121 = vadd.f32 %v5048, %v5057
  %v5122 = vadd.f32 %v5049, %v5058
  %v5123 = vadd.f32 %v5050, %v5059
  %v5124 = vadd.f32 %v5051, %v5056
  %v5125 = vadd.f32 %v5052, %v5057
  %v5126 = vadd.f32 %v5053, %v5058
  %v5127 = vadd.f32 %v5054, %v5059
  %vm5128 = vcmp.gt.f32.partialorder %v5064, 0.0
  %vm5129 = vcmp.gt.f32.partialorder %v5065, 0.0
  %vm5130 = vcmp.gt.f32.partialorder %v5066, 0.0
  %vm5131 = vcmp.gt.f32.partialorder %v5067, 0.0
  %vm5132 = vcmp.gt.f32.partialorder %v5068, 0.0
  %vm5133 = vcmp.gt.f32.partialorder %v5069, 0.0
  %vm5134 = vcmp.gt.f32.partialorder %v5070, 0.0
  %vm5135 = vcmp.gt.f32.partialorder %v5071, 0.0
  %vm5136 = vcmp.gt.f32.partialorder %v5072, 0.0
  %vm5137 = vcmp.gt.f32.partialorder %v5073, 0.0
  %vm5138 = vcmp.gt.f32.partialorder %v5074, 0.0
  %vm5139 = vcmp.gt.f32.partialorder %v5075, 0.0
  %vm5140 = vcmp.gt.f32.partialorder %v5076, 0.0
  %vm5141 = vcmp.gt.f32.partialorder %v5077, 0.0
  %vm5142 = vcmp.gt.f32.partialorder %v5078, 0.0
  %vm5143 = vcmp.gt.f32.partialorder %v5079, 0.0
  %vm5144 = vcmp.gt.f32.partialorder %v5080, 0.0
  %vm5145 = vcmp.gt.f32.partialorder %v5081, 0.0
  %vm5146 = vcmp.gt.f32.partialorder %v5082, 0.0
  %vm5147 = vcmp.gt.f32.partialorder %v5083, 0.0
  %vm5148 = vcmp.gt.f32.partialorder %v5084, 0.0
  %vm5149 = vcmp.gt.f32.partialorder %v5085, 0.0
  %vm5150 = vcmp.gt.f32.partialorder %v5086, 0.0
  %vm5151 = vcmp.gt.f32.partialorder %v5087, 0.0
  %vm5152 = vcmp.gt.f32.partialorder %v5088, 0.0
  %vm5153 = vcmp.gt.f32.partialorder %v5089, 0.0
  %vm5154 = vcmp.gt.f32.partialorder %v5090, 0.0
  %vm5155 = vcmp.gt.f32.partialorder %v5091, 0.0
  %vm5156 = vcmp.gt.f32.partialorder %v5092, 0.0
  %vm5157 = vcmp.gt.f32.partialorder %v5093, 0.0
  %vm5158 = vcmp.gt.f32.partialorder %v5094, 0.0
  %vm5159 = vcmp.gt.f32.partialorder %v5095, 0.0
  %vm5160 = vcmp.gt.f32.partialorder %v5096, 0.0
  %vm5161 = vcmp.gt.f32.partialorder %v5097, 0.0
  %vm5162 = vcmp.gt.f32.partialorder %v5098, 0.0
  %vm5163 = vcmp.gt.f32.partialorder %v5099, 0.0
  %vm5164 = vcmp.gt.f32.partialorder %v5100, 0.0
  %vm5165 = vcmp.gt.f32.partialorder %v5101, 0.0
  %vm5166 = vcmp.gt.f32.partialorder %v5102, 0.0
  %vm5167 = vcmp.gt.f32.partialorder %v5103, 0.0
  %vm5168 = vcmp.gt.f32.partialorder %v5104, 0.0
  %vm5169 = vcmp.gt.f32.partialorder %v5105, 0.0
  %vm5170 = vcmp.gt.f32.partialorder %v5106, 0.0
  %vm5171 = vcmp.gt.f32.partialorder %v5107, 0.0
  %vm5172 = vcmp.gt.f32.partialorder %v5108, 0.0
  %vm5173 = vcmp.gt.f32.partialorder %v5109, 0.0
  %vm5174 = vcmp.gt.f32.partialorder %v5110, 0.0
  %vm5175 = vcmp.gt.f32.partialorder %v5111, 0.0
  %vm5176 = vcmp.gt.f32.partialorder %v5112, 0.0
  %vm5177 = vcmp.gt.f32.partialorder %v5113, 0.0
  %vm5178 = vcmp.gt.f32.partialorder %v5114, 0.0
  %vm5179 = vcmp.gt.f32.partialorder %v5115, 0.0
  %vm5180 = vcmp.gt.f32.partialorder %v5116, 0.0
  %vm5181 = vcmp.gt.f32.partialorder %v5117, 0.0
  %vm5182 = vcmp.gt.f32.partialorder %v5118, 0.0
  %vm5183 = vcmp.gt.f32.partialorder %v5119, 0.0
  %vm5184 = vcmp.gt.f32.partialorder %v5120, 0.0
  %vm5185 = vcmp.gt.f32.partialorder %v5121, 0.0
  %vm5186 = vcmp.gt.f32.partialorder %v5122, 0.0
  %vm5187 = vcmp.gt.f32.partialorder %v5123, 0.0
  %vm5188 = vcmp.gt.f32.partialorder %v5124, 0.0
  %vm5189 = vcmp.gt.f32.partialorder %v5125, 0.0
  %vm5190 = vcmp.gt.f32.partialorder %v5126, 0.0
  %vm5191 = vcmp.gt.f32.partialorder %v5127, 0.0
  %v5192 = vmul.f32 %v5064, 0.1
  %v5193 = vmul.f32 %v5065, 0.1
  %v5194 = vmul.f32 %v5066, 0.1
  %v5195 = vmul.f32 %v5067, 0.1
  %v5196 = vmul.f32 %v5068, 0.1
  %v5197 = vmul.f32 %v5069, 0.1
  %v5198 = vmul.f32 %v5070, 0.1
  %v5199 = vmul.f32 %v5071, 0.1
  %v5200 = vmul.f32 %v5072, 0.1
  %v5201 = vmul.f32 %v5073, 0.1
  %v5202 = vmul.f32 %v5074, 0.1
  %v5203 = vmul.f32 %v5075, 0.1
  %v5204 = vmul.f32 %v5076, 0.1
  %v5205 = vmul.f32 %v5077, 0.1
  %v5206 = vmul.f32 %v5078, 0.1
  %v5207 = vmul.f32 %v5079, 0.1
  %v5208 = vmul.f32 %v5080, 0.1
  %v5209 = vmul.f32 %v5081, 0.1
  %v5210 = vmul.f32 %v5082, 0.1
  %v5211 = vmul.f32 %v5083, 0.1
  %v5212 = vmul.f32 %v5084, 0.1
  %v5213 = vmul.f32 %v5085, 0.1
  %v5214 = vmul.f32 %v5086, 0.1
  %v5215 = vmul.f32 %v5087, 0.1
  %v5216 = vmul.f32 %v5088, 0.1
  %v5217 = vmul.f32 %v5089, 0.1
  %v5218 = vmul.f32 %v5090, 0.1
  %v5219 = vmul.f32 %v5091, 0.1
  %v5220 = vmul.f32 %v5092, 0.1
  %v5221 = vmul.f32 %v5093, 0.1
  %v5222 = vmul.f32 %v5094, 0.1
  %v5223 = vmul.f32 %v5095, 0.1
  %v5224 = vmul.f32 %v5096, 0.1
  %v5225 = vmul.f32 %v5097, 0.1
  %v5226 = vmul.f32 %v5098, 0.1
  %v5227 = vmul.f32 %v5099, 0.1
  %v5228 = vmul.f32 %v5100, 0.1
  %v5229 = vmul.f32 %v5101, 0.1
  %v5230 = vmul.f32 %v5102, 0.1
  %v5231 = vmul.f32 %v5103, 0.1
  %v5232 = vmul.f32 %v5104, 0.1
  %v5233 = vmul.f32 %v5105, 0.1
  %v5234 = vmul.f32 %v5106, 0.1
  %v5235 = vmul.f32 %v5107, 0.1
  %v5236 = vmul.f32 %v5108, 0.1
  %v5237 = vmul.f32 %v5109, 0.1
  %v5238 = vmul.f32 %v5110, 0.1
  %v5239 = vmul.f32 %v5111, 0.1
  %v5240 = vmul.f32 %v5112, 0.1
  %v5241 = vmul.f32 %v5113, 0.1
  %v5242 = vmul.f32 %v5114, 0.1
  %v5243 = vmul.f32 %v5115, 0.1
  %v5244 = vmul.f32 %v5116, 0.1
  %v5245 = vmul.f32 %v5117, 0.1
  %v5246 = vmul.f32 %v5118, 0.1
  %v5247 = vmul.f32 %v5119, 0.1
  %v5248 = vmul.f32 %v5120, 0.1
  %v5249 = vmul.f32 %v5121, 0.1
  %v5250 = vmul.f32 %v5122, 0.1
  %v5251 = vmul.f32 %v5123, 0.1
  %v5252 = vmul.f32 %v5124, 0.1
  %v5253 = vmul.f32 %v5125, 0.1
  %v5254 = vmul.f32 %v5126, 0.1
  %v5255 = vmul.f32 %v5127, 0.1
  %v5256 = vsel %vm5128, %v5064, %v5192
  %v5257 = vsel %vm5129, %v5065, %v5193
  %v5258 = vsel %vm5130, %v5066, %v5194
  %v5259 = vsel %vm5131, %v5067, %v5195
  %v5260 = vsel %vm5132, %v5068, %v5196
  %v5261 = vsel %vm5133, %v5069, %v5197
  %v5262 = vsel %vm5134, %v5070, %v5198
  %v5263 = vsel %vm5135, %v5071, %v5199
  %v5264 = vsel %vm5136, %v5072, %v5200
  %v5265 = vsel %vm5137, %v5073, %v5201
  %v5266 = vsel %vm5138, %v5074, %v5202
  %v5267 = vsel %vm5139, %v5075, %v5203
  %v5268 = vsel %vm5140, %v5076, %v5204
  %v5269 = vsel %vm5141, %v5077, %v5205
  %v5270 = vsel %vm5142, %v5078, %v5206
  %v5271 = vsel %vm5143, %v5079, %v5207
  %v5272 = vsel %vm5144, %v5080, %v5208
  %v5273 = vsel %vm5145, %v5081, %v5209
  %v5274 = vsel %vm5146, %v5082, %v5210
  %v5275 = vsel %vm5147, %v5083, %v5211
  %v5276 = vsel %vm5148, %v5084, %v5212
  %v5277 = vsel %vm5149, %v5085, %v5213
  %v5278 = vsel %vm5150, %v5086, %v5214
  %v5279 = vsel %vm5151, %v5087, %v5215
  %v5280 = vsel %vm5152, %v5088, %v5216
  %v5281 = vsel %vm5153, %v5089, %v5217
  %v5282 = vsel %vm5154, %v5090, %v5218
  %v5283 = vsel %vm5155, %v5091, %v5219
  %v5284 = vsel %vm5156, %v5092, %v5220
  %v5285 = vsel %vm5157, %v5093, %v5221
  %v5286 = vsel %vm5158, %v5094, %v5222
  %v5287 = vsel %vm5159, %v5095, %v5223
  %v5288 = vsel %vm5160, %v5096, %v5224
  %v5289 = vsel %vm5161, %v5097, %v5225
  %v5290 = vsel %vm5162, %v5098, %v5226
  %v5291 = vsel %vm5163, %v5099, %v5227
  %v5292 = vsel %vm5164, %v5100, %v5228
  %v5293 = vsel %vm5165, %v5101, %v5229
  %v5294 = vsel %vm5166, %v5102, %v5230
  %v5295 = vsel %vm5167, %v5103, %v5231
  %v5296 = vsel %vm5168, %v5104, %v5232
  %v5297 = vsel %vm5169, %v5105, %v5233
  %v5298 = vsel %vm5170, %v5106, %v5234
  %v5299 = vsel %vm5171, %v5107, %v5235
  %v5300 = vsel %vm5172, %v5108, %v5236
  %v5301 = vsel %vm5173, %v5109, %v5237
  %v5302 = vsel %vm5174, %v5110, %v5238
  %v5303 = vsel %vm5175, %v5111, %v5239
  %v5304 = vsel %vm5176, %v5112, %v5240
  %v5305 = vsel %vm5177, %v5113, %v5241
  %v5306 = vsel %vm5178, %v5114, %v5242
  %v5307 = vsel %vm5179, %v5115, %v5243
  %v5308 = vsel %vm5180, %v5116, %v5244
  %v5309 = vsel %vm5181, %v5117, %v5245
  %v5310 = vsel %vm5182, %v5118, %v5246
  %v5311 = vsel %vm5183, %v5119, %v5247
  %v5312 = vsel %vm5184, %v5120, %v5248
  %v5313 = vsel %vm5185, %v5121, %v5249
  %v5314 = vsel %vm5186, %v5122, %v5250
  %v5315 = vsel %vm5187, %v5123, %v5251
  %v5316 = vsel %vm5188, %v5124, %v5252
  %v5317 = vsel %vm5189, %v5125, %v5253
  %v5318 = vsel %vm5190, %v5126, %v5254
  %v5319 = vsel %vm5191, %v5127, %v5255
  %v5320 = vld [vmem:[%s20] sm:$0xff]
  %v5321 = vld [vmem:[%s20 + $0x8] sm:$0xff]
  %v5322 = vld [vmem:[%s20 + $0x10] sm:$0xff]
  %v5323 = vld [vmem:[%s20 + $0x18] sm:$0xff]
  %v5324 = vld [vmem:[%s20 + $0x20] sm:$0xff]
  %v5325 = vld [vmem:[%s20 + $0x28] sm:$0xff]
  %v5326 = vld [vmem:[%s20 + $0x30] sm:$0xff]
  %v5327 = vld [vmem:[%s20 + $0x38] sm:$0xff]
  %v5328 = vld [vmem:[%s20 + $0x40] sm:$0xff]
  %v5329 = vld [vmem:[%s20 + $0x48] sm:$0xff]
  %v5330 = vld [vmem:[%s20 + $0x50] sm:$0xff]
  %v5331 = vld [vmem:[%s20 + $0x58] sm:$0xff]
  %v5332 = vld [vmem:[%s20 + $0x60] sm:$0xff]
  %v5333 = vld [vmem:[%s20 + $0x68] sm:$0xff]
  %v5334 = vld [vmem:[%s20 + $0x70] sm:$0xff]
  %v5335 = vld [vmem:[%s20 + $0x78] sm:$0xff]
  %v5336 = vld [vmem:[%s20 + $0x80] sm:$0xff]
  %v5337 = vld [vmem:[%s20 + $0x88] sm:$0xff]
  %v5338 = vld [vmem:[%s20 + $0x90] sm:$0xff]
  %v5339 = vld [vmem:[%s20 + $0x98] sm:$0xff]
  %v5340 = vld [vmem:[%s20 + $0xa0] sm:$0xff]
  %v5341 = vld [vmem:[%s20 + $0xa8] sm:$0xff]
  %v5342 = vld [vmem:[%s20 + $0xb0] sm:$0xff]
  %v5343 = vld [vmem:[%s20 + $0xb8] sm:$0xff]
  %v5344 = vld [vmem:[%s20 + $0xc0] sm:$0xff]
  %v5345 = vld [vmem:[%s20 + $0xc8] sm:$0xff]
  %v5346 = vld [vmem:[%s20 + $0xd0] sm:$0xff]
  %v5347 = vld [vmem:[%s20 + $0xd8] sm:$0xff]
  %v5348 = vld [vmem:[%s20 + $0xe0] sm:$0xff]
  %v5349 = vld [vmem:[%s20 + $0xe8] sm:$0xff]
  %v5350 = vld [vmem:[%s20 + $0xf0] sm:$0xff]
  %v5351 = vld [vmem:[%s20 + $0xf8] sm:$0xff]
  %v5352 = vld [vmem:[%s20 + $0x100] sm:$0xff]
  %v5353 = vld [vmem:[%s20 + $0x108] sm:$0xff]
  %v5354 = vld [vmem:[%s20 + $0x110] sm:$0xff]
  %v5355 = vld [vmem:[%s20 + $0x118] sm:$0xff]
  %v5356 = vld [vmem:[%s20 + $0x120] sm:$0xff]
  %v5357 = vld [vmem:[%s20 + $0x128] sm:$0xff]
  %v5358 = vld [vmem:[%s20 + $0x130] sm:$0xff]
  %v5359 = vld [vmem:[%s20 + $0x138] sm:$0xff]
  %v5360 = vld [vmem:[%s20 + $0x140] sm:$0xff]
  %v5361 = vld [vmem:[%s20 + $0x148] sm:$0xff]
  %v5362 = vld [vmem:[%s20 + $0x150] sm:$0xff]
  %v5363 = vld [vmem:[%s20 + $0x158] sm:$0xff]
  %v5364 = vld [vmem:[%s20 + $0x160] sm:$0xff]
  %v5365 = vld [vmem:[%s20 + $0x168] sm:$0xff]
  %v5366 = vld [vmem:[%s20 + $0x170] sm:$0xff]
  %v5367 = vld [vmem:[%s20 + $0x178] sm:$0xff]
  %v5368 = vld [vmem:[%s20 + $0x180] sm:$0xff]
  %v5369 = vld [vmem:[%s20 + $0x188] sm:$0xff]
  %v5370 = vld [vmem:[%s20 + $0x190] sm:$0xff]
  %v5371 = vld [vmem:[%s20 + $0x198] sm:$0xff]
  %v5372 = vld [vmem:[%s20 + $0x1a0] sm:$0xff]
  %v5373 = vld [vmem:[%s20 + $0x1a8] sm:$0xff]
  %v5374 = vld [vmem:[%s20 + $0x1b0] sm:$0xff]
  %v5375 = vld [vmem:[%s20 + $0x1b8] sm:$0xff]
  %v5376 = vld [vmem:[%s20 + $0x1c0] sm:$0xff]
  %v5377 = vld [vmem:[%s20 + $0x1c8] sm:$0xff]
  %v5378 = vld [vmem:[%s20 + $0x1d0] sm:$0xff]
  %v5379 = vld [vmem:[%s20 + $0x1d8] sm:$0xff]
  %v5380 = vld [vmem:[%s20 + $0x1e0] sm:$0xff]
  %v5381 = vld [vmem:[%s20 + $0x1e8] sm:$0xff]
  %v5382 = vld [vmem:[%s20 + $0x1f0] sm:$0xff]
  %v5383 = vld [vmem:[%s20 + $0x1f8] sm:$0xff]
  %v5384 = vld [vmem:[%s21] sm:$0x1]
  %v5386 = vperm.slane %v5384, 0
  %5388 = vmatpush.msra.mxu0 %v5335
  %5389 = vmatpush.msra.mxu0 %v5334
  %5390 = vmatpush.msra.mxu0 %v5333
  %5391 = vmatpush.msra.mxu0 %v5332
  %5392 = vmatpush.msra.mxu0 %v5331
  %5393 = vmatpush.msra.mxu0 %v5330
  %5394 = vmatpush.msra.mxu0 %v5329
  %5395 = vmatpush.msra.mxu0 %v5328
  %5396 = vmatpush.msra.mxu0 %v5327
  %5397 = vmatpush.msra.mxu0 %v5326
  %5398 = vmatpush.msra.mxu0 %v5325
  %5399 = vmatpush.msra.mxu0 %v5324
  %5400 = vmatpush.msra.mxu0 %v5323
  %5401 = vmatpush.msra.mxu0 %v5322
  %5402 = vmatpush.msra.mxu0 %v5321
  %5403 = vmatpush.msra.mxu0 %v5320
  %5404 = vmatmul.f32.gmra.mxu0 %v5256
  %v5405 = vpop.f32.mrf.mxu0
  %v5406 = vadd.f32 %v5386, %v5405
  %5407 = vmatmul.f32.gmra.mxu0 %v5260
  %v5408 = vpop.f32.mrf.mxu0
  %v5409 = vadd.f32 %v5386, %v5408
  %5410 = vmatmul.f32.gmra.mxu0 %v5264
  %v5411 = vpop.f32.mrf.mxu0
  %v5412 = vadd.f32 %v5386, %v5411
  %5413 = vmatmul.f32.gmra.mxu0 %v5268
  %v5414 = vpop.f32.mrf.mxu0
  %v5415 = vadd.f32 %v5386, %v5414
  %5416 = vmatmul.f32.gmra.mxu0 %v5272
  %v5417 = vpop.f32.mrf.mxu0
  %v5418 = vadd.f32 %v5386, %v5417
  %5419 = vmatmul.f32.gmra.mxu0 %v5276
  %v5420 = vpop.f32.mrf.mxu0
  %v5421 = vadd.f32 %v5386, %v5420
  %5422 = vmatmul.f32.gmra.mxu0 %v5280
  %v5423 = vpop.f32.mrf.mxu0
  %v5424 = vadd.f32 %v5386, %v5423
  %5425 = vmatmul.f32.gmra.mxu0 %v5284
  %v5426 = vpop.f32.mrf.mxu0
  %v5427 = vadd.f32 %v5386, %v5426
  %5428 = vmatmul.f32.gmra.mxu0 %v5288
  %v5429 = vpop.f32.mrf.mxu0
  %v5430 = vadd.f32 %v5386, %v5429
  %5431 = vmatmul.f32.gmra.mxu0 %v5292
  %v5432 = vpop.f32.mrf.mxu0
  %v5433 = vadd.f32 %v5386, %v5432
  %5434 = vmatmul.f32.gmra.mxu0 %v5296
  %v5435 = vpop.f32.mrf.mxu0
  %v5436 = vadd.f32 %v5386, %v5435
  %5437 = vmatmul.f32.gmra.mxu0 %v5300
  %v5438 = vpop.f32.mrf.mxu0
  %v5439 = vadd.f32 %v5386, %v5438
  %5440 = vmatmul.f32.gmra.mxu0 %v5304
  %v5441 = vpop.f32.mrf.mxu0
  %v5442 = vadd.f32 %v5386, %v5441
  %5443 = vmatmul.f32.gmra.mxu0 %v5308
  %v5444 = vpop.f32.mrf.mxu0
  %v5445 = vadd.f32 %v5386, %v5444
  %5446 = vmatmul.f32.gmra.mxu0 %v5312
  %v5447 = vpop.f32.mrf.mxu0
  %v5448 = vadd.f32 %v5386, %v5447
  %5449 = vmatmul.f32.gmra.mxu0 %v5316
  %v5450 = vpop.f32.mrf.mxu0
  %v5451 = vadd.f32 %v5386, %v5450
  %5452 = vdwg.mxu0
  %5453 = vmatpush.msra.mxu0 %v5351
  %5454 = vmatpush.msra.mxu0 %v5350
  %5455 = vmatpush.msra.mxu0 %v5349
  %5456 = vmatpush.msra.mxu0 %v5348
  %5457 = vmatpush.msra.mxu0 %v5347
  %5458 = vmatpush.msra.mxu0 %v5346
  %5459 = vmatpush.msra.mxu0 %v5345
  %5460 = vmatpush.msra.mxu0 %v5344
  %5461 = vmatpush.msra.mxu0 %v5343
  %5462 = vmatpush.msra.mxu0 %v5342
  %5463 = vmatpush.msra.mxu0 %v5341
  %5464 = vmatpush.msra.mxu0 %v5340
  %5465 = vmatpush.msra.mxu0 %v5339
  %5466 = vmatpush.msra.mxu0 %v5338
  %5467 = vmatpush.msra.mxu0 %v5337
  %5468 = vmatpush.msra.mxu0 %v5336
  %5469 = vmatmul.f32.gmra.mxu0 %v5257
  %v5470 = vpop.f32.mrf.mxu0
  %v5471 = vadd.f32 %v5406, %v5470
  %5472 = vmatmul.f32.gmra.mxu0 %v5261
  %v5473 = vpop.f32.mrf.mxu0
  %v5474 = vadd.f32 %v5409, %v5473
  %5475 = vmatmul.f32.gmra.mxu0 %v5265
  %v5476 = vpop.f32.mrf.mxu0
  %v5477 = vadd.f32 %v5412, %v5476
  %5478 = vmatmul.f32.gmra.mxu0 %v5269
  %v5479 = vpop.f32.mrf.mxu0
  %v5480 = vadd.f32 %v5415, %v5479
  %5481 = vmatmul.f32.gmra.mxu0 %v5273
  %v5482 = vpop.f32.mrf.mxu0
  %v5483 = vadd.f32 %v5418, %v5482
  %5484 = vmatmul.f32.gmra.mxu0 %v5277
  %v5485 = vpop.f32.mrf.mxu0
  %v5486 = vadd.f32 %v5421, %v5485
  %5487 = vmatmul.f32.gmra.mxu0 %v5281
  %v5488 = vpop.f32.mrf.mxu0
  %v5489 = vadd.f32 %v5424, %v5488
  %5490 = vmatmul.f32.gmra.mxu0 %v5285
  %v5491 = vpop.f32.mrf.mxu0
  %v5492 = vadd.f32 %v5427, %v5491
  %5493 = vmatmul.f32.gmra.mxu0 %v5289
  %v5494 = vpop.f32.mrf.mxu0
  %v5495 = vadd.f32 %v5430, %v5494
  %5496 = vmatmul.f32.gmra.mxu0 %v5293
  %v5497 = vpop.f32.mrf.mxu0
  %v5498 = vadd.f32 %v5433, %v5497
  %5499 = vmatmul.f32.gmra.mxu0 %v5297
  %v5500 = vpop.f32.mrf.mxu0
  %v5501 = vadd.f32 %v5436, %v5500
  %5502 = vmatmul.f32.gmra.mxu0 %v5301
  %v5503 = vpop.f32.mrf.mxu0
  %v5504 = vadd.f32 %v5439, %v5503
  %5505 = vmatmul.f32.gmra.mxu0 %v5305
  %v5506 = vpop.f32.mrf.mxu0
  %v5507 = vadd.f32 %v5442, %v5506
  %5508 = vmatmul.f32.gmra.mxu0 %v5309
  %v5509 = vpop.f32.mrf.mxu0
  %v5510 = vadd.f32 %v5445, %v5509
  %5511 = vmatmul.f32.gmra.mxu0 %v5313
  %v5512 = vpop.f32.mrf.mxu0
  %v5513 = vadd.f32 %v5448, %v5512
  %5514 = vmatmul.f32.gmra.mxu0 %v5317
  %v5515 = vpop.f32.mrf.mxu0
  %v5516 = vadd.f32 %v5451, %v5515
  %5517 = vdwg.mxu0
  %5518 = vmatpush.msra.mxu0 %v5367
  %5519 = vmatpush.msra.mxu0 %v5366
  %5520 = vmatpush.msra.mxu0 %v5365
  %5521 = vmatpush.msra.mxu0 %v5364
  %5522 = vmatpush.msra.mxu0 %v5363
  %5523 = vmatpush.msra.mxu0 %v5362
  %5524 = vmatpush.msra.mxu0 %v5361
  %5525 = vmatpush.msra.mxu0 %v5360
  %5526 = vmatpush.msra.mxu0 %v5359
  %5527 = vmatpush.msra.mxu0 %v5358
  %5528 = vmatpush.msra.mxu0 %v5357
  %5529 = vmatpush.msra.mxu0 %v5356
  %5530 = vmatpush.msra.mxu0 %v5355
  %5531 = vmatpush.msra.mxu0 %v5354
  %5532 = vmatpush.msra.mxu0 %v5353
  %5533 = vmatpush.msra.mxu0 %v5352
  %5534 = vmatmul.f32.gmra.mxu0 %v5258
  %v5535 = vpop.f32.mrf.mxu0
  %v5536 = vadd.f32 %v5471, %v5535
  %5537 = vmatmul.f32.gmra.mxu0 %v5262
  %v5538 = vpop.f32.mrf.mxu0
  %v5539 = vadd.f32 %v5474, %v5538
  %5540 = vmatmul.f32.gmra.mxu0 %v5266
  %v5541 = vpop.f32.mrf.mxu0
  %v5542 = vadd.f32 %v5477, %v5541
  %5543 = vmatmul.f32.gmra.mxu0 %v5270
  %v5544 = vpop.f32.mrf.mxu0
  %v5545 = vadd.f32 %v5480, %v5544
  %5546 = vmatmul.f32.gmra.mxu0 %v5274
  %v5547 = vpop.f32.mrf.mxu0
  %v5548 = vadd.f32 %v5483, %v5547
  %5549 = vmatmul.f32.gmra.mxu0 %v5278
  %v5550 = vpop.f32.mrf.mxu0
  %v5551 = vadd.f32 %v5486, %v5550
  %5552 = vmatmul.f32.gmra.mxu0 %v5282
  %v5553 = vpop.f32.mrf.mxu0
  %v5554 = vadd.f32 %v5489, %v5553
  %5555 = vmatmul.f32.gmra.mxu0 %v5286
  %v5556 = vpop.f32.mrf.mxu0
  %v5557 = vadd.f32 %v5492, %v5556
  %5558 = vmatmul.f32.gmra.mxu0 %v5290
  %v5559 = vpop.f32.mrf.mxu0
  %v5560 = vadd.f32 %v5495, %v5559
  %5561 = vmatmul.f32.gmra.mxu0 %v5294
  %v5562 = vpop.f32.mrf.mxu0
  %v5563 = vadd.f32 %v5498, %v5562
  %5564 = vmatmul.f32.gmra.mxu0 %v5298
  %v5565 = vpop.f32.mrf.mxu0
  %v5566 = vadd.f32 %v5501, %v5565
  %5567 = vmatmul.f32.gmra.mxu0 %v5302
  %v5568 = vpop.f32.mrf.mxu0
  %v5569 = vadd.f32 %v5504, %v5568
  %5570 = vmatmul.f32.gmra.mxu0 %v5306
  %v5571 = vpop.f32.mrf.mxu0
  %v5572 = vadd.f32 %v5507, %v5571
  %5573 = vmatmul.f32.gmra.mxu0 %v5310
  %v5574 = vpop.f32.mrf.mxu0
  %v5575 = vadd.f32 %v5510, %v5574
  %5576 = vmatmul.f32.gmra.mxu0 %v5314
  %v5577 = vpop.f32.mrf.mxu0
  %v5578 = vadd.f32 %v5513, %v5577
  %5579 = vmatmul.f32.gmra.mxu0 %v5318
  %v5580 = vpop.f32.mrf.mxu0
  %v5581 = vadd.f32 %v5516, %v5580
  %5582 = vdwg.mxu0
  %5583 = vmatpush.msra.mxu0 %v5383
  %5584 = vmatpush.msra.mxu0 %v5382
  %5585 = vmatpush.msra.mxu0 %v5381
  %5586 = vmatpush.msra.mxu0 %v5380
  %5587 = vmatpush.msra.mxu0 %v5379
  %5588 = vmatpush.msra.mxu0 %v5378
  %5589 = vmatpush.msra.mxu0 %v5377
  %5590 = vmatpush.msra.mxu0 %v5376
  %5591 = vmatpush.msra.mxu0 %v5375
  %5592 = vmatpush.msra.mxu0 %v5374
  %5593 = vmatpush.msra.mxu0 %v5373
  %5594 = vmatpush.msra.mxu0 %v5372
  %5595 = vmatpush.msra.mxu0 %v5371
  %5596 = vmatpush.msra.mxu0 %v5370
  %5597 = vmatpush.msra.mxu0 %v5369
  %5598 = vmatpush.msra.mxu0 %v5368
  %5599 = vmatmul.f32.gmra.mxu0 %v5259
  %v5600 = vpop.f32.mrf.mxu0
  %v5601 = vadd.f32 %v5536, %v5600
  %5602 = vmatmul.f32.gmra.mxu0 %v5263
  %v5603 = vpop.f32.mrf.mxu0
  %v5604 = vadd.f32 %v5539, %v5603
  %5605 = vmatmul.f32.gmra.mxu0 %v5267
  %v5606 = vpop.f32.mrf.mxu0
  %v5607 = vadd.f32 %v5542, %v5606
  %5608 = vmatmul.f32.gmra.mxu0 %v5271
  %v5609 = vpop.f32.mrf.mxu0
  %v5610 = vadd.f32 %v5545, %v5609
  %5611 = vmatmul.f32.gmra.mxu0 %v5275
  %v5612 = vpop.f32.mrf.mxu0
  %v5613 = vadd.f32 %v5548, %v5612
  %5614 = vmatmul.f32.gmra.mxu0 %v5279
  %v5615 = vpop.f32.mrf.mxu0
  %v5616 = vadd.f32 %v5551, %v5615
  %5617 = vmatmul.f32.gmra.mxu0 %v5283
  %v5618 = vpop.f32.mrf.mxu0
  %v5619 = vadd.f32 %v5554, %v5618
  %5620 = vmatmul.f32.gmra.mxu0 %v5287
  %v5621 = vpop.f32.mrf.mxu0
  %v5622 = vadd.f32 %v5557, %v5621
  %5623 = vmatmul.f32.gmra.mxu0 %v5291
  %v5624 = vpop.f32.mrf.mxu0
  %v5625 = vadd.f32 %v5560, %v5624
  %5626 = vmatmul.f32.gmra.mxu0 %v5295
  %v5627 = vpop.f32.mrf.mxu0
  %v5628 = vadd.f32 %v5563, %v5627
  %5629 = vmatmul.f32.gmra.mxu0 %v5299
  %v5630 = vpop.f32.mrf.mxu0
  %v5631 = vadd.f32 %v5566, %v5630
  %5632 = vmatmul.f32.gmra.mxu0 %v5303
  %v5633 = vpop.f32.mrf.mxu0
  %v5634 = vadd.f32 %v5569, %v5633
  %5635 = vmatmul.f32.gmra.mxu0 %v5307
  %v5636 = vpop.f32.mrf.mxu0
  %v5637 = vadd.f32 %v5572, %v5636
  %5638 = vmatmul.f32.gmra.mxu0 %v5311
  %v5639 = vpop.f32.mrf.mxu0
  %v5640 = vadd.f32 %v5575, %v5639
  %5641 = vmatmul.f32.gmra.mxu0 %v5315
  %v5642 = vpop.f32.mrf.mxu0
  %v5643 = vadd.f32 %v5578, %v5642
  %5644 = vmatmul.f32.gmra.mxu0 %v5319
  %v5645 = vpop.f32.mrf.mxu0
  %v5646 = vadd.f32 %v5581, %v5645
  %5647 = vdwg.mxu0
  %5648 = vst [vmem:[%s22] sm:$0xff] %v5601
  %5649 = vst [vmem:[%s22 + $0x8] sm:$0xff] %v5604
  %5650 = vst [vmem:[%s22 + $0x10] sm:$0xff] %v5607
  %5651 = vst [vmem:[%s22 + $0x18] sm:$0xff] %v5610
  %5652 = vst [vmem:[%s22 + $0x20] sm:$0xff] %v5613
  %5653 = vst [vmem:[%s22 + $0x28] sm:$0xff] %v5616
  %5654 = vst [vmem:[%s22 + $0x30] sm:$0xff] %v5619
  %5655 = vst [vmem:[%s22 + $0x38] sm:$0xff] %v5622
  %5656 = vst [vmem:[%s22 + $0x40] sm:$0xff] %v5625
  %5657 = vst [vmem:[%s22 + $0x48] sm:$0xff] %v5628
  %5658 = vst [vmem:[%s22 + $0x50] sm:$0xff] %v5631
  %5659 = vst [vmem:[%s22 + $0x58] sm:$0xff] %v5634
  %5660 = vst [vmem:[%s22 + $0x60] sm:$0xff] %v5637
  %5661 = vst [vmem:[%s22 + $0x68] sm:$0xff] %v5640
  %5662 = vst [vmem:[%s22 + $0x70] sm:$0xff] %v5643
  %5663 = vst [vmem:[%s22 + $0x78] sm:$0xff] %v5646
  %5664 = vst [vmem:[%s23] sm:$0xff] %v2717
  %5665 = vst [vmem:[%s23 + $0x8] sm:$0xff] %v2720
  %5666 = vst [vmem:[%s23 + $0x10] sm:$0xff] %v2723
  %5667 = vst [vmem:[%s23 + $0x18] sm:$0xff] %v2726
  %5668 = vst [vmem:[%s23 + $0x20] sm:$0xff] %v2729
  %5669 = vst [vmem:[%s23 + $0x28] sm:$0xff] %v2732
  %5670 = vst [vmem:[%s23 + $0x30] sm:$0xff] %v2735
  %5671 = vst [vmem:[%s23 + $0x38] sm:$0xff] %v2738
  %5672 = vst [vmem:[%s23 + $0x40] sm:$0xff] %v2741
  %5673 = vst [vmem:[%s23 + $0x48] sm:$0xff] %v2744
  %5674 = vst [vmem:[%s23 + $0x50] sm:$0xff] %v2747
  %5675 = vst [vmem:[%s23 + $0x58] sm:$0xff] %v2750
  %5676 = vst [vmem:[%s23 + $0x60] sm:$0xff] %v2753
  %5677 = vst [vmem:[%s23 + $0x68] sm:$0xff] %v2756
  %5678 = vst [vmem:[%s23 + $0x70] sm:$0xff] %v2759
  %5679 = vst [vmem:[%s23 + $0x78] sm:$0xff] %v2762
  %5680 = vst [vmem:[%s24] sm:$0xff] %v2910
  %5681 = vst [vmem:[%s24 + $0x8] sm:$0xff] %v2911
  %5682 = vst [vmem:[%s24 + $0x10] sm:$0xff] %v2912
  %5683 = vst [vmem:[%s24 + $0x18] sm:$0xff] %v2913
  %5684 = vst [vmem:[%s24 + $0x20] sm:$0xff] %v2914
  %5685 = vst [vmem:[%s24 + $0x28] sm:$0xff] %v2915
  %5686 = vst [vmem:[%s24 + $0x30] sm:$0xff] %v2916
  %5687 = vst [vmem:[%s24 + $0x38] sm:$0xff] %v2917
  %5688 = vst [vmem:[%s24 + $0x40] sm:$0xff] %v2918
  %5689 = vst [vmem:[%s24 + $0x48] sm:$0xff] %v2919
  %5690 = vst [vmem:[%s24 + $0x50] sm:$0xff] %v2920
  %5691 = vst [vmem:[%s24 + $0x58] sm:$0xff] %v2921
  %5692 = vst [vmem:[%s24 + $0x60] sm:$0xff] %v2922
  %5693 = vst [vmem:[%s24 + $0x68] sm:$0xff] %v2923
  %5694 = vst [vmem:[%s24 + $0x70] sm:$0xff] %v2924
  %5695 = vst [vmem:[%s24 + $0x78] sm:$0xff] %v2925
  // Predicated region
  $region90: #{walking_vae_forward.1} parent=0 // pred_check
    _
  $region91: #{walking_vae_forward.1} parent=0 // pred_check_branch
    %5697 = sbr.rel (0) target = $region93
  $region92: #{walking_vae_forward.1} parent=0 // pred_region
    _
  $region93: #{walking_vae_forward.1} parent=0 // pred_fallthru
    _
  // Predicated region
  $region94: #{walking_vae_forward.1} parent=0 // pred_check
    _
  $region95: #{walking_vae_forward.1} parent=0 // pred_check_branch
    %5699 = sbr.rel (0) target = $region97
  $region96: #{walking_vae_forward.1} parent=0 // pred_region
    _
  $region97: #{walking_vae_forward.1} parent=0 // pred_fallthru
    _
  // Predicated region
  $region98: #{walking_vae_forward.1} parent=0 // pred_check
    _
  $region99: #{walking_vae_forward.1} parent=0 // pred_check_branch
    %5701 = sbr.rel (0) target = $region101
  $region100: #{walking_vae_forward.1} parent=0 // pred_region
    _
  $region101: #{walking_vae_forward.1} parent=0 // pred_fallthru
    _
  // Predicated region
  $region102: #{walking_vae_forward.1} parent=0 // pred_check
    _
  $region103: #{walking_vae_forward.1} parent=0 // pred_check_branch
    %5703 = sbr.rel (0) target = $region105
  $region104: #{walking_vae_forward.1} parent=0 // pred_region
    _
  $region105: #{walking_vae_forward.1} parent=0 // pred_fallthru
    _
  // Predicated region
  $region106: #{walking_vae_forward.1} parent=0 // pred_check
    _
  $region107: #{walking_vae_forward.1} parent=0 // pred_check_branch
    %5705 = sbr.rel (0) target = $region109
  $region108: #{walking_vae_forward.1} parent=0 // pred_region
    _
  $region109: #{walking_vae_forward.1} parent=0 // pred_fallthru
    _
  // Predicated region
  $region110: #{walking_vae_forward.1} parent=0 // pred_check
    _
  $region111: #{walking_vae_forward.1} parent=0 // pred_check_branch
    %5707 = sbr.rel (0) target = $region113
  $region112: #{walking_vae_forward.1} parent=0 // pred_region
    _
  $region113: #{walking_vae_forward.1} parent=0 // pred_fallthru
    _

</llo_original>
